<compile_context>
chip_gen: v7x
topology: tpu7x:2x2x1
jax: 0.10.0
libtpu: 0.0.40
codegen_flags: <defaults>
</compile_context>

<pallas_src>
import jax
import jax.numpy as jnp
from jax.experimental import pallas as pl
from jax.experimental.pallas import tpu as pltpu


def _make_fused_kernel(num_layers: int):
    """Build the fused GlobalRNN kernel for a static number of LSTM layers."""

    def kernel(*refs):
        n_lstm = 3 * num_layers
        x_ref, h0_ref, c0_ref = refs[0:3]
        lstm_refs = refs[3:3 + n_lstm]
        w1_ref, b1_ref, w2_ref, b2_ref = refs[3 + n_lstm:7 + n_lstm]
        gvec_ref, gloc_ref, hn_ref, cn_ref = refs[7 + n_lstm:]

        B, T, _ = x_ref.shape
        H = h0_ref.shape[-1]

        # Hoisted once: lane-iota select mask for the [g|o] gate half
        # (tanh on the low H lanes, sigmoid on the high H lanes).
        go_tanh_mask = jax.lax.broadcasted_iota(jnp.int32, (B, 2 * H), 1) < H

        layer_in = x_ref[...]                                # (B, T, in_0)
        for layer in range(num_layers):
            w_ih_ref = lstm_refs[3 * layer]                  # (in_l, 4H)  W_ih^T
            w_hh_ref = lstm_refs[3 * layer + 1]              # (H,   4H)  W_hh^T
            b_ref = lstm_refs[3 * layer + 2]                 # (1,   4H)  b_ih+b_hh
            in_l = layer_in.shape[-1]

            # (1) Bulk input projection: one fat matmul + one bias add, hoisted
            #     out of the recurrence (off the serial critical path).
            gx = jnp.dot(layer_in.reshape(B * T, in_l), w_ih_ref[...],
                         preferred_element_type=jnp.float32) + b_ref[...]
            gx = gx.reshape(B, T, 4 * H)

            h = h0_ref[layer]                                # (B, H)
            c = c0_ref[layer]                                # (B, H)
            hs = []
            # T is small & static -> fully unrolled loop (one basic block);
            # per step only ONE depth-H MXU matmul sits on the critical path.
            for t in range(T):
                gates = gx[:, t, :] + jnp.dot(
                    h, w_hh_ref[...], preferred_element_type=jnp.float32)
                # PyTorch gate order i, f, g, o.  Aligned 128-lane halves:
                #   [:, :2H] = [i | f] -> sigmoid (single full-vreg EUP pass)
                #   [:, 2H:] = [g | o] -> tanh / sigmoid via hoisted lane mask
                act_if = jax.nn.sigmoid(gates[:, :2 * H])
                go = gates[:, 2 * H:]
                act_go = jnp.where(go_tanh_mask, jnp.tanh(go),
                                   jax.nn.sigmoid(go))
                i_g = act_if[:, :H]
                f_g = act_if[:, H:]
                g_g = act_go[:, :H]
                o_g = act_go[:, H:]
                c = f_g * c + i_g * g_g
                h = o_g * jnp.tanh(c)
                hs.append(h)

            hn_ref[layer] = h
            cn_ref[layer] = c
            # (5) Next layer's input stays in vregs; g_vec is written once.
            layer_in = jnp.stack(hs, axis=1)                 # (B, T, H)

        gvec_ref[...] = layer_in                             # single bulk store

        # (2) Deferred MLP head on all B*T rows at once (head weights loaded
        #     here, at point of use, to keep live ranges short).
        flat = layer_in.reshape(B * T, H)
        hid = jnp.maximum(
            jnp.dot(flat, w1_ref[...], preferred_element_type=jnp.float32)
            + b1_ref[...], 0.0)
        loc = jnp.dot(hid, w2_ref[...],
                      preferred_element_type=jnp.float32) + b2_ref[...]
        gloc_ref[...] = loc.reshape(B, T, loc.shape[-1])

    return kernel


def prepare_global_rnn_params(params):
    """One-time weight preprocessing (transposes + bias fusion).

    Call once at parameter-load time, NOT per forward call, so the jitted
    forward dispatches exactly one op (the pallas_call).
    """
    lstm_flat = []
    for (w_ih, w_hh, b_ih, b_hh) in params["lstm"]:
        four_h = w_ih.shape[0]
        lstm_flat.append(jnp.asarray(w_ih.T, jnp.float32))          # (in_l, 4H)
        lstm_flat.append(jnp.asarray(w_hh.T, jnp.float32))          # (H, 4H)
        lstm_flat.append(jnp.asarray((b_ih + b_hh).reshape(1, four_h),
                                     jnp.float32))                  # (1, 4H)
    w1, b1, w2, b2 = params["head"]
    head_flat = (jnp.asarray(w1.T, jnp.float32),
                 jnp.asarray(b1.reshape(1, -1), jnp.float32),
                 jnp.asarray(w2.T, jnp.float32),
                 jnp.asarray(b2.reshape(1, -1), jnp.float32))
    return tuple(lstm_flat), head_flat


@jax.jit
def global_rnn_forward(x, h0, c0, lstm_flat, head_flat):
    """x: (B, T, I) batch-first; h0/c0: (L, B, 64). Mirrors GlobalRNN.forward."""
    B, T, I = x.shape
    L, _, H = h0.shape
    O = head_flat[2].shape[-1]

    # Advisory cost estimate for XLA's scheduler around this tiny custom call.
    flops = 0
    in_l = I
    for _ in range(L):
        flops += 2 * (B * T) * in_l * 4 * H      # bulk input projections
        flops += 2 * T * B * H * 4 * H           # recurrent matmuls
        in_l = H
    flops += 2 * (B * T) * H * 16 + 2 * (B * T) * 16 * O
    transcendentals = L * T * B * 5 * H
    bytes_accessed = 4 * (x.size + h0.size + c0.size
                          + sum(a.size for a in lstm_flat)
                          + sum(a.size for a in head_flat)
                          + B * T * H + B * T * O + 2 * L * B * H)

    num_inputs = 3 + len(lstm_flat) + len(head_flat)
    vmem = pltpu.MemorySpace.VMEM
    in_specs = [pl.BlockSpec(memory_space=vmem) for _ in range(num_inputs)]
    out_specs = tuple(pl.BlockSpec(memory_space=vmem) for _ in range(4))

    return pl.pallas_call(
        _make_fused_kernel(L),
        out_shape=(
            jax.ShapeDtypeStruct((B, T, H), jnp.float32),    # g_vec
            jax.ShapeDtypeStruct((B, T, O), jnp.float32),    # g_loc
            jax.ShapeDtypeStruct((L, B, H), jnp.float32),    # hn
            jax.ShapeDtypeStruct((L, B, H), jnp.float32),    # cn
        ),
        in_specs=in_specs,
        out_specs=out_specs,
        cost_estimate=pl.CostEstimate(flops=flops,
                                      transcendentals=transcendentals,
                                      bytes_accessed=bytes_accessed),
    )(x, h0, c0, *lstm_flat, *head_flat)


# ------------------------------- Param setup ---------------------------------


def init_params(key, input_size, hidden, num_layers):
    bound = 1.0 / jnp.sqrt(float(hidden))

    def uni(k, shape, bnd):
        return jax.random.uniform(k, shape, jnp.float32, -bnd, bnd)

    lstm = []
    for layer in range(num_layers):
        isz = input_size if layer == 0 else hidden
        key, k1, k2, k3, k4 = jax.random.split(key, 5)
        lstm.append((uni(k1, (4 * hidden, isz), bound),      # W_ih
                     uni(k2, (4 * hidden, hidden), bound),   # W_hh
                     uni(k3, (4 * hidden,), bound),          # b_ih
                     uni(k4, (4 * hidden,), bound)))         # b_hh

    key, k1, k2, k3, k4 = jax.random.split(key, 5)
    b1 = 1.0 / jnp.sqrt(64.0)
    b2 = 1.0 / jnp.sqrt(16.0)
    head = (uni(k1, (16, 64), b1),    # fc1.weight
            uni(k2, (16,), b1),       # fc1.bias
            uni(k3, (2, 16), b2),     # fc2.weight
            uni(k4, (2,), b2))        # fc2.bias
    return {"lstm": lstm, "head": head}


def reference_forward(x, h0, c0, params):
    """Pure-JAX reference (highest-precision matmuls) for correctness checks."""
    hp = jax.lax.Precision.HIGHEST
    B, T, _ = x.shape
    layer_in = x
    hn, cn = [], []
    for l, (w_ih, w_hh, b_ih, b_hh) in enumerate(params["lstm"]):
        H = w_hh.shape[1]
        h, c = h0[l], c0[l]
        outs = []
        for t in range(T):
            gates = (jnp.dot(layer_in[:, t, :], w_ih.T, precision=hp)
                     + jnp.dot(h, w_hh.T, precision=hp) + b_ih + b_hh)
            i_g, f_g, g_g, o_g = jnp.split(gates, 4, axis=-1)
            c = jax.nn.sigmoid(f_g) * c + jax.nn.sigmoid(i_g) * jnp.tanh(g_g)
            h = jax.nn.sigmoid(o_g) * jnp.tanh(c)
            outs.append(h)
        layer_in = jnp.stack(outs, axis=1)
        hn.append(h)
        cn.append(c)
    w1, b1, w2, b2 = params["head"]
    g_vec = layer_in
    hid = jnp.maximum(jnp.dot(g_vec, w1.T, precision=hp) + b1, 0.0)
    g_loc = jnp.dot(hid, w2.T, precision=hp) + b2
    return g_vec, g_loc, jnp.stack(hn), jnp.stack(cn)


if __name__ == "__main__":
    B, T = 2, 8
    INPUT_SIZE = 32          # cfg.out_feature_GlobalModule
    HIDDEN = 64
    NUM_LAYERS = 2           # cfg.numlayers_RNN

    key = jax.random.PRNGKey(0)
    key, kx, kh, kc, kp = jax.random.split(key, 5)
    x = jax.random.normal(kx, (B, T, INPUT_SIZE), jnp.float32)
    h0 = jax.random.normal(kh, (NUM_LAYERS, B, HIDDEN), jnp.float32)
    c0 = jax.random.normal(kc, (NUM_LAYERS, B, HIDDEN), jnp.float32)

    params = init_params(kp, INPUT_SIZE, HIDDEN, NUM_LAYERS)
    # One-time weight preprocessing (outside the jitted per-call path).
    lstm_flat, head_flat = prepare_global_rnn_params(params)

    g_vec, g_loc, hn, cn = global_rnn_forward(x, h0, c0, lstm_flat, head_flat)
    jax.block_until_ready((g_vec, g_loc, hn, cn))

    assert g_vec.shape == (B, T, HIDDEN)
    assert g_loc.shape == (B, T, 2)
    assert hn.shape == (NUM_LAYERS, B, HIDDEN)
    assert cn.shape == (NUM_LAYERS, B, HIDDEN)
    assert bool(jnp.isfinite(g_vec).all()) and bool(jnp.isfinite(g_loc).all())
    assert bool(jnp.isfinite(hn).all()) and bool(jnp.isfinite(cn).all())

    # Numerical check vs. pure-JAX reference (loose tol: MXU f32 multi-pass).
    r_vec, r_loc, r_hn, r_cn = reference_forward(x, h0, c0, params)
    for got, ref, name in ((g_vec, r_vec, "g_vec"), (g_loc, r_loc, "g_loc"),
                           (hn, r_hn, "hn"), (cn, r_cn, "cn")):
        err = float(jnp.max(jnp.abs(got - ref)))
        assert err < 2e-2, f"{name} max abs err {err}"

    print("KERNEL_OK")
</pallas_src>

<mosaic_0001>
module attributes {stable_mosaic.version = 11 : i64} {
  func.func @kernel(%arg0: memref<2x8x32xf32, #tpu.memory_space<vmem>>, %arg1: memref<2x2x64xf32, #tpu.memory_space<vmem>>, %arg2: memref<2x2x64xf32, #tpu.memory_space<vmem>>, %arg3: memref<32x256xf32, #tpu.memory_space<vmem>>, %arg4: memref<64x256xf32, #tpu.memory_space<vmem>>, %arg5: memref<1x256xf32, #tpu.memory_space<vmem>>, %arg6: memref<64x256xf32, #tpu.memory_space<vmem>>, %arg7: memref<64x256xf32, #tpu.memory_space<vmem>>, %arg8: memref<1x256xf32, #tpu.memory_space<vmem>>, %arg9: memref<64x16xf32, #tpu.memory_space<vmem>>, %arg10: memref<1x16xf32, #tpu.memory_space<vmem>>, %arg11: memref<16x2xf32, #tpu.memory_space<vmem>>, %arg12: memref<1x2xf32, #tpu.memory_space<vmem>>, %arg13: memref<2x8x64xf32, #tpu.memory_space<vmem>>, %arg14: memref<2x8x2xf32, #tpu.memory_space<vmem>>, %arg15: memref<2x2x64xf32, #tpu.memory_space<vmem>>, %arg16: memref<2x2x64xf32, #tpu.memory_space<vmem>>) attributes {dimension_semantics = [], scalar_prefetch = 0 : i64, scratch_operands = 0 : i64, tpu.core_type = #tpu.core_type<tc>} {
    %0 = tpu.iota {dimensions = array<i32: 1>} : vector<2x128xi32>
    %c64_i32 = arith.constant 64 : i32
    %1 = vector.broadcast %c64_i32 : i32 to vector<2x128xi32>
    %2 = arith.cmpi slt, %0, %1 : vector<2x128xi32>
    %c0 = arith.constant 0 : index
    %c0_0 = arith.constant 0 : index
    %c0_1 = arith.constant 0 : index
    %3 = vector.load %arg0[%c0, %c0_0, %c0_1] : memref<2x8x32xf32, #tpu.memory_space<vmem>>, vector<2x8x32xf32>
    %4 = vector.shape_cast %3 : vector<2x8x32xf32> to vector<16x32xf32>
    %c0_2 = arith.constant 0 : index
    %c0_3 = arith.constant 0 : index
    %5 = vector.load %arg3[%c0_2, %c0_3] : memref<32x256xf32, #tpu.memory_space<vmem>>, vector<32x256xf32>
    %cst = arith.constant dense<0.000000e+00> : vector<16x256xf32>
    %6 = tpu.matmul %4, %5, %cst {dimension_numbers = #tpu.dot_dimension_numbers<[1], [0], [0], [1], [0, 0, 1, 1], [], []>} : vector<16x32xf32>, vector<32x256xf32>, vector<16x256xf32> -> vector<16x256xf32>
    %c0_4 = arith.constant 0 : index
    %c0_5 = arith.constant 0 : index
    %7 = vector.load %arg5[%c0_4, %c0_5] : memref<1x256xf32, #tpu.memory_space<vmem>>, vector<1x256xf32>
    %8 = vector.broadcast %7 : vector<1x256xf32> to vector<16x256xf32>
    %9 = arith.addf %6, %8 : vector<16x256xf32>
    %10 = vector.shape_cast %9 : vector<16x256xf32> to vector<2x8x256xf32>
    %c0_6 = arith.constant 0 : index
    %c0_7 = arith.constant 0 : index
    %c0_8 = arith.constant 0 : index
    %11 = vector.load %arg1[%c0_6, %c0_7, %c0_8] : memref<2x2x64xf32, #tpu.memory_space<vmem>>, vector<1x2x64xf32>
    %12 = vector.shape_cast %11 : vector<1x2x64xf32> to vector<2x64xf32>
    %c0_9 = arith.constant 0 : index
    %c0_10 = arith.constant 0 : index
    %c0_11 = arith.constant 0 : index
    %13 = vector.load %arg2[%c0_9, %c0_10, %c0_11] : memref<2x2x64xf32, #tpu.memory_space<vmem>>, vector<1x2x64xf32>
    %14 = vector.shape_cast %13 : vector<1x2x64xf32> to vector<2x64xf32>
    %15 = vector.extract_strided_slice %10 {offsets = [0, 0, 0], sizes = [2, 1, 256], strides = [1, 1, 1]} : vector<2x8x256xf32> to vector<2x1x256xf32>
    %16 = vector.shape_cast %15 : vector<2x1x256xf32> to vector<2x256xf32>
    %c0_12 = arith.constant 0 : index
    %c0_13 = arith.constant 0 : index
    %17 = vector.load %arg4[%c0_12, %c0_13] : memref<64x256xf32, #tpu.memory_space<vmem>>, vector<64x256xf32>
    %cst_14 = arith.constant dense<0.000000e+00> : vector<2x256xf32>
    %18 = tpu.matmul %12, %17, %cst_14 {dimension_numbers = #tpu.dot_dimension_numbers<[1], [0], [0], [1], [0, 0, 1, 1], [], []>} : vector<2x64xf32>, vector<64x256xf32>, vector<2x256xf32> -> vector<2x256xf32>
    %19 = arith.addf %16, %18 : vector<2x256xf32>
    %20 = vector.extract_strided_slice %19 {offsets = [0, 0], sizes = [2, 128], strides = [1, 1]} : vector<2x256xf32> to vector<2x128xf32>
    %21 = arith.negf %20 : vector<2x128xf32>
    %22 = math.exp %21 : vector<2x128xf32>
    %cst_15 = arith.constant 1.000000e+00 : f32
    %23 = vector.broadcast %cst_15 : f32 to vector<2x128xf32>
    %24 = arith.addf %23, %22 : vector<2x128xf32>
    %25 = arith.divf %23, %24 : vector<2x128xf32>
    %26 = vector.extract_strided_slice %19 {offsets = [0, 128], sizes = [2, 128], strides = [1, 1]} : vector<2x256xf32> to vector<2x128xf32>
    %27 = math.tanh %26 : vector<2x128xf32>
    %28 = arith.negf %26 : vector<2x128xf32>
    %29 = math.exp %28 : vector<2x128xf32>
    %cst_16 = arith.constant 1.000000e+00 : f32
    %30 = vector.broadcast %cst_16 : f32 to vector<2x128xf32>
    %31 = arith.addf %30, %29 : vector<2x128xf32>
    %32 = arith.divf %30, %31 : vector<2x128xf32>
    %33 = arith.select %2, %27, %32 : vector<2x128xi1>, vector<2x128xf32>
    %34 = vector.extract_strided_slice %25 {offsets = [0, 0], sizes = [2, 64], strides = [1, 1]} : vector<2x128xf32> to vector<2x64xf32>
    %35 = vector.extract_strided_slice %25 {offsets = [0, 64], sizes = [2, 64], strides = [1, 1]} : vector<2x128xf32> to vector<2x64xf32>
    %36 = vector.extract_strided_slice %33 {offsets = [0, 0], sizes = [2, 64], strides = [1, 1]} : vector<2x128xf32> to vector<2x64xf32>
    %37 = vector.extract_strided_slice %33 {offsets = [0, 64], sizes = [2, 64], strides = [1, 1]} : vector<2x128xf32> to vector<2x64xf32>
    %38 = arith.mulf %35, %14 : vector<2x64xf32>
    %39 = arith.mulf %34, %36 : vector<2x64xf32>
    %40 = arith.addf %38, %39 : vector<2x64xf32>
    %41 = math.tanh %40 : vector<2x64xf32>
    %42 = arith.mulf %37, %41 : vector<2x64xf32>
    %43 = vector.extract_strided_slice %10 {offsets = [0, 1, 0], sizes = [2, 1, 256], strides = [1, 1, 1]} : vector<2x8x256xf32> to vector<2x1x256xf32>
    %44 = vector.shape_cast %43 : vector<2x1x256xf32> to vector<2x256xf32>
    %c0_17 = arith.constant 0 : index
    %c0_18 = arith.constant 0 : index
    %45 = vector.load %arg4[%c0_17, %c0_18] : memref<64x256xf32, #tpu.memory_space<vmem>>, vector<64x256xf32>
    %cst_19 = arith.constant dense<0.000000e+00> : vector<2x256xf32>
    %46 = tpu.matmul %42, %45, %cst_19 {dimension_numbers = #tpu.dot_dimension_numbers<[1], [0], [0], [1], [0, 0, 1, 1], [], []>} : vector<2x64xf32>, vector<64x256xf32>, vector<2x256xf32> -> vector<2x256xf32>
    %47 = arith.addf %44, %46 : vector<2x256xf32>
    %48 = vector.extract_strided_slice %47 {offsets = [0, 0], sizes = [2, 128], strides = [1, 1]} : vector<2x256xf32> to vector<2x128xf32>
    %49 = arith.negf %48 : vector<2x128xf32>
    %50 = math.exp %49 : vector<2x128xf32>
    %cst_20 = arith.constant 1.000000e+00 : f32
    %51 = vector.broadcast %cst_20 : f32 to vector<2x128xf32>
    %52 = arith.addf %51, %50 : vector<2x128xf32>
    %53 = arith.divf %51, %52 : vector<2x128xf32>
    %54 = vector.extract_strided_slice %47 {offsets = [0, 128], sizes = [2, 128], strides = [1, 1]} : vector<2x256xf32> to vector<2x128xf32>
    %55 = math.tanh %54 : vector<2x128xf32>
    %56 = arith.negf %54 : vector<2x128xf32>
    %57 = math.exp %56 : vector<2x128xf32>
    %cst_21 = arith.constant 1.000000e+00 : f32
    %58 = vector.broadcast %cst_21 : f32 to vector<2x128xf32>
    %59 = arith.addf %58, %57 : vector<2x128xf32>
    %60 = arith.divf %58, %59 : vector<2x128xf32>
    %61 = arith.select %2, %55, %60 : vector<2x128xi1>, vector<2x128xf32>
    %62 = vector.extract_strided_slice %53 {offsets = [0, 0], sizes = [2, 64], strides = [1, 1]} : vector<2x128xf32> to vector<2x64xf32>
    %63 = vector.extract_strided_slice %53 {offsets = [0, 64], sizes = [2, 64], strides = [1, 1]} : vector<2x128xf32> to vector<2x64xf32>
    %64 = vector.extract_strided_slice %61 {offsets = [0, 0], sizes = [2, 64], strides = [1, 1]} : vector<2x128xf32> to vector<2x64xf32>
    %65 = vector.extract_strided_slice %61 {offsets = [0, 64], sizes = [2, 64], strides = [1, 1]} : vector<2x128xf32> to vector<2x64xf32>
    %66 = arith.mulf %63, %40 : vector<2x64xf32>
    %67 = arith.mulf %62, %64 : vector<2x64xf32>
    %68 = arith.addf %66, %67 : vector<2x64xf32>
    %69 = math.tanh %68 : vector<2x64xf32>
    %70 = arith.mulf %65, %69 : vector<2x64xf32>
    %71 = vector.extract_strided_slice %10 {offsets = [0, 2, 0], sizes = [2, 1, 256], strides = [1, 1, 1]} : vector<2x8x256xf32> to vector<2x1x256xf32>
    %72 = vector.shape_cast %71 : vector<2x1x256xf32> to vector<2x256xf32>
    %c0_22 = arith.constant 0 : index
    %c0_23 = arith.constant 0 : index
    %73 = vector.load %arg4[%c0_22, %c0_23] : memref<64x256xf32, #tpu.memory_space<vmem>>, vector<64x256xf32>
    %cst_24 = arith.constant dense<0.000000e+00> : vector<2x256xf32>
    %74 = tpu.matmul %70, %73, %cst_24 {dimension_numbers = #tpu.dot_dimension_numbers<[1], [0], [0], [1], [0, 0, 1, 1], [], []>} : vector<2x64xf32>, vector<64x256xf32>, vector<2x256xf32> -> vector<2x256xf32>
    %75 = arith.addf %72, %74 : vector<2x256xf32>
    %76 = vector.extract_strided_slice %75 {offsets = [0, 0], sizes = [2, 128], strides = [1, 1]} : vector<2x256xf32> to vector<2x128xf32>
    %77 = arith.negf %76 : vector<2x128xf32>
    %78 = math.exp %77 : vector<2x128xf32>
    %cst_25 = arith.constant 1.000000e+00 : f32
    %79 = vector.broadcast %cst_25 : f32 to vector<2x128xf32>
    %80 = arith.addf %79, %78 : vector<2x128xf32>
    %81 = arith.divf %79, %80 : vector<2x128xf32>
    %82 = vector.extract_strided_slice %75 {offsets = [0, 128], sizes = [2, 128], strides = [1, 1]} : vector<2x256xf32> to vector<2x128xf32>
    %83 = math.tanh %82 : vector<2x128xf32>
    %84 = arith.negf %82 : vector<2x128xf32>
    %85 = math.exp %84 : vector<2x128xf32>
    %cst_26 = arith.constant 1.000000e+00 : f32
    %86 = vector.broadcast %cst_26 : f32 to vector<2x128xf32>
    %87 = arith.addf %86, %85 : vector<2x128xf32>
    %88 = arith.divf %86, %87 : vector<2x128xf32>
    %89 = arith.select %2, %83, %88 : vector<2x128xi1>, vector<2x128xf32>
    %90 = vector.extract_strided_slice %81 {offsets = [0, 0], sizes = [2, 64], strides = [1, 1]} : vector<2x128xf32> to vector<2x64xf32>
    %91 = vector.extract_strided_slice %81 {offsets = [0, 64], sizes = [2, 64], strides = [1, 1]} : vector<2x128xf32> to vector<2x64xf32>
    %92 = vector.extract_strided_slice %89 {offsets = [0, 0], sizes = [2, 64], strides = [1, 1]} : vector<2x128xf32> to vector<2x64xf32>
    %93 = vector.extract_strided_slice %89 {offsets = [0, 64], sizes = [2, 64], strides = [1, 1]} : vector<2x128xf32> to vector<2x64xf32>
    %94 = arith.mulf %91, %68 : vector<2x64xf32>
    %95 = arith.mulf %90, %92 : vector<2x64xf32>
    %96 = arith.addf %94, %95 : vector<2x64xf32>
    %97 = math.tanh %96 : vector<2x64xf32>
    %98 = arith.mulf %93, %97 : vector<2x64xf32>
    %99 = vector.extract_strided_slice %10 {offsets = [0, 3, 0], sizes = [2, 1, 256], strides = [1, 1, 1]} : vector<2x8x256xf32> to vector<2x1x256xf32>
    %100 = vector.shape_cast %99 : vector<2x1x256xf32> to vector<2x256xf32>
    %c0_27 = arith.constant 0 : index
    %c0_28 = arith.constant 0 : index
    %101 = vector.load %arg4[%c0_27, %c0_28] : memref<64x256xf32, #tpu.memory_space<vmem>>, vector<64x256xf32>
    %cst_29 = arith.constant dense<0.000000e+00> : vector<2x256xf32>
    %102 = tpu.matmul %98, %101, %cst_29 {dimension_numbers = #tpu.dot_dimension_numbers<[1], [0], [0], [1], [0, 0, 1, 1], [], []>} : vector<2x64xf32>, vector<64x256xf32>, vector<2x256xf32> -> vector<2x256xf32>
    %103 = arith.addf %100, %102 : vector<2x256xf32>
    %104 = vector.extract_strided_slice %103 {offsets = [0, 0], sizes = [2, 128], strides = [1, 1]} : vector<2x256xf32> to vector<2x128xf32>
    %105 = arith.negf %104 : vector<2x128xf32>
    %106 = math.exp %105 : vector<2x128xf32>
    %cst_30 = arith.constant 1.000000e+00 : f32
    %107 = vector.broadcast %cst_30 : f32 to vector<2x128xf32>
    %108 = arith.addf %107, %106 : vector<2x128xf32>
    %109 = arith.divf %107, %108 : vector<2x128xf32>
    %110 = vector.extract_strided_slice %103 {offsets = [0, 128], sizes = [2, 128], strides = [1, 1]} : vector<2x256xf32> to vector<2x128xf32>
    %111 = math.tanh %110 : vector<2x128xf32>
    %112 = arith.negf %110 : vector<2x128xf32>
    %113 = math.exp %112 : vector<2x128xf32>
    %cst_31 = arith.constant 1.000000e+00 : f32
    %114 = vector.broadcast %cst_31 : f32 to vector<2x128xf32>
    %115 = arith.addf %114, %113 : vector<2x128xf32>
    %116 = arith.divf %114, %115 : vector<2x128xf32>
    %117 = arith.select %2, %111, %116 : vector<2x128xi1>, vector<2x128xf32>
    %118 = vector.extract_strided_slice %109 {offsets = [0, 0], sizes = [2, 64], strides = [1, 1]} : vector<2x128xf32> to vector<2x64xf32>
    %119 = vector.extract_strided_slice %109 {offsets = [0, 64], sizes = [2, 64], strides = [1, 1]} : vector<2x128xf32> to vector<2x64xf32>
    %120 = vector.extract_strided_slice %117 {offsets = [0, 0], sizes = [2, 64], strides = [1, 1]} : vector<2x128xf32> to vector<2x64xf32>
    %121 = vector.extract_strided_slice %117 {offsets = [0, 64], sizes = [2, 64], strides = [1, 1]} : vector<2x128xf32> to vector<2x64xf32>
    %122 = arith.mulf %119, %96 : vector<2x64xf32>
    %123 = arith.mulf %118, %120 : vector<2x64xf32>
    %124 = arith.addf %122, %123 : vector<2x64xf32>
    %125 = math.tanh %124 : vector<2x64xf32>
    %126 = arith.mulf %121, %125 : vector<2x64xf32>
    %127 = vector.extract_strided_slice %10 {offsets = [0, 4, 0], sizes = [2, 1, 256], strides = [1, 1, 1]} : vector<2x8x256xf32> to vector<2x1x256xf32>
    %128 = vector.shape_cast %127 : vector<2x1x256xf32> to vector<2x256xf32>
    %c0_32 = arith.constant 0 : index
    %c0_33 = arith.constant 0 : index
    %129 = vector.load %arg4[%c0_32, %c0_33] : memref<64x256xf32, #tpu.memory_space<vmem>>, vector<64x256xf32>
    %cst_34 = arith.constant dense<0.000000e+00> : vector<2x256xf32>
    %130 = tpu.matmul %126, %129, %cst_34 {dimension_numbers = #tpu.dot_dimension_numbers<[1], [0], [0], [1], [0, 0, 1, 1], [], []>} : vector<2x64xf32>, vector<64x256xf32>, vector<2x256xf32> -> vector<2x256xf32>
    %131 = arith.addf %128, %130 : vector<2x256xf32>
    %132 = vector.extract_strided_slice %131 {offsets = [0, 0], sizes = [2, 128], strides = [1, 1]} : vector<2x256xf32> to vector<2x128xf32>
    %133 = arith.negf %132 : vector<2x128xf32>
    %134 = math.exp %133 : vector<2x128xf32>
    %cst_35 = arith.constant 1.000000e+00 : f32
    %135 = vector.broadcast %cst_35 : f32 to vector<2x128xf32>
    %136 = arith.addf %135, %134 : vector<2x128xf32>
    %137 = arith.divf %135, %136 : vector<2x128xf32>
    %138 = vector.extract_strided_slice %131 {offsets = [0, 128], sizes = [2, 128], strides = [1, 1]} : vector<2x256xf32> to vector<2x128xf32>
    %139 = math.tanh %138 : vector<2x128xf32>
    %140 = arith.negf %138 : vector<2x128xf32>
    %141 = math.exp %140 : vector<2x128xf32>
    %cst_36 = arith.constant 1.000000e+00 : f32
    %142 = vector.broadcast %cst_36 : f32 to vector<2x128xf32>
    %143 = arith.addf %142, %141 : vector<2x128xf32>
    %144 = arith.divf %142, %143 : vector<2x128xf32>
    %145 = arith.select %2, %139, %144 : vector<2x128xi1>, vector<2x128xf32>
    %146 = vector.extract_strided_slice %137 {offsets = [0, 0], sizes = [2, 64], strides = [1, 1]} : vector<2x128xf32> to vector<2x64xf32>
    %147 = vector.extract_strided_slice %137 {offsets = [0, 64], sizes = [2, 64], strides = [1, 1]} : vector<2x128xf32> to vector<2x64xf32>
    %148 = vector.extract_strided_slice %145 {offsets = [0, 0], sizes = [2, 64], strides = [1, 1]} : vector<2x128xf32> to vector<2x64xf32>
    %149 = vector.extract_strided_slice %145 {offsets = [0, 64], sizes = [2, 64], strides = [1, 1]} : vector<2x128xf32> to vector<2x64xf32>
    %150 = arith.mulf %147, %124 : vector<2x64xf32>
    %151 = arith.mulf %146, %148 : vector<2x64xf32>
    %152 = arith.addf %150, %151 : vector<2x64xf32>
    %153 = math.tanh %152 : vector<2x64xf32>
    %154 = arith.mulf %149, %153 : vector<2x64xf32>
    %155 = vector.extract_strided_slice %10 {offsets = [0, 5, 0], sizes = [2, 1, 256], strides = [1, 1, 1]} : vector<2x8x256xf32> to vector<2x1x256xf32>
    %156 = vector.shape_cast %155 : vector<2x1x256xf32> to vector<2x256xf32>
    %c0_37 = arith.constant 0 : index
    %c0_38 = arith.constant 0 : index
    %157 = vector.load %arg4[%c0_37, %c0_38] : memref<64x256xf32, #tpu.memory_space<vmem>>, vector<64x256xf32>
    %cst_39 = arith.constant dense<0.000000e+00> : vector<2x256xf32>
    %158 = tpu.matmul %154, %157, %cst_39 {dimension_numbers = #tpu.dot_dimension_numbers<[1], [0], [0], [1], [0, 0, 1, 1], [], []>} : vector<2x64xf32>, vector<64x256xf32>, vector<2x256xf32> -> vector<2x256xf32>
    %159 = arith.addf %156, %158 : vector<2x256xf32>
    %160 = vector.extract_strided_slice %159 {offsets = [0, 0], sizes = [2, 128], strides = [1, 1]} : vector<2x256xf32> to vector<2x128xf32>
    %161 = arith.negf %160 : vector<2x128xf32>
    %162 = math.exp %161 : vector<2x128xf32>
    %cst_40 = arith.constant 1.000000e+00 : f32
    %163 = vector.broadcast %cst_40 : f32 to vector<2x128xf32>
    %164 = arith.addf %163, %162 : vector<2x128xf32>
    %165 = arith.divf %163, %164 : vector<2x128xf32>
    %166 = vector.extract_strided_slice %159 {offsets = [0, 128], sizes = [2, 128], strides = [1, 1]} : vector<2x256xf32> to vector<2x128xf32>
    %167 = math.tanh %166 : vector<2x128xf32>
    %168 = arith.negf %166 : vector<2x128xf32>
    %169 = math.exp %168 : vector<2x128xf32>
    %cst_41 = arith.constant 1.000000e+00 : f32
    %170 = vector.broadcast %cst_41 : f32 to vector<2x128xf32>
    %171 = arith.addf %170, %169 : vector<2x128xf32>
    %172 = arith.divf %170, %171 : vector<2x128xf32>
    %173 = arith.select %2, %167, %172 : vector<2x128xi1>, vector<2x128xf32>
    %174 = vector.extract_strided_slice %165 {offsets = [0, 0], sizes = [2, 64], strides = [1, 1]} : vector<2x128xf32> to vector<2x64xf32>
    %175 = vector.extract_strided_slice %165 {offsets = [0, 64], sizes = [2, 64], strides = [1, 1]} : vector<2x128xf32> to vector<2x64xf32>
    %176 = vector.extract_strided_slice %173 {offsets = [0, 0], sizes = [2, 64], strides = [1, 1]} : vector<2x128xf32> to vector<2x64xf32>
    %177 = vector.extract_strided_slice %173 {offsets = [0, 64], sizes = [2, 64], strides = [1, 1]} : vector<2x128xf32> to vector<2x64xf32>
    %178 = arith.mulf %175, %152 : vector<2x64xf32>
    %179 = arith.mulf %174, %176 : vector<2x64xf32>
    %180 = arith.addf %178, %179 : vector<2x64xf32>
    %181 = math.tanh %180 : vector<2x64xf32>
    %182 = arith.mulf %177, %181 : vector<2x64xf32>
    %183 = vector.extract_strided_slice %10 {offsets = [0, 6, 0], sizes = [2, 1, 256], strides = [1, 1, 1]} : vector<2x8x256xf32> to vector<2x1x256xf32>
    %184 = vector.shape_cast %183 : vector<2x1x256xf32> to vector<2x256xf32>
    %c0_42 = arith.constant 0 : index
    %c0_43 = arith.constant 0 : index
    %185 = vector.load %arg4[%c0_42, %c0_43] : memref<64x256xf32, #tpu.memory_space<vmem>>, vector<64x256xf32>
    %cst_44 = arith.constant dense<0.000000e+00> : vector<2x256xf32>
    %186 = tpu.matmul %182, %185, %cst_44 {dimension_numbers = #tpu.dot_dimension_numbers<[1], [0], [0], [1], [0, 0, 1, 1], [], []>} : vector<2x64xf32>, vector<64x256xf32>, vector<2x256xf32> -> vector<2x256xf32>
    %187 = arith.addf %184, %186 : vector<2x256xf32>
    %188 = vector.extract_strided_slice %187 {offsets = [0, 0], sizes = [2, 128], strides = [1, 1]} : vector<2x256xf32> to vector<2x128xf32>
    %189 = arith.negf %188 : vector<2x128xf32>
    %190 = math.exp %189 : vector<2x128xf32>
    %cst_45 = arith.constant 1.000000e+00 : f32
    %191 = vector.broadcast %cst_45 : f32 to vector<2x128xf32>
    %192 = arith.addf %191, %190 : vector<2x128xf32>
    %193 = arith.divf %191, %192 : vector<2x128xf32>
    %194 = vector.extract_strided_slice %187 {offsets = [0, 128], sizes = [2, 128], strides = [1, 1]} : vector<2x256xf32> to vector<2x128xf32>
    %195 = math.tanh %194 : vector<2x128xf32>
    %196 = arith.negf %194 : vector<2x128xf32>
    %197 = math.exp %196 : vector<2x128xf32>
    %cst_46 = arith.constant 1.000000e+00 : f32
    %198 = vector.broadcast %cst_46 : f32 to vector<2x128xf32>
    %199 = arith.addf %198, %197 : vector<2x128xf32>
    %200 = arith.divf %198, %199 : vector<2x128xf32>
    %201 = arith.select %2, %195, %200 : vector<2x128xi1>, vector<2x128xf32>
    %202 = vector.extract_strided_slice %193 {offsets = [0, 0], sizes = [2, 64], strides = [1, 1]} : vector<2x128xf32> to vector<2x64xf32>
    %203 = vector.extract_strided_slice %193 {offsets = [0, 64], sizes = [2, 64], strides = [1, 1]} : vector<2x128xf32> to vector<2x64xf32>
    %204 = vector.extract_strided_slice %201 {offsets = [0, 0], sizes = [2, 64], strides = [1, 1]} : vector<2x128xf32> to vector<2x64xf32>
    %205 = vector.extract_strided_slice %201 {offsets = [0, 64], sizes = [2, 64], strides = [1, 1]} : vector<2x128xf32> to vector<2x64xf32>
    %206 = arith.mulf %203, %180 : vector<2x64xf32>
    %207 = arith.mulf %202, %204 : vector<2x64xf32>
    %208 = arith.addf %206, %207 : vector<2x64xf32>
    %209 = math.tanh %208 : vector<2x64xf32>
    %210 = arith.mulf %205, %209 : vector<2x64xf32>
    %211 = vector.extract_strided_slice %10 {offsets = [0, 7, 0], sizes = [2, 1, 256], strides = [1, 1, 1]} : vector<2x8x256xf32> to vector<2x1x256xf32>
    %212 = vector.shape_cast %211 : vector<2x1x256xf32> to vector<2x256xf32>
    %c0_47 = arith.constant 0 : index
    %c0_48 = arith.constant 0 : index
    %213 = vector.load %arg4[%c0_47, %c0_48] : memref<64x256xf32, #tpu.memory_space<vmem>>, vector<64x256xf32>
    %cst_49 = arith.constant dense<0.000000e+00> : vector<2x256xf32>
    %214 = tpu.matmul %210, %213, %cst_49 {dimension_numbers = #tpu.dot_dimension_numbers<[1], [0], [0], [1], [0, 0, 1, 1], [], []>} : vector<2x64xf32>, vector<64x256xf32>, vector<2x256xf32> -> vector<2x256xf32>
    %215 = arith.addf %212, %214 : vector<2x256xf32>
    %216 = vector.extract_strided_slice %215 {offsets = [0, 0], sizes = [2, 128], strides = [1, 1]} : vector<2x256xf32> to vector<2x128xf32>
    %217 = arith.negf %216 : vector<2x128xf32>
    %218 = math.exp %217 : vector<2x128xf32>
    %cst_50 = arith.constant 1.000000e+00 : f32
    %219 = vector.broadcast %cst_50 : f32 to vector<2x128xf32>
    %220 = arith.addf %219, %218 : vector<2x128xf32>
    %221 = arith.divf %219, %220 : vector<2x128xf32>
    %222 = vector.extract_strided_slice %215 {offsets = [0, 128], sizes = [2, 128], strides = [1, 1]} : vector<2x256xf32> to vector<2x128xf32>
    %223 = math.tanh %222 : vector<2x128xf32>
    %224 = arith.negf %222 : vector<2x128xf32>
    %225 = math.exp %224 : vector<2x128xf32>
    %cst_51 = arith.constant 1.000000e+00 : f32
    %226 = vector.broadcast %cst_51 : f32 to vector<2x128xf32>
    %227 = arith.addf %226, %225 : vector<2x128xf32>
    %228 = arith.divf %226, %227 : vector<2x128xf32>
    %229 = arith.select %2, %223, %228 : vector<2x128xi1>, vector<2x128xf32>
    %230 = vector.extract_strided_slice %221 {offsets = [0, 0], sizes = [2, 64], strides = [1, 1]} : vector<2x128xf32> to vector<2x64xf32>
    %231 = vector.extract_strided_slice %221 {offsets = [0, 64], sizes = [2, 64], strides = [1, 1]} : vector<2x128xf32> to vector<2x64xf32>
    %232 = vector.extract_strided_slice %229 {offsets = [0, 0], sizes = [2, 64], strides = [1, 1]} : vector<2x128xf32> to vector<2x64xf32>
    %233 = vector.extract_strided_slice %229 {offsets = [0, 64], sizes = [2, 64], strides = [1, 1]} : vector<2x128xf32> to vector<2x64xf32>
    %234 = arith.mulf %231, %208 : vector<2x64xf32>
    %235 = arith.mulf %230, %232 : vector<2x64xf32>
    %236 = arith.addf %234, %235 : vector<2x64xf32>
    %237 = math.tanh %236 : vector<2x64xf32>
    %238 = arith.mulf %233, %237 : vector<2x64xf32>
    %c0_52 = arith.constant 0 : index
    %c0_53 = arith.constant 0 : index
    %c0_54 = arith.constant 0 : index
    %239 = vector.load %arg15[%c0_52, %c0_53, %c0_54] : memref<2x2x64xf32, #tpu.memory_space<vmem>>, vector<1x2x64xf32>
    %240 = vector.shape_cast %239 : vector<1x2x64xf32> to vector<2x64xf32>
    %241 = vector.shape_cast %238 : vector<2x64xf32> to vector<1x2x64xf32>
    tpu.vector_store %arg15[%c0_52, %c0_53, %c0_54], %241 {strides = array<i32>} : memref<2x2x64xf32, #tpu.memory_space<vmem>>, vector<1x2x64xf32>,
    %c0_55 = arith.constant 0 : index
    %c0_56 = arith.constant 0 : index
    %c0_57 = arith.constant 0 : index
    %242 = vector.load %arg16[%c0_55, %c0_56, %c0_57] : memref<2x2x64xf32, #tpu.memory_space<vmem>>, vector<1x2x64xf32>
    %243 = vector.shape_cast %242 : vector<1x2x64xf32> to vector<2x64xf32>
    %244 = vector.shape_cast %236 : vector<2x64xf32> to vector<1x2x64xf32>
    tpu.vector_store %arg16[%c0_55, %c0_56, %c0_57], %244 {strides = array<i32>} : memref<2x2x64xf32, #tpu.memory_space<vmem>>, vector<1x2x64xf32>,
    %245 = vector.shape_cast %42 : vector<2x64xf32> to vector<2x1x64xf32>
    %246 = vector.shape_cast %70 : vector<2x64xf32> to vector<2x1x64xf32>
    %247 = vector.shape_cast %98 : vector<2x64xf32> to vector<2x1x64xf32>
    %248 = vector.shape_cast %126 : vector<2x64xf32> to vector<2x1x64xf32>
    %249 = vector.shape_cast %154 : vector<2x64xf32> to vector<2x1x64xf32>
    %250 = vector.shape_cast %182 : vector<2x64xf32> to vector<2x1x64xf32>
    %251 = vector.shape_cast %210 : vector<2x64xf32> to vector<2x1x64xf32>
    %252 = vector.shape_cast %238 : vector<2x64xf32> to vector<2x1x64xf32>
    %253 = tpu.concatenate %245, %246, %247, %248, %249, %250, %251, %252 in 1 : vector<2x1x64xf32>, vector<2x1x64xf32>, vector<2x1x64xf32>, vector<2x1x64xf32>, vector<2x1x64xf32>, vector<2x1x64xf32>, vector<2x1x64xf32>, vector<2x1x64xf32> -> vector<2x8x64xf32>
    %254 = vector.shape_cast %253 : vector<2x8x64xf32> to vector<16x64xf32>
    %c0_58 = arith.constant 0 : index
    %c0_59 = arith.constant 0 : index
    %255 = vector.load %arg6[%c0_58, %c0_59] : memref<64x256xf32, #tpu.memory_space<vmem>>, vector<64x256xf32>
    %cst_60 = arith.constant dense<0.000000e+00> : vector<16x256xf32>
    %256 = tpu.matmul %254, %255, %cst_60 {dimension_numbers = #tpu.dot_dimension_numbers<[1], [0], [0], [1], [0, 0, 1, 1], [], []>} : vector<16x64xf32>, vector<64x256xf32>, vector<16x256xf32> -> vector<16x256xf32>
    %c0_61 = arith.constant 0 : index
    %c0_62 = arith.constant 0 : index
    %257 = vector.load %arg8[%c0_61, %c0_62] : memref<1x256xf32, #tpu.memory_space<vmem>>, vector<1x256xf32>
    %258 = vector.broadcast %257 : vector<1x256xf32> to vector<16x256xf32>
    %259 = arith.addf %256, %258 : vector<16x256xf32>
    %260 = vector.shape_cast %259 : vector<16x256xf32> to vector<2x8x256xf32>
    %c1 = arith.constant 1 : index
    %c0_63 = arith.constant 0 : index
    %c0_64 = arith.constant 0 : index
    %261 = vector.load %arg1[%c1, %c0_63, %c0_64] : memref<2x2x64xf32, #tpu.memory_space<vmem>>, vector<1x2x64xf32>
    %262 = vector.shape_cast %261 : vector<1x2x64xf32> to vector<2x64xf32>
    %c1_65 = arith.constant 1 : index
    %c0_66 = arith.constant 0 : index
    %c0_67 = arith.constant 0 : index
    %263 = vector.load %arg2[%c1_65, %c0_66, %c0_67] : memref<2x2x64xf32, #tpu.memory_space<vmem>>, vector<1x2x64xf32>
    %264 = vector.shape_cast %263 : vector<1x2x64xf32> to vector<2x64xf32>
    %265 = vector.extract_strided_slice %260 {offsets = [0, 0, 0], sizes = [2, 1, 256], strides = [1, 1, 1]} : vector<2x8x256xf32> to vector<2x1x256xf32>
    %266 = vector.shape_cast %265 : vector<2x1x256xf32> to vector<2x256xf32>
    %c0_68 = arith.constant 0 : index
    %c0_69 = arith.constant 0 : index
    %267 = vector.load %arg7[%c0_68, %c0_69] : memref<64x256xf32, #tpu.memory_space<vmem>>, vector<64x256xf32>
    %cst_70 = arith.constant dense<0.000000e+00> : vector<2x256xf32>
    %268 = tpu.matmul %262, %267, %cst_70 {dimension_numbers = #tpu.dot_dimension_numbers<[1], [0], [0], [1], [0, 0, 1, 1], [], []>} : vector<2x64xf32>, vector<64x256xf32>, vector<2x256xf32> -> vector<2x256xf32>
    %269 = arith.addf %266, %268 : vector<2x256xf32>
    %270 = vector.extract_strided_slice %269 {offsets = [0, 0], sizes = [2, 128], strides = [1, 1]} : vector<2x256xf32> to vector<2x128xf32>
    %271 = arith.negf %270 : vector<2x128xf32>
    %272 = math.exp %271 : vector<2x128xf32>
    %cst_71 = arith.constant 1.000000e+00 : f32
    %273 = vector.broadcast %cst_71 : f32 to vector<2x128xf32>
    %274 = arith.addf %273, %272 : vector<2x128xf32>
    %275 = arith.divf %273, %274 : vector<2x128xf32>
    %276 = vector.extract_strided_slice %269 {offsets = [0, 128], sizes = [2, 128], strides = [1, 1]} : vector<2x256xf32> to vector<2x128xf32>
    %277 = math.tanh %276 : vector<2x128xf32>
    %278 = arith.negf %276 : vector<2x128xf32>
    %279 = math.exp %278 : vector<2x128xf32>
    %cst_72 = arith.constant 1.000000e+00 : f32
    %280 = vector.broadcast %cst_72 : f32 to vector<2x128xf32>
    %281 = arith.addf %280, %279 : vector<2x128xf32>
    %282 = arith.divf %280, %281 : vector<2x128xf32>
    %283 = arith.select %2, %277, %282 : vector<2x128xi1>, vector<2x128xf32>
    %284 = vector.extract_strided_slice %275 {offsets = [0, 0], sizes = [2, 64], strides = [1, 1]} : vector<2x128xf32> to vector<2x64xf32>
    %285 = vector.extract_strided_slice %275 {offsets = [0, 64], sizes = [2, 64], strides = [1, 1]} : vector<2x128xf32> to vector<2x64xf32>
    %286 = vector.extract_strided_slice %283 {offsets = [0, 0], sizes = [2, 64], strides = [1, 1]} : vector<2x128xf32> to vector<2x64xf32>
    %287 = vector.extract_strided_slice %283 {offsets = [0, 64], sizes = [2, 64], strides = [1, 1]} : vector<2x128xf32> to vector<2x64xf32>
    %288 = arith.mulf %285, %264 : vector<2x64xf32>
    %289 = arith.mulf %284, %286 : vector<2x64xf32>
    %290 = arith.addf %288, %289 : vector<2x64xf32>
    %291 = math.tanh %290 : vector<2x64xf32>
    %292 = arith.mulf %287, %291 : vector<2x64xf32>
    %293 = vector.extract_strided_slice %260 {offsets = [0, 1, 0], sizes = [2, 1, 256], strides = [1, 1, 1]} : vector<2x8x256xf32> to vector<2x1x256xf32>
    %294 = vector.shape_cast %293 : vector<2x1x256xf32> to vector<2x256xf32>
    %c0_73 = arith.constant 0 : index
    %c0_74 = arith.constant 0 : index
    %295 = vector.load %arg7[%c0_73, %c0_74] : memref<64x256xf32, #tpu.memory_space<vmem>>, vector<64x256xf32>
    %cst_75 = arith.constant dense<0.000000e+00> : vector<2x256xf32>
    %296 = tpu.matmul %292, %295, %cst_75 {dimension_numbers = #tpu.dot_dimension_numbers<[1], [0], [0], [1], [0, 0, 1, 1], [], []>} : vector<2x64xf32>, vector<64x256xf32>, vector<2x256xf32> -> vector<2x256xf32>
    %297 = arith.addf %294, %296 : vector<2x256xf32>
    %298 = vector.extract_strided_slice %297 {offsets = [0, 0], sizes = [2, 128], strides = [1, 1]} : vector<2x256xf32> to vector<2x128xf32>
    %299 = arith.negf %298 : vector<2x128xf32>
    %300 = math.exp %299 : vector<2x128xf32>
    %cst_76 = arith.constant 1.000000e+00 : f32
    %301 = vector.broadcast %cst_76 : f32 to vector<2x128xf32>
    %302 = arith.addf %301, %300 : vector<2x128xf32>
    %303 = arith.divf %301, %302 : vector<2x128xf32>
    %304 = vector.extract_strided_slice %297 {offsets = [0, 128], sizes = [2, 128], strides = [1, 1]} : vector<2x256xf32> to vector<2x128xf32>
    %305 = math.tanh %304 : vector<2x128xf32>
    %306 = arith.negf %304 : vector<2x128xf32>
    %307 = math.exp %306 : vector<2x128xf32>
    %cst_77 = arith.constant 1.000000e+00 : f32
    %308 = vector.broadcast %cst_77 : f32 to vector<2x128xf32>
    %309 = arith.addf %308, %307 : vector<2x128xf32>
    %310 = arith.divf %308, %309 : vector<2x128xf32>
    %311 = arith.select %2, %305, %310 : vector<2x128xi1>, vector<2x128xf32>
    %312 = vector.extract_strided_slice %303 {offsets = [0, 0], sizes = [2, 64], strides = [1, 1]} : vector<2x128xf32> to vector<2x64xf32>
    %313 = vector.extract_strided_slice %303 {offsets = [0, 64], sizes = [2, 64], strides = [1, 1]} : vector<2x128xf32> to vector<2x64xf32>
    %314 = vector.extract_strided_slice %311 {offsets = [0, 0], sizes = [2, 64], strides = [1, 1]} : vector<2x128xf32> to vector<2x64xf32>
    %315 = vector.extract_strided_slice %311 {offsets = [0, 64], sizes = [2, 64], strides = [1, 1]} : vector<2x128xf32> to vector<2x64xf32>
    %316 = arith.mulf %313, %290 : vector<2x64xf32>
    %317 = arith.mulf %312, %314 : vector<2x64xf32>
    %318 = arith.addf %316, %317 : vector<2x64xf32>
    %319 = math.tanh %318 : vector<2x64xf32>
    %320 = arith.mulf %315, %319 : vector<2x64xf32>
    %321 = vector.extract_strided_slice %260 {offsets = [0, 2, 0], sizes = [2, 1, 256], strides = [1, 1, 1]} : vector<2x8x256xf32> to vector<2x1x256xf32>
    %322 = vector.shape_cast %321 : vector<2x1x256xf32> to vector<2x256xf32>
    %c0_78 = arith.constant 0 : index
    %c0_79 = arith.constant 0 : index
    %323 = vector.load %arg7[%c0_78, %c0_79] : memref<64x256xf32, #tpu.memory_space<vmem>>, vector<64x256xf32>
    %cst_80 = arith.constant dense<0.000000e+00> : vector<2x256xf32>
    %324 = tpu.matmul %320, %323, %cst_80 {dimension_numbers = #tpu.dot_dimension_numbers<[1], [0], [0], [1], [0, 0, 1, 1], [], []>} : vector<2x64xf32>, vector<64x256xf32>, vector<2x256xf32> -> vector<2x256xf32>
    %325 = arith.addf %322, %324 : vector<2x256xf32>
    %326 = vector.extract_strided_slice %325 {offsets = [0, 0], sizes = [2, 128], strides = [1, 1]} : vector<2x256xf32> to vector<2x128xf32>
    %327 = arith.negf %326 : vector<2x128xf32>
    %328 = math.exp %327 : vector<2x128xf32>
    %cst_81 = arith.constant 1.000000e+00 : f32
    %329 = vector.broadcast %cst_81 : f32 to vector<2x128xf32>
    %330 = arith.addf %329, %328 : vector<2x128xf32>
    %331 = arith.divf %329, %330 : vector<2x128xf32>
    %332 = vector.extract_strided_slice %325 {offsets = [0, 128], sizes = [2, 128], strides = [1, 1]} : vector<2x256xf32> to vector<2x128xf32>
    %333 = math.tanh %332 : vector<2x128xf32>
    %334 = arith.negf %332 : vector<2x128xf32>
    %335 = math.exp %334 : vector<2x128xf32>
    %cst_82 = arith.constant 1.000000e+00 : f32
    %336 = vector.broadcast %cst_82 : f32 to vector<2x128xf32>
    %337 = arith.addf %336, %335 : vector<2x128xf32>
    %338 = arith.divf %336, %337 : vector<2x128xf32>
    %339 = arith.select %2, %333, %338 : vector<2x128xi1>, vector<2x128xf32>
    %340 = vector.extract_strided_slice %331 {offsets = [0, 0], sizes = [2, 64], strides = [1, 1]} : vector<2x128xf32> to vector<2x64xf32>
    %341 = vector.extract_strided_slice %331 {offsets = [0, 64], sizes = [2, 64], strides = [1, 1]} : vector<2x128xf32> to vector<2x64xf32>
    %342 = vector.extract_strided_slice %339 {offsets = [0, 0], sizes = [2, 64], strides = [1, 1]} : vector<2x128xf32> to vector<2x64xf32>
    %343 = vector.extract_strided_slice %339 {offsets = [0, 64], sizes = [2, 64], strides = [1, 1]} : vector<2x128xf32> to vector<2x64xf32>
    %344 = arith.mulf %341, %318 : vector<2x64xf32>
    %345 = arith.mulf %340, %342 : vector<2x64xf32>
    %346 = arith.addf %344, %345 : vector<2x64xf32>
    %347 = math.tanh %346 : vector<2x64xf32>
    %348 = arith.mulf %343, %347 : vector<2x64xf32>
    %349 = vector.extract_strided_slice %260 {offsets = [0, 3, 0], sizes = [2, 1, 256], strides = [1, 1, 1]} : vector<2x8x256xf32> to vector<2x1x256xf32>
    %350 = vector.shape_cast %349 : vector<2x1x256xf32> to vector<2x256xf32>
    %c0_83 = arith.constant 0 : index
    %c0_84 = arith.constant 0 : index
    %351 = vector.load %arg7[%c0_83, %c0_84] : memref<64x256xf32, #tpu.memory_space<vmem>>, vector<64x256xf32>
    %cst_85 = arith.constant dense<0.000000e+00> : vector<2x256xf32>
    %352 = tpu.matmul %348, %351, %cst_85 {dimension_numbers = #tpu.dot_dimension_numbers<[1], [0], [0], [1], [0, 0, 1, 1], [], []>} : vector<2x64xf32>, vector<64x256xf32>, vector<2x256xf32> -> vector<2x256xf32>
    %353 = arith.addf %350, %352 : vector<2x256xf32>
    %354 = vector.extract_strided_slice %353 {offsets = [0, 0], sizes = [2, 128], strides = [1, 1]} : vector<2x256xf32> to vector<2x128xf32>
    %355 = arith.negf %354 : vector<2x128xf32>
    %356 = math.exp %355 : vector<2x128xf32>
    %cst_86 = arith.constant 1.000000e+00 : f32
    %357 = vector.broadcast %cst_86 : f32 to vector<2x128xf32>
    %358 = arith.addf %357, %356 : vector<2x128xf32>
    %359 = arith.divf %357, %358 : vector<2x128xf32>
    %360 = vector.extract_strided_slice %353 {offsets = [0, 128], sizes = [2, 128], strides = [1, 1]} : vector<2x256xf32> to vector<2x128xf32>
    %361 = math.tanh %360 : vector<2x128xf32>
    %362 = arith.negf %360 : vector<2x128xf32>
    %363 = math.exp %362 : vector<2x128xf32>
    %cst_87 = arith.constant 1.000000e+00 : f32
    %364 = vector.broadcast %cst_87 : f32 to vector<2x128xf32>
    %365 = arith.addf %364, %363 : vector<2x128xf32>
    %366 = arith.divf %364, %365 : vector<2x128xf32>
    %367 = arith.select %2, %361, %366 : vector<2x128xi1>, vector<2x128xf32>
    %368 = vector.extract_strided_slice %359 {offsets = [0, 0], sizes = [2, 64], strides = [1, 1]} : vector<2x128xf32> to vector<2x64xf32>
    %369 = vector.extract_strided_slice %359 {offsets = [0, 64], sizes = [2, 64], strides = [1, 1]} : vector<2x128xf32> to vector<2x64xf32>
    %370 = vector.extract_strided_slice %367 {offsets = [0, 0], sizes = [2, 64], strides = [1, 1]} : vector<2x128xf32> to vector<2x64xf32>
    %371 = vector.extract_strided_slice %367 {offsets = [0, 64], sizes = [2, 64], strides = [1, 1]} : vector<2x128xf32> to vector<2x64xf32>
    %372 = arith.mulf %369, %346 : vector<2x64xf32>
    %373 = arith.mulf %368, %370 : vector<2x64xf32>
    %374 = arith.addf %372, %373 : vector<2x64xf32>
    %375 = math.tanh %374 : vector<2x64xf32>
    %376 = arith.mulf %371, %375 : vector<2x64xf32>
    %377 = vector.extract_strided_slice %260 {offsets = [0, 4, 0], sizes = [2, 1, 256], strides = [1, 1, 1]} : vector<2x8x256xf32> to vector<2x1x256xf32>
    %378 = vector.shape_cast %377 : vector<2x1x256xf32> to vector<2x256xf32>
    %c0_88 = arith.constant 0 : index
    %c0_89 = arith.constant 0 : index
    %379 = vector.load %arg7[%c0_88, %c0_89] : memref<64x256xf32, #tpu.memory_space<vmem>>, vector<64x256xf32>
    %cst_90 = arith.constant dense<0.000000e+00> : vector<2x256xf32>
    %380 = tpu.matmul %376, %379, %cst_90 {dimension_numbers = #tpu.dot_dimension_numbers<[1], [0], [0], [1], [0, 0, 1, 1], [], []>} : vector<2x64xf32>, vector<64x256xf32>, vector<2x256xf32> -> vector<2x256xf32>
    %381 = arith.addf %378, %380 : vector<2x256xf32>
    %382 = vector.extract_strided_slice %381 {offsets = [0, 0], sizes = [2, 128], strides = [1, 1]} : vector<2x256xf32> to vector<2x128xf32>
    %383 = arith.negf %382 : vector<2x128xf32>
    %384 = math.exp %383 : vector<2x128xf32>
    %cst_91 = arith.constant 1.000000e+00 : f32
    %385 = vector.broadcast %cst_91 : f32 to vector<2x128xf32>
    %386 = arith.addf %385, %384 : vector<2x128xf32>
    %387 = arith.divf %385, %386 : vector<2x128xf32>
    %388 = vector.extract_strided_slice %381 {offsets = [0, 128], sizes = [2, 128], strides = [1, 1]} : vector<2x256xf32> to vector<2x128xf32>
    %389 = math.tanh %388 : vector<2x128xf32>
    %390 = arith.negf %388 : vector<2x128xf32>
    %391 = math.exp %390 : vector<2x128xf32>
    %cst_92 = arith.constant 1.000000e+00 : f32
    %392 = vector.broadcast %cst_92 : f32 to vector<2x128xf32>
    %393 = arith.addf %392, %391 : vector<2x128xf32>
    %394 = arith.divf %392, %393 : vector<2x128xf32>
    %395 = arith.select %2, %389, %394 : vector<2x128xi1>, vector<2x128xf32>
    %396 = vector.extract_strided_slice %387 {offsets = [0, 0], sizes = [2, 64], strides = [1, 1]} : vector<2x128xf32> to vector<2x64xf32>
    %397 = vector.extract_strided_slice %387 {offsets = [0, 64], sizes = [2, 64], strides = [1, 1]} : vector<2x128xf32> to vector<2x64xf32>
    %398 = vector.extract_strided_slice %395 {offsets = [0, 0], sizes = [2, 64], strides = [1, 1]} : vector<2x128xf32> to vector<2x64xf32>
    %399 = vector.extract_strided_slice %395 {offsets = [0, 64], sizes = [2, 64], strides = [1, 1]} : vector<2x128xf32> to vector<2x64xf32>
    %400 = arith.mulf %397, %374 : vector<2x64xf32>
    %401 = arith.mulf %396, %398 : vector<2x64xf32>
    %402 = arith.addf %400, %401 : vector<2x64xf32>
    %403 = math.tanh %402 : vector<2x64xf32>
    %404 = arith.mulf %399, %403 : vector<2x64xf32>
    %405 = vector.extract_strided_slice %260 {offsets = [0, 5, 0], sizes = [2, 1, 256], strides = [1, 1, 1]} : vector<2x8x256xf32> to vector<2x1x256xf32>
    %406 = vector.shape_cast %405 : vector<2x1x256xf32> to vector<2x256xf32>
    %c0_93 = arith.constant 0 : index
    %c0_94 = arith.constant 0 : index
    %407 = vector.load %arg7[%c0_93, %c0_94] : memref<64x256xf32, #tpu.memory_space<vmem>>, vector<64x256xf32>
    %cst_95 = arith.constant dense<0.000000e+00> : vector<2x256xf32>
    %408 = tpu.matmul %404, %407, %cst_95 {dimension_numbers = #tpu.dot_dimension_numbers<[1], [0], [0], [1], [0, 0, 1, 1], [], []>} : vector<2x64xf32>, vector<64x256xf32>, vector<2x256xf32> -> vector<2x256xf32>
    %409 = arith.addf %406, %408 : vector<2x256xf32>
    %410 = vector.extract_strided_slice %409 {offsets = [0, 0], sizes = [2, 128], strides = [1, 1]} : vector<2x256xf32> to vector<2x128xf32>
    %411 = arith.negf %410 : vector<2x128xf32>
    %412 = math.exp %411 : vector<2x128xf32>
    %cst_96 = arith.constant 1.000000e+00 : f32
    %413 = vector.broadcast %cst_96 : f32 to vector<2x128xf32>
    %414 = arith.addf %413, %412 : vector<2x128xf32>
    %415 = arith.divf %413, %414 : vector<2x128xf32>
    %416 = vector.extract_strided_slice %409 {offsets = [0, 128], sizes = [2, 128], strides = [1, 1]} : vector<2x256xf32> to vector<2x128xf32>
    %417 = math.tanh %416 : vector<2x128xf32>
    %418 = arith.negf %416 : vector<2x128xf32>
    %419 = math.exp %418 : vector<2x128xf32>
    %cst_97 = arith.constant 1.000000e+00 : f32
    %420 = vector.broadcast %cst_97 : f32 to vector<2x128xf32>
    %421 = arith.addf %420, %419 : vector<2x128xf32>
    %422 = arith.divf %420, %421 : vector<2x128xf32>
    %423 = arith.select %2, %417, %422 : vector<2x128xi1>, vector<2x128xf32>
    %424 = vector.extract_strided_slice %415 {offsets = [0, 0], sizes = [2, 64], strides = [1, 1]} : vector<2x128xf32> to vector<2x64xf32>
    %425 = vector.extract_strided_slice %415 {offsets = [0, 64], sizes = [2, 64], strides = [1, 1]} : vector<2x128xf32> to vector<2x64xf32>
    %426 = vector.extract_strided_slice %423 {offsets = [0, 0], sizes = [2, 64], strides = [1, 1]} : vector<2x128xf32> to vector<2x64xf32>
    %427 = vector.extract_strided_slice %423 {offsets = [0, 64], sizes = [2, 64], strides = [1, 1]} : vector<2x128xf32> to vector<2x64xf32>
    %428 = arith.mulf %425, %402 : vector<2x64xf32>
    %429 = arith.mulf %424, %426 : vector<2x64xf32>
    %430 = arith.addf %428, %429 : vector<2x64xf32>
    %431 = math.tanh %430 : vector<2x64xf32>
    %432 = arith.mulf %427, %431 : vector<2x64xf32>
    %433 = vector.extract_strided_slice %260 {offsets = [0, 6, 0], sizes = [2, 1, 256], strides = [1, 1, 1]} : vector<2x8x256xf32> to vector<2x1x256xf32>
    %434 = vector.shape_cast %433 : vector<2x1x256xf32> to vector<2x256xf32>
    %c0_98 = arith.constant 0 : index
    %c0_99 = arith.constant 0 : index
    %435 = vector.load %arg7[%c0_98, %c0_99] : memref<64x256xf32, #tpu.memory_space<vmem>>, vector<64x256xf32>
    %cst_100 = arith.constant dense<0.000000e+00> : vector<2x256xf32>
    %436 = tpu.matmul %432, %435, %cst_100 {dimension_numbers = #tpu.dot_dimension_numbers<[1], [0], [0], [1], [0, 0, 1, 1], [], []>} : vector<2x64xf32>, vector<64x256xf32>, vector<2x256xf32> -> vector<2x256xf32>
    %437 = arith.addf %434, %436 : vector<2x256xf32>
    %438 = vector.extract_strided_slice %437 {offsets = [0, 0], sizes = [2, 128], strides = [1, 1]} : vector<2x256xf32> to vector<2x128xf32>
    %439 = arith.negf %438 : vector<2x128xf32>
    %440 = math.exp %439 : vector<2x128xf32>
    %cst_101 = arith.constant 1.000000e+00 : f32
    %441 = vector.broadcast %cst_101 : f32 to vector<2x128xf32>
    %442 = arith.addf %441, %440 : vector<2x128xf32>
    %443 = arith.divf %441, %442 : vector<2x128xf32>
    %444 = vector.extract_strided_slice %437 {offsets = [0, 128], sizes = [2, 128], strides = [1, 1]} : vector<2x256xf32> to vector<2x128xf32>
    %445 = math.tanh %444 : vector<2x128xf32>
    %446 = arith.negf %444 : vector<2x128xf32>
    %447 = math.exp %446 : vector<2x128xf32>
    %cst_102 = arith.constant 1.000000e+00 : f32
    %448 = vector.broadcast %cst_102 : f32 to vector<2x128xf32>
    %449 = arith.addf %448, %447 : vector<2x128xf32>
    %450 = arith.divf %448, %449 : vector<2x128xf32>
    %451 = arith.select %2, %445, %450 : vector<2x128xi1>, vector<2x128xf32>
    %452 = vector.extract_strided_slice %443 {offsets = [0, 0], sizes = [2, 64], strides = [1, 1]} : vector<2x128xf32> to vector<2x64xf32>
    %453 = vector.extract_strided_slice %443 {offsets = [0, 64], sizes = [2, 64], strides = [1, 1]} : vector<2x128xf32> to vector<2x64xf32>
    %454 = vector.extract_strided_slice %451 {offsets = [0, 0], sizes = [2, 64], strides = [1, 1]} : vector<2x128xf32> to vector<2x64xf32>
    %455 = vector.extract_strided_slice %451 {offsets = [0, 64], sizes = [2, 64], strides = [1, 1]} : vector<2x128xf32> to vector<2x64xf32>
    %456 = arith.mulf %453, %430 : vector<2x64xf32>
    %457 = arith.mulf %452, %454 : vector<2x64xf32>
    %458 = arith.addf %456, %457 : vector<2x64xf32>
    %459 = math.tanh %458 : vector<2x64xf32>
    %460 = arith.mulf %455, %459 : vector<2x64xf32>
    %461 = vector.extract_strided_slice %260 {offsets = [0, 7, 0], sizes = [2, 1, 256], strides = [1, 1, 1]} : vector<2x8x256xf32> to vector<2x1x256xf32>
    %462 = vector.shape_cast %461 : vector<2x1x256xf32> to vector<2x256xf32>
    %c0_103 = arith.constant 0 : index
    %c0_104 = arith.constant 0 : index
    %463 = vector.load %arg7[%c0_103, %c0_104] : memref<64x256xf32, #tpu.memory_space<vmem>>, vector<64x256xf32>
    %cst_105 = arith.constant dense<0.000000e+00> : vector<2x256xf32>
    %464 = tpu.matmul %460, %463, %cst_105 {dimension_numbers = #tpu.dot_dimension_numbers<[1], [0], [0], [1], [0, 0, 1, 1], [], []>} : vector<2x64xf32>, vector<64x256xf32>, vector<2x256xf32> -> vector<2x256xf32>
    %465 = arith.addf %462, %464 : vector<2x256xf32>
    %466 = vector.extract_strided_slice %465 {offsets = [0, 0], sizes = [2, 128], strides = [1, 1]} : vector<2x256xf32> to vector<2x128xf32>
    %467 = arith.negf %466 : vector<2x128xf32>
    %468 = math.exp %467 : vector<2x128xf32>
    %cst_106 = arith.constant 1.000000e+00 : f32
    %469 = vector.broadcast %cst_106 : f32 to vector<2x128xf32>
    %470 = arith.addf %469, %468 : vector<2x128xf32>
    %471 = arith.divf %469, %470 : vector<2x128xf32>
    %472 = vector.extract_strided_slice %465 {offsets = [0, 128], sizes = [2, 128], strides = [1, 1]} : vector<2x256xf32> to vector<2x128xf32>
    %473 = math.tanh %472 : vector<2x128xf32>
    %474 = arith.negf %472 : vector<2x128xf32>
    %475 = math.exp %474 : vector<2x128xf32>
    %cst_107 = arith.constant 1.000000e+00 : f32
    %476 = vector.broadcast %cst_107 : f32 to vector<2x128xf32>
    %477 = arith.addf %476, %475 : vector<2x128xf32>
    %478 = arith.divf %476, %477 : vector<2x128xf32>
    %479 = arith.select %2, %473, %478 : vector<2x128xi1>, vector<2x128xf32>
    %480 = vector.extract_strided_slice %471 {offsets = [0, 0], sizes = [2, 64], strides = [1, 1]} : vector<2x128xf32> to vector<2x64xf32>
    %481 = vector.extract_strided_slice %471 {offsets = [0, 64], sizes = [2, 64], strides = [1, 1]} : vector<2x128xf32> to vector<2x64xf32>
    %482 = vector.extract_strided_slice %479 {offsets = [0, 0], sizes = [2, 64], strides = [1, 1]} : vector<2x128xf32> to vector<2x64xf32>
    %483 = vector.extract_strided_slice %479 {offsets = [0, 64], sizes = [2, 64], strides = [1, 1]} : vector<2x128xf32> to vector<2x64xf32>
    %484 = arith.mulf %481, %458 : vector<2x64xf32>
    %485 = arith.mulf %480, %482 : vector<2x64xf32>
    %486 = arith.addf %484, %485 : vector<2x64xf32>
    %487 = math.tanh %486 : vector<2x64xf32>
    %488 = arith.mulf %483, %487 : vector<2x64xf32>
    %c1_108 = arith.constant 1 : index
    %c0_109 = arith.constant 0 : index
    %c0_110 = arith.constant 0 : index
    %489 = vector.load %arg15[%c1_108, %c0_109, %c0_110] : memref<2x2x64xf32, #tpu.memory_space<vmem>>, vector<1x2x64xf32>
    %490 = vector.shape_cast %489 : vector<1x2x64xf32> to vector<2x64xf32>
    %491 = vector.shape_cast %488 : vector<2x64xf32> to vector<1x2x64xf32>
    tpu.vector_store %arg15[%c1_108, %c0_109, %c0_110], %491 {strides = array<i32>} : memref<2x2x64xf32, #tpu.memory_space<vmem>>, vector<1x2x64xf32>,
    %c1_111 = arith.constant 1 : index
    %c0_112 = arith.constant 0 : index
    %c0_113 = arith.constant 0 : index
    %492 = vector.load %arg16[%c1_111, %c0_112, %c0_113] : memref<2x2x64xf32, #tpu.memory_space<vmem>>, vector<1x2x64xf32>
    %493 = vector.shape_cast %492 : vector<1x2x64xf32> to vector<2x64xf32>
    %494 = vector.shape_cast %486 : vector<2x64xf32> to vector<1x2x64xf32>
    tpu.vector_store %arg16[%c1_111, %c0_112, %c0_113], %494 {strides = array<i32>} : memref<2x2x64xf32, #tpu.memory_space<vmem>>, vector<1x2x64xf32>,
    %495 = vector.shape_cast %292 : vector<2x64xf32> to vector<2x1x64xf32>
    %496 = vector.shape_cast %320 : vector<2x64xf32> to vector<2x1x64xf32>
    %497 = vector.shape_cast %348 : vector<2x64xf32> to vector<2x1x64xf32>
    %498 = vector.shape_cast %376 : vector<2x64xf32> to vector<2x1x64xf32>
    %499 = vector.shape_cast %404 : vector<2x64xf32> to vector<2x1x64xf32>
    %500 = vector.shape_cast %432 : vector<2x64xf32> to vector<2x1x64xf32>
    %501 = vector.shape_cast %460 : vector<2x64xf32> to vector<2x1x64xf32>
    %502 = vector.shape_cast %488 : vector<2x64xf32> to vector<2x1x64xf32>
    %503 = tpu.concatenate %495, %496, %497, %498, %499, %500, %501, %502 in 1 : vector<2x1x64xf32>, vector<2x1x64xf32>, vector<2x1x64xf32>, vector<2x1x64xf32>, vector<2x1x64xf32>, vector<2x1x64xf32>, vector<2x1x64xf32>, vector<2x1x64xf32> -> vector<2x8x64xf32>
    %c0_114 = arith.constant 0 : index
    %c0_115 = arith.constant 0 : index
    %c0_116 = arith.constant 0 : index
    %504 = vector.load %arg13[%c0_114, %c0_115, %c0_116] : memref<2x8x64xf32, #tpu.memory_space<vmem>>, vector<2x8x64xf32>
    tpu.vector_store %arg13[%c0_114, %c0_115, %c0_116], %503 {strides = array<i32>} : memref<2x8x64xf32, #tpu.memory_space<vmem>>, vector<2x8x64xf32>,
    %505 = vector.shape_cast %503 : vector<2x8x64xf32> to vector<16x64xf32>
    %c0_117 = arith.constant 0 : index
    %c0_118 = arith.constant 0 : index
    %506 = vector.load %arg9[%c0_117, %c0_118] : memref<64x16xf32, #tpu.memory_space<vmem>>, vector<64x16xf32>
    %cst_119 = arith.constant dense<0.000000e+00> : vector<16x16xf32>
    %507 = tpu.matmul %505, %506, %cst_119 {dimension_numbers = #tpu.dot_dimension_numbers<[1], [0], [0], [1], [0, 0, 1, 1], [], []>} : vector<16x64xf32>, vector<64x16xf32>, vector<16x16xf32> -> vector<16x16xf32>
    %c0_120 = arith.constant 0 : index
    %c0_121 = arith.constant 0 : index
    %508 = vector.load %arg10[%c0_120, %c0_121] : memref<1x16xf32, #tpu.memory_space<vmem>>, vector<1x16xf32>
    %509 = vector.broadcast %508 : vector<1x16xf32> to vector<16x16xf32>
    %510 = arith.addf %507, %509 : vector<16x16xf32>
    %cst_122 = arith.constant 0.000000e+00 : f32
    %511 = vector.broadcast %cst_122 : f32 to vector<16x16xf32>
    %512 = arith.maximumf %510, %511 : vector<16x16xf32>
    %c0_123 = arith.constant 0 : index
    %c0_124 = arith.constant 0 : index
    %513 = vector.load %arg11[%c0_123, %c0_124] : memref<16x2xf32, #tpu.memory_space<vmem>>, vector<16x2xf32>
    %cst_125 = arith.constant dense<0.000000e+00> : vector<16x2xf32>
    %514 = tpu.matmul %512, %513, %cst_125 {dimension_numbers = #tpu.dot_dimension_numbers<[1], [0], [0], [1], [0, 0, 1, 1], [], []>} : vector<16x16xf32>, vector<16x2xf32>, vector<16x2xf32> -> vector<16x2xf32>
    %c0_126 = arith.constant 0 : index
    %c0_127 = arith.constant 0 : index
    %515 = vector.load %arg12[%c0_126, %c0_127] : memref<1x2xf32, #tpu.memory_space<vmem>>, vector<1x2xf32>
    %516 = vector.broadcast %515 : vector<1x2xf32> to vector<16x2xf32>
    %517 = arith.addf %514, %516 : vector<16x2xf32>
    %518 = vector.shape_cast %517 : vector<16x2xf32> to vector<2x8x2xf32>
    %c0_128 = arith.constant 0 : index
    %c0_129 = arith.constant 0 : index
    %c0_130 = arith.constant 0 : index
    %519 = vector.load %arg14[%c0_128, %c0_129, %c0_130] : memref<2x8x2xf32, #tpu.memory_space<vmem>>, vector<2x8x2xf32>
    tpu.vector_store %arg14[%c0_128, %c0_129, %c0_130], %518 {strides = array<i32>} : memref<2x8x2xf32, #tpu.memory_space<vmem>>, vector<2x8x2xf32>,
    return
  }
}

</mosaic_0001>

<llo_original>
// kernel: global_rnn_forward.1
$region0: #{global_rnn_forward.1}
  #allocation0 [shape = 'u32[]', space=smem, size = 0x4, offset = 0x4, fixed_abs, tag = 'smem constant byte address 0x4 - core index']
  #allocation1 [shape = 'u32[144,128]{1,0:T(1,128)}', space=vmem, size = 0x12000, scoped, tag = 'internal scratch']
  %s0 = inlined_call_operand.vmem [shape: f32[2,8,32], index: 0, kind: input, shape index: {}]
  %s1 = inlined_call_operand.vmem [shape: f32[2,2,64], index: 1, kind: input, shape index: {}]
  %s2 = inlined_call_operand.vmem [shape: f32[2,2,64], index: 2, kind: input, shape index: {}]
  %s3 = inlined_call_operand.vmem [shape: f32[32,256], index: 3, kind: input, shape index: {}]
  %s4 = inlined_call_operand.hbm [shape: f32[64,256], index: 4, kind: input, shape index: {}]
  %s5 = inlined_call_operand.vmem [shape: f32[1,256], index: 5, kind: input, shape index: {}]
  %s6 = inlined_call_operand.hbm [shape: f32[64,256], index: 6, kind: input, shape index: {}]
  %s7 = inlined_call_operand.hbm [shape: f32[64,256], index: 7, kind: input, shape index: {}]
  %s8 = inlined_call_operand.vmem [shape: f32[1,256], index: 8, kind: input, shape index: {}]
  %s9 = inlined_call_operand.vmem [shape: f32[64,16], index: 9, kind: input, shape index: {}]
  %s10 = inlined_call_operand.vmem [shape: f32[1,16], index: 10, kind: input, shape index: {}]
  %s11 = inlined_call_operand.vmem [shape: f32[16,2], index: 11, kind: input, shape index: {}]
  %s12 = inlined_call_operand.vmem [shape: f32[1,2], index: 12, kind: input, shape index: {}]
  %s13 = inlined_call_operand.hbm [shape: f32[2,8,64], index: 13, kind: output, shape index: {0}]
  %s14 = inlined_call_operand.vmem [shape: f32[2,8,2], index: 14, kind: output, shape index: {1}]
  %s15 = inlined_call_operand.hbm [shape: f32[2,2,64], index: 15, kind: output, shape index: {2}]
  %s16 = inlined_call_operand.hbm [shape: f32[2,2,64], index: 16, kind: output, shape index: {3}]
  %17 = xla_tuple %s13, %s14, %s15, %s16
  %s18 = sld [smem:[#allocation0]]
  $region98: #{global_rnn_forward.1} parent=0
    _
  %s20 = ssub.s32 1, %s18
  %s21 = scalar_select 0, %s20, %s18
  $region1: #{global_rnn_forward.1} parent=0
    #allocation2 [shape = 'u8[65536]{0}', space=vmem, size = 0x10000, scoped, tag = 'input window, operand 4, single buffered']
    #allocation3 [shape = 's32[1]{0}', space=sflag, size = 0x4, scoped, tag = 'scoped memory for global_rnn_forward.1']
    #allocation4 [shape = 's32[1]{0}', space=sflag, size = 0x4, scoped, tag = 'scoped memory for global_rnn_forward.1']
    #allocation5 [shape = 'u8[65536]{0}', space=vmem, size = 0x10000, scoped, tag = 'input window, operand 6, single buffered']
    #allocation6 [shape = 's32[1]{0}', space=sflag, size = 0x4, scoped, tag = 'scoped memory for global_rnn_forward.1']
    #allocation7 [shape = 'u8[65536]{0}', space=vmem, size = 0x10000, scoped, tag = 'input window, operand 7, single buffered']
    #allocation8 [shape = 'u8[8192]{0}', space=vmem, size = 0x2000, scoped, tag = 'output window, operand 0, single buffered']
    #allocation9 [shape = 'u8[2048]{0}', space=vmem, size = 0x800, scoped, tag = 'output window, operand 2, single buffered']
    #allocation10 [shape = 's32[1]{0}', space=sflag, size = 0x4, scoped, tag = 'scoped memory for global_rnn_forward.1']
    #allocation11 [shape = 'u8[2048]{0}', space=vmem, size = 0x800, scoped, tag = 'output window, operand 3, single buffered']
    %22 = vsyncpa [#allocation3], 0
    %23 = vsyncpa [#allocation6], 0
    %24 = vsyncpa [#allocation4], 0
    %25 = vsyncpa [#allocation10], 0
    // Predicated region
    $region2: #{global_rnn_forward.1} parent=1 // pred_check
      _
    $region3: #{global_rnn_forward.1} parent=1 // pred_check_branch
      %27 = sbr.rel (0) target = $region5
    $region4: #{global_rnn_forward.1} parent=1 // pred_region
      _
    $region5: #{global_rnn_forward.1} parent=1 // pred_fallthru
      _
    // Predicated region
    $region6: #{global_rnn_forward.1} parent=1 // pred_check
      _
    $region7: #{global_rnn_forward.1} parent=1 // pred_check_branch
      %29 = sbr.rel (0) target = $region9
    $region8: #{global_rnn_forward.1} parent=1 // pred_region
      _
    $region9: #{global_rnn_forward.1} parent=1 // pred_fallthru
      _
    // Predicated region
    $region10: #{global_rnn_forward.1} parent=1 // pred_check
      _
    $region11: #{global_rnn_forward.1} parent=1 // pred_check_branch
      %31 = sbr.rel (0) target = $region13
    $region12: #{global_rnn_forward.1} parent=1 // pred_region
      _
    $region13: #{global_rnn_forward.1} parent=1 // pred_fallthru
      _
    // Predicated region
    $region14: #{global_rnn_forward.1} parent=1 // pred_check
      _
    $region15: #{global_rnn_forward.1} parent=1 // pred_check_branch
      %33 = sbr.rel (0) target = $region17
    $region16: #{global_rnn_forward.1} parent=1 // pred_region
      _
    $region17: #{global_rnn_forward.1} parent=1 // pred_fallthru
      _
    // Predicated region
    $region18: #{global_rnn_forward.1} parent=1 // pred_check
      _
    $region19: #{global_rnn_forward.1} parent=1 // pred_check_branch
      %35 = sbr.rel (0) target = $region21
    $region20: #{global_rnn_forward.1} parent=1 // pred_region
      %s37 = ssub.s32 2048, 2048
      %38 = vsyncadd [#allocation3], %s37
      %s39 = sshll.u32 [#allocation2], 4
      %s40 = int_to_ptr.vmem [resolvable:$true] %s39
      %45 = dma.hbm_to_vmem [thread:$0]  %s4, 2048, %s40, [#allocation3], 256, 256, 16
    $region21: #{global_rnn_forward.1} parent=1 // pred_fallthru
      _
    // Predicated region
    $region22: #{global_rnn_forward.1} parent=1 // pred_check
      _
    $region23: #{global_rnn_forward.1} parent=1 // pred_check_branch
      %47 = sbr.rel (0) target = $region25
    $region24: #{global_rnn_forward.1} parent=1 // pred_region
      _
    $region25: #{global_rnn_forward.1} parent=1 // pred_fallthru
      _
    // Predicated region
    $region26: #{global_rnn_forward.1} parent=1 // pred_check
      _
    $region27: #{global_rnn_forward.1} parent=1 // pred_check_branch
      %49 = sbr.rel (0) target = $region29
    $region28: #{global_rnn_forward.1} parent=1 // pred_region
      %s51 = ssub.s32 2048, 2048
      %52 = vsyncadd [#allocation6], %s51
      %s53 = sshll.u32 [#allocation5], 4
      %s54 = int_to_ptr.vmem [resolvable:$true] %s53
      %59 = dma.hbm_to_vmem [thread:$0]  %s6, 2048, %s54, [#allocation6], 256, 256, 16
    $region29: #{global_rnn_forward.1} parent=1 // pred_fallthru
      _
    // Predicated region
    $region30: #{global_rnn_forward.1} parent=1 // pred_check
      _
    $region31: #{global_rnn_forward.1} parent=1 // pred_check_branch
      %61 = sbr.rel (0) target = $region33
    $region32: #{global_rnn_forward.1} parent=1 // pred_region
      %s63 = ssub.s32 2048, 2048
      %64 = vsyncadd [#allocation6], %s63
      %s65 = sshll.u32 [#allocation7], 4
      %s66 = int_to_ptr.vmem [resolvable:$true] %s65
      %71 = dma.hbm_to_vmem [thread:$0]  %s7, 2048, %s66, [#allocation6], 256, 256, 16
    $region33: #{global_rnn_forward.1} parent=1 // pred_fallthru
      _
    // Predicated region
    $region34: #{global_rnn_forward.1} parent=1 // pred_check
      _
    $region35: #{global_rnn_forward.1} parent=1 // pred_check_branch
      %73 = sbr.rel (0) target = $region37
    $region36: #{global_rnn_forward.1} parent=1 // pred_region
      _
    $region37: #{global_rnn_forward.1} parent=1 // pred_fallthru
      _
    // Predicated region
    $region38: #{global_rnn_forward.1} parent=1 // pred_check
      _
    $region39: #{global_rnn_forward.1} parent=1 // pred_check_branch
      %75 = sbr.rel (0) target = $region41
    $region40: #{global_rnn_forward.1} parent=1 // pred_region
      _
    $region41: #{global_rnn_forward.1} parent=1 // pred_fallthru
      _
    // Predicated region
    $region42: #{global_rnn_forward.1} parent=1 // pred_check
      _
    $region43: #{global_rnn_forward.1} parent=1 // pred_check_branch
      %77 = sbr.rel (0) target = $region45
    $region44: #{global_rnn_forward.1} parent=1 // pred_region
      _
    $region45: #{global_rnn_forward.1} parent=1 // pred_fallthru
      _
    // Predicated region
    $region46: #{global_rnn_forward.1} parent=1 // pred_check
      _
    $region47: #{global_rnn_forward.1} parent=1 // pred_check_branch
      %79 = sbr.rel (0) target = $region49
    $region48: #{global_rnn_forward.1} parent=1 // pred_region
      _
    $region49: #{global_rnn_forward.1} parent=1 // pred_fallthru
      _
    // Predicated region
    $region50: #{global_rnn_forward.1} parent=1 // pred_check
      _
    $region51: #{global_rnn_forward.1} parent=1 // pred_check_branch
      %81 = sbr.rel (0) target = $region53
    $region52: #{global_rnn_forward.1} parent=1 // pred_region
      _
    $region53: #{global_rnn_forward.1} parent=1 // pred_fallthru
      _
    // Predicated region
    $region54: #{global_rnn_forward.1} parent=1 // pred_check
      _
    $region55: #{global_rnn_forward.1} parent=1 // pred_check_branch
      %83 = sbr.rel (0) target = $region57
    $region56: #{global_rnn_forward.1} parent=1 // pred_region
      %84 = dma.done [#allocation3], 2048
    $region57: #{global_rnn_forward.1} parent=1 // pred_fallthru
      _
    // Predicated region
    $region58: #{global_rnn_forward.1} parent=1 // pred_check
      _
    $region59: #{global_rnn_forward.1} parent=1 // pred_check_branch
      %86 = sbr.rel (0) target = $region61
    $region60: #{global_rnn_forward.1} parent=1 // pred_region
      %87 = dma.done [#allocation6], 2048
    $region61: #{global_rnn_forward.1} parent=1 // pred_fallthru
      _
    // Predicated region
    $region62: #{global_rnn_forward.1} parent=1 // pred_check
      _
    $region63: #{global_rnn_forward.1} parent=1 // pred_check_branch
      %89 = sbr.rel (0) target = $region65
    $region64: #{global_rnn_forward.1} parent=1 // pred_region
      %90 = dma.done [#allocation6], 2048
    $region65: #{global_rnn_forward.1} parent=1 // pred_fallthru
      _
    %v91 = vlaneseq
    %v92 = vand.u32 %v91, 127
    %vm93 = vcmp.lt.s32.totalorder %v92, 64
    %v94 = vld [vmem:[%s0] sm:$0xff]
    %v95 = vld [vmem:[%s0 + $0x8] sm:$0xff]
    %v96 = vld [vmem:[%s3] sm:$0xff]
    %v97 = vld [vmem:[%s3 + $0x8] sm:$0xff]
    %v98 = vld [vmem:[%s3 + $0x10] sm:$0xff]
    %v99 = vld [vmem:[%s3 + $0x18] sm:$0xff]
    %v100 = vld [vmem:[%s3 + $0x20] sm:$0xff]
    %v101 = vld [vmem:[%s3 + $0x28] sm:$0xff]
    %v102 = vld [vmem:[%s3 + $0x30] sm:$0xff]
    %v103 = vld [vmem:[%s3 + $0x38] sm:$0xff]
    %v104 = vld [vmem:[%s5] sm:$0x3]
    %v106 = vlaneseq
    %v107 = vshrl.u32 %v106, 7
    %v108 = vsub.s32 0, %v107
    %v109 = vrot.slane %v104, %v108
    %v110 = vlaneseq
    %v111 = vshrl.u32 %v110, 7
    %v112 = vsub.s32 1, %v111
    %v113 = vrot.slane %v104, %v112
    %vm116 = vcmask 261120
    %v118 = vsel %vm116, %v94, 0
    %v121 = vsel %vm116, %v95, 0
    %123 = vmatprep.subr.mxu0 %v97
    %124 = vmatpush1.msra.mxu0 %v96
    %125 = vmatprep.subr.mxu0 %v99
    %126 = vmatpush1.msra.mxu0 %v98
    %127 = vmatprep.subr.mxu0 %v101
    %128 = vmatpush1.msra.mxu0 %v100
    %129 = vmatprep.subr.mxu0 %v103
    %130 = vmatpush1.msra.mxu0 %v102
    %131 = vmatprep.subr.mxu0 0.0
    %132 = vmatpush1.msra.mxu0 0.0
    %133 = vmatprep.subr.mxu0 0.0
    %134 = vmatpush1.msra.mxu0 0.0
    %135 = vmatprep.subr.mxu0 0.0
    %136 = vmatpush1.msra.mxu0 0.0
    %137 = vmatprep.subr.mxu0 0.0
    %138 = vmatpush1.msra.mxu0 0.0
    %139 = vmatprep.subr.mxu0 0.0
    %140 = vmatpush1.msra.mxu0 0.0
    %141 = vmatprep.subr.mxu0 0.0
    %142 = vmatpush1.msra.mxu0 0.0
    %143 = vmatprep.subr.mxu0 0.0
    %144 = vmatpush1.msra.mxu0 0.0
    %145 = vmatprep.subr.mxu0 0.0
    %146 = vmatpush1.msra.mxu0 0.0
    %147 = vmatprep.subr.mxu0 0.0
    %148 = vmatpush1.msra.mxu0 0.0
    %149 = vmatprep.subr.mxu0 0.0
    %150 = vmatpush1.msra.mxu0 0.0
    %151 = vmatprep.subr.mxu0 0.0
    %152 = vmatpush1.msra.mxu0 0.0
    %153 = vmatprep.subr.mxu0 0.0
    %154 = vmatpush1.msra.mxu0 0.0
    %155 = vmatprep.subr.mxu0 0.0
    %156 = vmatpush1.msra.mxu0 0.0
    %157 = vmatprep.subr.mxu0 0.0
    %158 = vmatpush1.msra.mxu0 0.0
    %159 = vmatprep.subr.mxu0 0.0
    %160 = vmatpush1.msra.mxu0 0.0
    %161 = vmatprep.subr.mxu0 0.0
    %162 = vmatpush1.msra.mxu0 0.0
    %163 = vmatprep.subr.mxu0 0.0
    %164 = vmatpush1.msra.mxu0 0.0
    %165 = vmatprep.subr.mxu0 0.0
    %166 = vmatpush1.msra.mxu0 0.0
    %167 = vmatprep.subr.mxu0 0.0
    %168 = vmatpush1.msra.mxu0 0.0
    %169 = vmatprep.subr.mxu0 0.0
    %170 = vmatpush1.msra.mxu0 0.0
    %171 = vmatprep.subr.mxu0 0.0
    %172 = vmatpush1.msra.mxu0 0.0
    %173 = vmatprep.subr.mxu0 0.0
    %174 = vmatpush1.msra.mxu0 0.0
    %175 = vmatprep.subr.mxu0 0.0
    %176 = vmatpush1.msra.mxu0 0.0
    %177 = vmatprep.subr.mxu0 0.0
    %178 = vmatpush1.msra.mxu0 0.0
    %179 = vmatprep.subr.mxu0 0.0
    %180 = vmatpush1.msra.mxu0 0.0
    %181 = vmatprep.subr.mxu0 0.0
    %182 = vmatpush1.msra.mxu0 0.0
    %183 = vmatprep.subr.mxu0 0.0
    %184 = vmatpush1.msra.mxu0 0.0
    %185 = vmatprep.subr.mxu0 0.0
    %186 = vmatpush1.msra.mxu0 0.0
    %187 = vmatprep.mubr.f32.mxu0 0.0
    %188 = vmatmul.mubr.f32.gmra.mrb[0].mxu0 %v118
    %v189 = vpop.f32.mrb[0].mxu0
    %v190 = vadd.f32 %v109, %v189
    %v191 = vpop.f32.mrb[0].mxu0
    %v192 = vadd.f32 %v113, %v191
    %193 = vmatprep.mubr.f32.mxu0 0.0
    %194 = vmatmul.mubr.f32.gmra.mrb[0].mxu0 %v121
    %v195 = vpop.f32.mrb[0].mxu0
    %v196 = vadd.f32 %v109, %v195
    %v197 = vpop.f32.mrb[0].mxu0
    %v198 = vadd.f32 %v113, %v197
    %199 = vdwg.mxu0
    %v200 = vld [vmem:[%s1] sm:$0x3]
    %v201 = vld [vmem:[%s2] sm:$0x3]
    %v202 = vld [vmem:[#allocation2] sm:$0xff]
    %v203 = vld [vmem:[#allocation2 + $0x8] sm:$0xff]
    %v204 = vld [vmem:[#allocation2 + $0x10] sm:$0xff]
    %v205 = vld [vmem:[#allocation2 + $0x18] sm:$0xff]
    %v206 = vld [vmem:[#allocation2 + $0x20] sm:$0xff]
    %v207 = vld [vmem:[#allocation2 + $0x28] sm:$0xff]
    %v208 = vld [vmem:[#allocation2 + $0x30] sm:$0xff]
    %v209 = vld [vmem:[#allocation2 + $0x38] sm:$0xff]
    %v210 = vld [vmem:[#allocation2 + $0x40] sm:$0xff]
    %v211 = vld [vmem:[#allocation2 + $0x48] sm:$0xff]
    %v212 = vld [vmem:[#allocation2 + $0x50] sm:$0xff]
    %v213 = vld [vmem:[#allocation2 + $0x58] sm:$0xff]
    %v214 = vld [vmem:[#allocation2 + $0x60] sm:$0xff]
    %v215 = vld [vmem:[#allocation2 + $0x68] sm:$0xff]
    %v216 = vld [vmem:[#allocation2 + $0x70] sm:$0xff]
    %v217 = vld [vmem:[#allocation2 + $0x78] sm:$0xff]
    %vm218 = vcmask 523264
    %v220 = vsel %vm218, %v200, 0
    %222 = vmatprep.subr.mxu0 %v203
    %223 = vmatpush1.msra.mxu0 %v202
    %224 = vmatprep.subr.mxu0 %v205
    %225 = vmatpush1.msra.mxu0 %v204
    %226 = vmatprep.subr.mxu0 %v207
    %227 = vmatpush1.msra.mxu0 %v206
    %228 = vmatprep.subr.mxu0 %v209
    %229 = vmatpush1.msra.mxu0 %v208
    %230 = vmatprep.subr.mxu0 %v211
    %231 = vmatpush1.msra.mxu0 %v210
    %232 = vmatprep.subr.mxu0 %v213
    %233 = vmatpush1.msra.mxu0 %v212
    %234 = vmatprep.subr.mxu0 %v215
    %235 = vmatpush1.msra.mxu0 %v214
    %236 = vmatprep.subr.mxu0 %v217
    %237 = vmatpush1.msra.mxu0 %v216
    %238 = vmatprep.subr.mxu0 0.0
    %239 = vmatpush1.msra.mxu0 0.0
    %240 = vmatprep.subr.mxu0 0.0
    %241 = vmatpush1.msra.mxu0 0.0
    %242 = vmatprep.subr.mxu0 0.0
    %243 = vmatpush1.msra.mxu0 0.0
    %244 = vmatprep.subr.mxu0 0.0
    %245 = vmatpush1.msra.mxu0 0.0
    %246 = vmatprep.subr.mxu0 0.0
    %247 = vmatpush1.msra.mxu0 0.0
    %248 = vmatprep.subr.mxu0 0.0
    %249 = vmatpush1.msra.mxu0 0.0
    %250 = vmatprep.subr.mxu0 0.0
    %251 = vmatpush1.msra.mxu0 0.0
    %252 = vmatprep.subr.mxu0 0.0
    %253 = vmatpush1.msra.mxu0 0.0
    %254 = vmatprep.subr.mxu0 0.0
    %255 = vmatpush1.msra.mxu0 0.0
    %256 = vmatprep.subr.mxu0 0.0
    %257 = vmatpush1.msra.mxu0 0.0
    %258 = vmatprep.subr.mxu0 0.0
    %259 = vmatpush1.msra.mxu0 0.0
    %260 = vmatprep.subr.mxu0 0.0
    %261 = vmatpush1.msra.mxu0 0.0
    %262 = vmatprep.subr.mxu0 0.0
    %263 = vmatpush1.msra.mxu0 0.0
    %264 = vmatprep.subr.mxu0 0.0
    %265 = vmatpush1.msra.mxu0 0.0
    %266 = vmatprep.subr.mxu0 0.0
    %267 = vmatpush1.msra.mxu0 0.0
    %268 = vmatprep.subr.mxu0 0.0
    %269 = vmatpush1.msra.mxu0 0.0
    %270 = vmatprep.subr.mxu0 0.0
    %271 = vmatpush1.msra.mxu0 0.0
    %272 = vmatprep.subr.mxu0 0.0
    %273 = vmatpush1.msra.mxu0 0.0
    %274 = vmatprep.subr.mxu0 0.0
    %275 = vmatpush1.msra.mxu0 0.0
    %276 = vmatprep.subr.mxu0 0.0
    %277 = vmatpush1.msra.mxu0 0.0
    %278 = vmatprep.subr.mxu0 0.0
    %279 = vmatpush1.msra.mxu0 0.0
    %280 = vmatprep.subr.mxu0 0.0
    %281 = vmatpush1.msra.mxu0 0.0
    %282 = vmatprep.subr.mxu0 0.0
    %283 = vmatpush1.msra.mxu0 0.0
    %284 = vmatprep.subr.mxu0 0.0
    %285 = vmatpush1.msra.mxu0 0.0
    %286 = vmatprep.mubr.f32.mxu0 0.0
    %287 = vmatmul.mubr.f32.gmra.mrb[0].mxu0 %v220
    %v288 = vpop.f32.mrb[0].mxu0
    %v289 = vadd.f32 0.0, %v288
    %v290 = vpop.f32.mrb[0].mxu0
    %v291 = vadd.f32 0.0, %v290
    %292 = vdwg.mxu0
    %v295 = vrot.slane %v289, 1
    %v296 = vrot.slane %v291, 1
    %v301 = vadd.f32 %v190, %v289
    %v302 = vadd.f32 %v192, %v291
    %v303 = vadd.f32 %v196, %v295
    %v304 = vadd.f32 %v198, %v296
    %v305 = vxor.u32 %v301, 2147483648
    %v306 = vxor.u32 %v303, 2147483648
    %v307 = vmul.f32 %v305, 1.442695
    %v308 = vpow.pop %v307
    %v309 = vmul.f32 %v306, 1.442695
    %v310 = vpow.pop %v309
    %v311 = vadd.f32 %v308, 1.0
    %v312 = vadd.f32 %v310, 1.0
    %v313 = vrcp.pop %v311
    %v314 = vmul.f32 1.0, %v313
    %v315 = vrcp.pop %v312
    %v316 = vmul.f32 1.0, %v315
    %v317 = vtanh.pop %v302
    %v318 = vtanh.pop %v304
    %v319 = vxor.u32 %v302, 2147483648
    %v320 = vxor.u32 %v304, 2147483648
    %v321 = vmul.f32 %v319, 1.442695
    %v322 = vpow.pop %v321
    %v323 = vmul.f32 %v320, 1.442695
    %v324 = vpow.pop %v323
    %v325 = vadd.f32 %v322, 1.0
    %v326 = vadd.f32 %v324, 1.0
    %v327 = vrcp.pop %v325
    %v328 = vmul.f32 1.0, %v327
    %v329 = vrcp.pop %v326
    %v330 = vmul.f32 1.0, %v329
    %v333 = vrot.slane %v318, 7
    %vm334 = vcmask 1041409
    %v335 = vsel %vm334, %v333, %v317
    %v339 = vrot.slane %v330, 7
    %v340 = vsel %vm334, %v339, %v328
    %v342 = vsel %vm93, %v335, %v340
    %v344 = vrot.slane %v201, 1
    %345 = vrot.lane.b32.xlu0 %v201, 64
    %v346 = vpop.permute.xlu0 %345
    %347 = vrot.lane.b32.xlu0 %v344, 64
    %v348 = vpop.permute.xlu0 %347
    %v351 = vmul.f32 %v314, %v346
    %v352 = vmul.f32 %v316, %v348
    %v354 = vrot.slane %v342, 1
    %v357 = vmul.f32 %v314, %v342
    %v358 = vmul.f32 %v316, %v354
    %361 = vrot.lane.b32.xlu0 %v357, 64
    %v362 = vpop.permute.xlu0 %361
    %363 = vrot.lane.b32.xlu0 %v358, 64
    %v364 = vpop.permute.xlu0 %363
    %v367 = vadd.f32 %v351, %v362
    %v368 = vadd.f32 %v352, %v364
    %v369 = vtanh.pop %v367
    %v370 = vtanh.pop %v368
    %v373 = vrot.slane %v370, 7
    %v374 = vsel %vm334, %v373, %v369
    %v376 = vmul.f32 %v342, %v374
    %378 = vrot.lane.b32.xlu0 %v376, 64
    %v379 = vpop.permute.xlu0 %378
    %v380 = vsel %vm218, %v379, 0
    %382 = vmatprep.subr.mxu0 %v203
    %383 = vmatpush1.msra.mxu0 %v202
    %384 = vmatprep.subr.mxu0 %v205
    %385 = vmatpush1.msra.mxu0 %v204
    %386 = vmatprep.subr.mxu0 %v207
    %387 = vmatpush1.msra.mxu0 %v206
    %388 = vmatprep.subr.mxu0 %v209
    %389 = vmatpush1.msra.mxu0 %v208
    %390 = vmatprep.subr.mxu0 %v211
    %391 = vmatpush1.msra.mxu0 %v210
    %392 = vmatprep.subr.mxu0 %v213
    %393 = vmatpush1.msra.mxu0 %v212
    %394 = vmatprep.subr.mxu0 %v215
    %395 = vmatpush1.msra.mxu0 %v214
    %396 = vmatprep.subr.mxu0 %v217
    %397 = vmatpush1.msra.mxu0 %v216
    %398 = vmatprep.subr.mxu0 0.0
    %399 = vmatpush1.msra.mxu0 0.0
    %400 = vmatprep.subr.mxu0 0.0
    %401 = vmatpush1.msra.mxu0 0.0
    %402 = vmatprep.subr.mxu0 0.0
    %403 = vmatpush1.msra.mxu0 0.0
    %404 = vmatprep.subr.mxu0 0.0
    %405 = vmatpush1.msra.mxu0 0.0
    %406 = vmatprep.subr.mxu0 0.0
    %407 = vmatpush1.msra.mxu0 0.0
    %408 = vmatprep.subr.mxu0 0.0
    %409 = vmatpush1.msra.mxu0 0.0
    %410 = vmatprep.subr.mxu0 0.0
    %411 = vmatpush1.msra.mxu0 0.0
    %412 = vmatprep.subr.mxu0 0.0
    %413 = vmatpush1.msra.mxu0 0.0
    %414 = vmatprep.subr.mxu0 0.0
    %415 = vmatpush1.msra.mxu0 0.0
    %416 = vmatprep.subr.mxu0 0.0
    %417 = vmatpush1.msra.mxu0 0.0
    %418 = vmatprep.subr.mxu0 0.0
    %419 = vmatpush1.msra.mxu0 0.0
    %420 = vmatprep.subr.mxu0 0.0
    %421 = vmatpush1.msra.mxu0 0.0
    %422 = vmatprep.subr.mxu0 0.0
    %423 = vmatpush1.msra.mxu0 0.0
    %424 = vmatprep.subr.mxu0 0.0
    %425 = vmatpush1.msra.mxu0 0.0
    %426 = vmatprep.subr.mxu0 0.0
    %427 = vmatpush1.msra.mxu0 0.0
    %428 = vmatprep.subr.mxu0 0.0
    %429 = vmatpush1.msra.mxu0 0.0
    %430 = vmatprep.subr.mxu0 0.0
    %431 = vmatpush1.msra.mxu0 0.0
    %432 = vmatprep.subr.mxu0 0.0
    %433 = vmatpush1.msra.mxu0 0.0
    %434 = vmatprep.subr.mxu0 0.0
    %435 = vmatpush1.msra.mxu0 0.0
    %436 = vmatprep.subr.mxu0 0.0
    %437 = vmatpush1.msra.mxu0 0.0
    %438 = vmatprep.subr.mxu0 0.0
    %439 = vmatpush1.msra.mxu0 0.0
    %440 = vmatprep.subr.mxu0 0.0
    %441 = vmatpush1.msra.mxu0 0.0
    %442 = vmatprep.subr.mxu0 0.0
    %443 = vmatpush1.msra.mxu0 0.0
    %444 = vmatprep.subr.mxu0 0.0
    %445 = vmatpush1.msra.mxu0 0.0
    %446 = vmatprep.mubr.f32.mxu0 0.0
    %447 = vmatmul.mubr.f32.gmra.mrb[0].mxu0 %v380
    %v448 = vpop.f32.mrb[0].mxu0
    %v449 = vadd.f32 0.0, %v448
    %v450 = vpop.f32.mrb[0].mxu0
    %v451 = vadd.f32 0.0, %v450
    %452 = vdwg.mxu0
    %v455 = vrot.slane %v449, 7
    %v456 = vrot.slane %v451, 7
    %v461 = vadd.f32 %v190, %v455
    %v462 = vadd.f32 %v192, %v456
    %v463 = vadd.f32 %v196, %v449
    %v464 = vadd.f32 %v198, %v451
    %v465 = vxor.u32 %v461, 2147483648
    %v466 = vxor.u32 %v463, 2147483648
    %v467 = vmul.f32 %v465, 1.442695
    %v468 = vpow.pop %v467
    %v469 = vmul.f32 %v466, 1.442695
    %v470 = vpow.pop %v469
    %v471 = vadd.f32 %v468, 1.0
    %v472 = vadd.f32 %v470, 1.0
    %v473 = vrcp.pop %v471
    %v474 = vmul.f32 1.0, %v473
    %v475 = vrcp.pop %v472
    %v476 = vmul.f32 1.0, %v475
    %v477 = vtanh.pop %v462
    %v478 = vtanh.pop %v464
    %v479 = vxor.u32 %v462, 2147483648
    %v480 = vxor.u32 %v464, 2147483648
    %v481 = vmul.f32 %v479, 1.442695
    %v482 = vpow.pop %v481
    %v483 = vmul.f32 %v480, 1.442695
    %v484 = vpow.pop %v483
    %v485 = vadd.f32 %v482, 1.0
    %v486 = vadd.f32 %v484, 1.0
    %v487 = vrcp.pop %v485
    %v488 = vmul.f32 1.0, %v487
    %v489 = vrcp.pop %v486
    %v490 = vmul.f32 1.0, %v489
    %v493 = vrot.slane %v477, 1
    %v494 = vsel %vm334, %v478, %v493
    %v498 = vrot.slane %v488, 1
    %v499 = vsel %vm334, %v490, %v498
    %v501 = vsel %vm93, %v494, %v499
    %v504 = vrot.slane %v367, 7
    %v505 = vrot.slane %v368, 7
    %v508 = vmul.f32 %v474, %v504
    %v509 = vmul.f32 %v476, %v505
    %v511 = vrot.slane %v501, 7
    %v514 = vmul.f32 %v474, %v511
    %v515 = vmul.f32 %v476, %v501
    %518 = vrot.lane.b32.xlu0 %v514, 64
    %v519 = vpop.permute.xlu0 %518
    %520 = vrot.lane.b32.xlu0 %v515, 64
    %v521 = vpop.permute.xlu0 %520
    %v524 = vadd.f32 %v508, %v519
    %v525 = vadd.f32 %v509, %v521
    %v526 = vtanh.pop %v524
    %v527 = vtanh.pop %v525
    %v530 = vrot.slane %v526, 1
    %v531 = vsel %vm334, %v527, %v530
    %v533 = vmul.f32 %v501, %v531
    %535 = vrot.lane.b32.xlu0 %v533, 64
    %v536 = vpop.permute.xlu0 %535
    %v537 = vsel %vm218, %v536, 0
    %539 = vmatprep.subr.mxu0 %v203
    %540 = vmatpush1.msra.mxu0 %v202
    %541 = vmatprep.subr.mxu0 %v205
    %542 = vmatpush1.msra.mxu0 %v204
    %543 = vmatprep.subr.mxu0 %v207
    %544 = vmatpush1.msra.mxu0 %v206
    %545 = vmatprep.subr.mxu0 %v209
    %546 = vmatpush1.msra.mxu0 %v208
    %547 = vmatprep.subr.mxu0 %v211
    %548 = vmatpush1.msra.mxu0 %v210
    %549 = vmatprep.subr.mxu0 %v213
    %550 = vmatpush1.msra.mxu0 %v212
    %551 = vmatprep.subr.mxu0 %v215
    %552 = vmatpush1.msra.mxu0 %v214
    %553 = vmatprep.subr.mxu0 %v217
    %554 = vmatpush1.msra.mxu0 %v216
    %555 = vmatprep.subr.mxu0 0.0
    %556 = vmatpush1.msra.mxu0 0.0
    %557 = vmatprep.subr.mxu0 0.0
    %558 = vmatpush1.msra.mxu0 0.0
    %559 = vmatprep.subr.mxu0 0.0
    %560 = vmatpush1.msra.mxu0 0.0
    %561 = vmatprep.subr.mxu0 0.0
    %562 = vmatpush1.msra.mxu0 0.0
    %563 = vmatprep.subr.mxu0 0.0
    %564 = vmatpush1.msra.mxu0 0.0
    %565 = vmatprep.subr.mxu0 0.0
    %566 = vmatpush1.msra.mxu0 0.0
    %567 = vmatprep.subr.mxu0 0.0
    %568 = vmatpush1.msra.mxu0 0.0
    %569 = vmatprep.subr.mxu0 0.0
    %570 = vmatpush1.msra.mxu0 0.0
    %571 = vmatprep.subr.mxu0 0.0
    %572 = vmatpush1.msra.mxu0 0.0
    %573 = vmatprep.subr.mxu0 0.0
    %574 = vmatpush1.msra.mxu0 0.0
    %575 = vmatprep.subr.mxu0 0.0
    %576 = vmatpush1.msra.mxu0 0.0
    %577 = vmatprep.subr.mxu0 0.0
    %578 = vmatpush1.msra.mxu0 0.0
    %579 = vmatprep.subr.mxu0 0.0
    %580 = vmatpush1.msra.mxu0 0.0
    %581 = vmatprep.subr.mxu0 0.0
    %582 = vmatpush1.msra.mxu0 0.0
    %583 = vmatprep.subr.mxu0 0.0
    %584 = vmatpush1.msra.mxu0 0.0
    %585 = vmatprep.subr.mxu0 0.0
    %586 = vmatpush1.msra.mxu0 0.0
    %587 = vmatprep.subr.mxu0 0.0
    %588 = vmatpush1.msra.mxu0 0.0
    %589 = vmatprep.subr.mxu0 0.0
    %590 = vmatpush1.msra.mxu0 0.0
    %591 = vmatprep.subr.mxu0 0.0
    %592 = vmatpush1.msra.mxu0 0.0
    %593 = vmatprep.subr.mxu0 0.0
    %594 = vmatpush1.msra.mxu0 0.0
    %595 = vmatprep.subr.mxu0 0.0
    %596 = vmatpush1.msra.mxu0 0.0
    %597 = vmatprep.subr.mxu0 0.0
    %598 = vmatpush1.msra.mxu0 0.0
    %599 = vmatprep.subr.mxu0 0.0
    %600 = vmatpush1.msra.mxu0 0.0
    %601 = vmatprep.subr.mxu0 0.0
    %602 = vmatpush1.msra.mxu0 0.0
    %603 = vmatprep.mubr.f32.mxu0 0.0
    %604 = vmatmul.mubr.f32.gmra.mrb[0].mxu0 %v537
    %v605 = vpop.f32.mrb[0].mxu0
    %v606 = vadd.f32 0.0, %v605
    %v607 = vpop.f32.mrb[0].mxu0
    %v608 = vadd.f32 0.0, %v607
    %609 = vdwg.mxu0
    %v612 = vrot.slane %v606, 6
    %v613 = vrot.slane %v608, 6
    %v614 = vrot.slane %v606, 7
    %v615 = vrot.slane %v608, 7
    %v620 = vadd.f32 %v190, %v612
    %v621 = vadd.f32 %v192, %v613
    %v622 = vadd.f32 %v196, %v614
    %v623 = vadd.f32 %v198, %v615
    %v624 = vxor.u32 %v620, 2147483648
    %v625 = vxor.u32 %v622, 2147483648
    %v626 = vmul.f32 %v624, 1.442695
    %v627 = vpow.pop %v626
    %v628 = vmul.f32 %v625, 1.442695
    %v629 = vpow.pop %v628
    %v630 = vadd.f32 %v627, 1.0
    %v631 = vadd.f32 %v629, 1.0
    %v632 = vrcp.pop %v630
    %v633 = vmul.f32 1.0, %v632
    %v634 = vrcp.pop %v631
    %v635 = vmul.f32 1.0, %v634
    %v636 = vtanh.pop %v621
    %v637 = vtanh.pop %v623
    %v638 = vxor.u32 %v621, 2147483648
    %v639 = vxor.u32 %v623, 2147483648
    %v640 = vmul.f32 %v638, 1.442695
    %v641 = vpow.pop %v640
    %v642 = vmul.f32 %v639, 1.442695
    %v643 = vpow.pop %v642
    %v644 = vadd.f32 %v641, 1.0
    %v645 = vadd.f32 %v643, 1.0
    %v646 = vrcp.pop %v644
    %v647 = vmul.f32 1.0, %v646
    %v648 = vrcp.pop %v645
    %v649 = vmul.f32 1.0, %v648
    %v652 = vrot.slane %v636, 2
    %v653 = vrot.slane %v637, 1
    %v654 = vsel %vm334, %v653, %v652
    %v658 = vrot.slane %v647, 2
    %v659 = vrot.slane %v649, 1
    %v660 = vsel %vm334, %v659, %v658
    %v662 = vsel %vm93, %v654, %v660
    %v665 = vrot.slane %v524, 7
    %v666 = vrot.slane %v525, 7
    %v669 = vmul.f32 %v633, %v665
    %v670 = vmul.f32 %v635, %v666
    %v672 = vrot.slane %v662, 6
    %v673 = vrot.slane %v662, 7
    %v676 = vmul.f32 %v633, %v672
    %v677 = vmul.f32 %v635, %v673
    %680 = vrot.lane.b32.xlu0 %v676, 64
    %v681 = vpop.permute.xlu0 %680
    %682 = vrot.lane.b32.xlu0 %v677, 64
    %v683 = vpop.permute.xlu0 %682
    %v686 = vadd.f32 %v669, %v681
    %v687 = vadd.f32 %v670, %v683
    %v688 = vtanh.pop %v686
    %v689 = vtanh.pop %v687
    %v692 = vrot.slane %v688, 2
    %v693 = vrot.slane %v689, 1
    %v694 = vsel %vm334, %v693, %v692
    %v696 = vmul.f32 %v662, %v694
    %698 = vrot.lane.b32.xlu0 %v696, 64
    %v699 = vpop.permute.xlu0 %698
    %v700 = vsel %vm218, %v699, 0
    %702 = vmatprep.subr.mxu0 %v203
    %703 = vmatpush1.msra.mxu0 %v202
    %704 = vmatprep.subr.mxu0 %v205
    %705 = vmatpush1.msra.mxu0 %v204
    %706 = vmatprep.subr.mxu0 %v207
    %707 = vmatpush1.msra.mxu0 %v206
    %708 = vmatprep.subr.mxu0 %v209
    %709 = vmatpush1.msra.mxu0 %v208
    %710 = vmatprep.subr.mxu0 %v211
    %711 = vmatpush1.msra.mxu0 %v210
    %712 = vmatprep.subr.mxu0 %v213
    %713 = vmatpush1.msra.mxu0 %v212
    %714 = vmatprep.subr.mxu0 %v215
    %715 = vmatpush1.msra.mxu0 %v214
    %716 = vmatprep.subr.mxu0 %v217
    %717 = vmatpush1.msra.mxu0 %v216
    %718 = vmatprep.subr.mxu0 0.0
    %719 = vmatpush1.msra.mxu0 0.0
    %720 = vmatprep.subr.mxu0 0.0
    %721 = vmatpush1.msra.mxu0 0.0
    %722 = vmatprep.subr.mxu0 0.0
    %723 = vmatpush1.msra.mxu0 0.0
    %724 = vmatprep.subr.mxu0 0.0
    %725 = vmatpush1.msra.mxu0 0.0
    %726 = vmatprep.subr.mxu0 0.0
    %727 = vmatpush1.msra.mxu0 0.0
    %728 = vmatprep.subr.mxu0 0.0
    %729 = vmatpush1.msra.mxu0 0.0
    %730 = vmatprep.subr.mxu0 0.0
    %731 = vmatpush1.msra.mxu0 0.0
    %732 = vmatprep.subr.mxu0 0.0
    %733 = vmatpush1.msra.mxu0 0.0
    %734 = vmatprep.subr.mxu0 0.0
    %735 = vmatpush1.msra.mxu0 0.0
    %736 = vmatprep.subr.mxu0 0.0
    %737 = vmatpush1.msra.mxu0 0.0
    %738 = vmatprep.subr.mxu0 0.0
    %739 = vmatpush1.msra.mxu0 0.0
    %740 = vmatprep.subr.mxu0 0.0
    %741 = vmatpush1.msra.mxu0 0.0
    %742 = vmatprep.subr.mxu0 0.0
    %743 = vmatpush1.msra.mxu0 0.0
    %744 = vmatprep.subr.mxu0 0.0
    %745 = vmatpush1.msra.mxu0 0.0
    %746 = vmatprep.subr.mxu0 0.0
    %747 = vmatpush1.msra.mxu0 0.0
    %748 = vmatprep.subr.mxu0 0.0
    %749 = vmatpush1.msra.mxu0 0.0
    %750 = vmatprep.subr.mxu0 0.0
    %751 = vmatpush1.msra.mxu0 0.0
    %752 = vmatprep.subr.mxu0 0.0
    %753 = vmatpush1.msra.mxu0 0.0
    %754 = vmatprep.subr.mxu0 0.0
    %755 = vmatpush1.msra.mxu0 0.0
    %756 = vmatprep.subr.mxu0 0.0
    %757 = vmatpush1.msra.mxu0 0.0
    %758 = vmatprep.subr.mxu0 0.0
    %759 = vmatpush1.msra.mxu0 0.0
    %760 = vmatprep.subr.mxu0 0.0
    %761 = vmatpush1.msra.mxu0 0.0
    %762 = vmatprep.subr.mxu0 0.0
    %763 = vmatpush1.msra.mxu0 0.0
    %764 = vmatprep.subr.mxu0 0.0
    %765 = vmatpush1.msra.mxu0 0.0
    %766 = vmatprep.mubr.f32.mxu0 0.0
    %767 = vmatmul.mubr.f32.gmra.mrb[0].mxu0 %v700
    %v768 = vpop.f32.mrb[0].mxu0
    %v769 = vadd.f32 0.0, %v768
    %v770 = vpop.f32.mrb[0].mxu0
    %v771 = vadd.f32 0.0, %v770
    %772 = vdwg.mxu0
    %v775 = vrot.slane %v769, 5
    %v776 = vrot.slane %v771, 5
    %v777 = vrot.slane %v769, 6
    %v778 = vrot.slane %v771, 6
    %v783 = vadd.f32 %v190, %v775
    %v784 = vadd.f32 %v192, %v776
    %v785 = vadd.f32 %v196, %v777
    %v786 = vadd.f32 %v198, %v778
    %v787 = vxor.u32 %v783, 2147483648
    %v788 = vxor.u32 %v785, 2147483648
    %v789 = vmul.f32 %v787, 1.442695
    %v790 = vpow.pop %v789
    %v791 = vmul.f32 %v788, 1.442695
    %v792 = vpow.pop %v791
    %v793 = vadd.f32 %v790, 1.0
    %v794 = vadd.f32 %v792, 1.0
    %v795 = vrcp.pop %v793
    %v796 = vmul.f32 1.0, %v795
    %v797 = vrcp.pop %v794
    %v798 = vmul.f32 1.0, %v797
    %v799 = vtanh.pop %v784
    %v800 = vtanh.pop %v786
    %v801 = vxor.u32 %v784, 2147483648
    %v802 = vxor.u32 %v786, 2147483648
    %v803 = vmul.f32 %v801, 1.442695
    %v804 = vpow.pop %v803
    %v805 = vmul.f32 %v802, 1.442695
    %v806 = vpow.pop %v805
    %v807 = vadd.f32 %v804, 1.0
    %v808 = vadd.f32 %v806, 1.0
    %v809 = vrcp.pop %v807
    %v810 = vmul.f32 1.0, %v809
    %v811 = vrcp.pop %v808
    %v812 = vmul.f32 1.0, %v811
    %v815 = vrot.slane %v799, 3
    %v816 = vrot.slane %v800, 2
    %v817 = vsel %vm334, %v816, %v815
    %v821 = vrot.slane %v810, 3
    %v822 = vrot.slane %v812, 2
    %v823 = vsel %vm334, %v822, %v821
    %v825 = vsel %vm93, %v817, %v823
    %v828 = vrot.slane %v686, 7
    %v829 = vrot.slane %v687, 7
    %v832 = vmul.f32 %v796, %v828
    %v833 = vmul.f32 %v798, %v829
    %v835 = vrot.slane %v825, 5
    %v836 = vrot.slane %v825, 6
    %v839 = vmul.f32 %v796, %v835
    %v840 = vmul.f32 %v798, %v836
    %843 = vrot.lane.b32.xlu0 %v839, 64
    %v844 = vpop.permute.xlu0 %843
    %845 = vrot.lane.b32.xlu0 %v840, 64
    %v846 = vpop.permute.xlu0 %845
    %v849 = vadd.f32 %v832, %v844
    %v850 = vadd.f32 %v833, %v846
    %v851 = vtanh.pop %v849
    %v852 = vtanh.pop %v850
    %v855 = vrot.slane %v851, 3
    %v856 = vrot.slane %v852, 2
    %v857 = vsel %vm334, %v856, %v855
    %v859 = vmul.f32 %v825, %v857
    %861 = vrot.lane.b32.xlu0 %v859, 64
    %v862 = vpop.permute.xlu0 %861
    %v863 = vsel %vm218, %v862, 0
    %865 = vmatprep.subr.mxu0 %v203
    %866 = vmatpush1.msra.mxu0 %v202
    %867 = vmatprep.subr.mxu0 %v205
    %868 = vmatpush1.msra.mxu0 %v204
    %869 = vmatprep.subr.mxu0 %v207
    %870 = vmatpush1.msra.mxu0 %v206
    %871 = vmatprep.subr.mxu0 %v209
    %872 = vmatpush1.msra.mxu0 %v208
    %873 = vmatprep.subr.mxu0 %v211
    %874 = vmatpush1.msra.mxu0 %v210
    %875 = vmatprep.subr.mxu0 %v213
    %876 = vmatpush1.msra.mxu0 %v212
    %877 = vmatprep.subr.mxu0 %v215
    %878 = vmatpush1.msra.mxu0 %v214
    %879 = vmatprep.subr.mxu0 %v217
    %880 = vmatpush1.msra.mxu0 %v216
    %881 = vmatprep.subr.mxu0 0.0
    %882 = vmatpush1.msra.mxu0 0.0
    %883 = vmatprep.subr.mxu0 0.0
    %884 = vmatpush1.msra.mxu0 0.0
    %885 = vmatprep.subr.mxu0 0.0
    %886 = vmatpush1.msra.mxu0 0.0
    %887 = vmatprep.subr.mxu0 0.0
    %888 = vmatpush1.msra.mxu0 0.0
    %889 = vmatprep.subr.mxu0 0.0
    %890 = vmatpush1.msra.mxu0 0.0
    %891 = vmatprep.subr.mxu0 0.0
    %892 = vmatpush1.msra.mxu0 0.0
    %893 = vmatprep.subr.mxu0 0.0
    %894 = vmatpush1.msra.mxu0 0.0
    %895 = vmatprep.subr.mxu0 0.0
    %896 = vmatpush1.msra.mxu0 0.0
    %897 = vmatprep.subr.mxu0 0.0
    %898 = vmatpush1.msra.mxu0 0.0
    %899 = vmatprep.subr.mxu0 0.0
    %900 = vmatpush1.msra.mxu0 0.0
    %901 = vmatprep.subr.mxu0 0.0
    %902 = vmatpush1.msra.mxu0 0.0
    %903 = vmatprep.subr.mxu0 0.0
    %904 = vmatpush1.msra.mxu0 0.0
    %905 = vmatprep.subr.mxu0 0.0
    %906 = vmatpush1.msra.mxu0 0.0
    %907 = vmatprep.subr.mxu0 0.0
    %908 = vmatpush1.msra.mxu0 0.0
    %909 = vmatprep.subr.mxu0 0.0
    %910 = vmatpush1.msra.mxu0 0.0
    %911 = vmatprep.subr.mxu0 0.0
    %912 = vmatpush1.msra.mxu0 0.0
    %913 = vmatprep.subr.mxu0 0.0
    %914 = vmatpush1.msra.mxu0 0.0
    %915 = vmatprep.subr.mxu0 0.0
    %916 = vmatpush1.msra.mxu0 0.0
    %917 = vmatprep.subr.mxu0 0.0
    %918 = vmatpush1.msra.mxu0 0.0
    %919 = vmatprep.subr.mxu0 0.0
    %920 = vmatpush1.msra.mxu0 0.0
    %921 = vmatprep.subr.mxu0 0.0
    %922 = vmatpush1.msra.mxu0 0.0
    %923 = vmatprep.subr.mxu0 0.0
    %924 = vmatpush1.msra.mxu0 0.0
    %925 = vmatprep.subr.mxu0 0.0
    %926 = vmatpush1.msra.mxu0 0.0
    %927 = vmatprep.subr.mxu0 0.0
    %928 = vmatpush1.msra.mxu0 0.0
    %929 = vmatprep.mubr.f32.mxu0 0.0
    %930 = vmatmul.mubr.f32.gmra.mrb[0].mxu0 %v863
    %v931 = vpop.f32.mrb[0].mxu0
    %v932 = vadd.f32 0.0, %v931
    %v933 = vpop.f32.mrb[0].mxu0
    %v934 = vadd.f32 0.0, %v933
    %935 = vdwg.mxu0
    %v938 = vrot.slane %v932, 4
    %v939 = vrot.slane %v934, 4
    %v940 = vrot.slane %v932, 5
    %v941 = vrot.slane %v934, 5
    %v946 = vadd.f32 %v190, %v938
    %v947 = vadd.f32 %v192, %v939
    %v948 = vadd.f32 %v196, %v940
    %v949 = vadd.f32 %v198, %v941
    %v950 = vxor.u32 %v946, 2147483648
    %v951 = vxor.u32 %v948, 2147483648
    %v952 = vmul.f32 %v950, 1.442695
    %v953 = vpow.pop %v952
    %v954 = vmul.f32 %v951, 1.442695
    %v955 = vpow.pop %v954
    %v956 = vadd.f32 %v953, 1.0
    %v957 = vadd.f32 %v955, 1.0
    %v958 = vrcp.pop %v956
    %v959 = vmul.f32 1.0, %v958
    %v960 = vrcp.pop %v957
    %v961 = vmul.f32 1.0, %v960
    %v962 = vtanh.pop %v947
    %v963 = vtanh.pop %v949
    %v964 = vxor.u32 %v947, 2147483648
    %v965 = vxor.u32 %v949, 2147483648
    %v966 = vmul.f32 %v964, 1.442695
    %v967 = vpow.pop %v966
    %v968 = vmul.f32 %v965, 1.442695
    %v969 = vpow.pop %v968
    %v970 = vadd.f32 %v967, 1.0
    %v971 = vadd.f32 %v969, 1.0
    %v972 = vrcp.pop %v970
    %v973 = vmul.f32 1.0, %v972
    %v974 = vrcp.pop %v971
    %v975 = vmul.f32 1.0, %v974
    %v978 = vrot.slane %v962, 4
    %v979 = vrot.slane %v963, 3
    %v980 = vsel %vm334, %v979, %v978
    %v984 = vrot.slane %v973, 4
    %v985 = vrot.slane %v975, 3
    %v986 = vsel %vm334, %v985, %v984
    %v988 = vsel %vm93, %v980, %v986
    %v991 = vrot.slane %v849, 7
    %v992 = vrot.slane %v850, 7
    %v995 = vmul.f32 %v959, %v991
    %v996 = vmul.f32 %v961, %v992
    %v998 = vrot.slane %v988, 4
    %v999 = vrot.slane %v988, 5
    %v1002 = vmul.f32 %v959, %v998
    %v1003 = vmul.f32 %v961, %v999
    %1006 = vrot.lane.b32.xlu0 %v1002, 64
    %v1007 = vpop.permute.xlu0 %1006
    %1008 = vrot.lane.b32.xlu0 %v1003, 64
    %v1009 = vpop.permute.xlu0 %1008
    %v1012 = vadd.f32 %v995, %v1007
    %v1013 = vadd.f32 %v996, %v1009
    %v1014 = vtanh.pop %v1012
    %v1015 = vtanh.pop %v1013
    %v1018 = vrot.slane %v1014, 4
    %v1019 = vrot.slane %v1015, 3
    %v1020 = vsel %vm334, %v1019, %v1018
    %v1022 = vmul.f32 %v988, %v1020
    %1024 = vrot.lane.b32.xlu0 %v1022, 64
    %v1025 = vpop.permute.xlu0 %1024
    %v1026 = vsel %vm218, %v1025, 0
    %1028 = vmatprep.subr.mxu0 %v203
    %1029 = vmatpush1.msra.mxu0 %v202
    %1030 = vmatprep.subr.mxu0 %v205
    %1031 = vmatpush1.msra.mxu0 %v204
    %1032 = vmatprep.subr.mxu0 %v207
    %1033 = vmatpush1.msra.mxu0 %v206
    %1034 = vmatprep.subr.mxu0 %v209
    %1035 = vmatpush1.msra.mxu0 %v208
    %1036 = vmatprep.subr.mxu0 %v211
    %1037 = vmatpush1.msra.mxu0 %v210
    %1038 = vmatprep.subr.mxu0 %v213
    %1039 = vmatpush1.msra.mxu0 %v212
    %1040 = vmatprep.subr.mxu0 %v215
    %1041 = vmatpush1.msra.mxu0 %v214
    %1042 = vmatprep.subr.mxu0 %v217
    %1043 = vmatpush1.msra.mxu0 %v216
    %1044 = vmatprep.subr.mxu0 0.0
    %1045 = vmatpush1.msra.mxu0 0.0
    %1046 = vmatprep.subr.mxu0 0.0
    %1047 = vmatpush1.msra.mxu0 0.0
    %1048 = vmatprep.subr.mxu0 0.0
    %1049 = vmatpush1.msra.mxu0 0.0
    %1050 = vmatprep.subr.mxu0 0.0
    %1051 = vmatpush1.msra.mxu0 0.0
    %1052 = vmatprep.subr.mxu0 0.0
    %1053 = vmatpush1.msra.mxu0 0.0
    %1054 = vmatprep.subr.mxu0 0.0
    %1055 = vmatpush1.msra.mxu0 0.0
    %1056 = vmatprep.subr.mxu0 0.0
    %1057 = vmatpush1.msra.mxu0 0.0
    %1058 = vmatprep.subr.mxu0 0.0
    %1059 = vmatpush1.msra.mxu0 0.0
    %1060 = vmatprep.subr.mxu0 0.0
    %1061 = vmatpush1.msra.mxu0 0.0
    %1062 = vmatprep.subr.mxu0 0.0
    %1063 = vmatpush1.msra.mxu0 0.0
    %1064 = vmatprep.subr.mxu0 0.0
    %1065 = vmatpush1.msra.mxu0 0.0
    %1066 = vmatprep.subr.mxu0 0.0
    %1067 = vmatpush1.msra.mxu0 0.0
    %1068 = vmatprep.subr.mxu0 0.0
    %1069 = vmatpush1.msra.mxu0 0.0
    %1070 = vmatprep.subr.mxu0 0.0
    %1071 = vmatpush1.msra.mxu0 0.0
    %1072 = vmatprep.subr.mxu0 0.0
    %1073 = vmatpush1.msra.mxu0 0.0
    %1074 = vmatprep.subr.mxu0 0.0
    %1075 = vmatpush1.msra.mxu0 0.0
    %1076 = vmatprep.subr.mxu0 0.0
    %1077 = vmatpush1.msra.mxu0 0.0
    %1078 = vmatprep.subr.mxu0 0.0
    %1079 = vmatpush1.msra.mxu0 0.0
    %1080 = vmatprep.subr.mxu0 0.0
    %1081 = vmatpush1.msra.mxu0 0.0
    %1082 = vmatprep.subr.mxu0 0.0
    %1083 = vmatpush1.msra.mxu0 0.0
    %1084 = vmatprep.subr.mxu0 0.0
    %1085 = vmatpush1.msra.mxu0 0.0
    %1086 = vmatprep.subr.mxu0 0.0
    %1087 = vmatpush1.msra.mxu0 0.0
    %1088 = vmatprep.subr.mxu0 0.0
    %1089 = vmatpush1.msra.mxu0 0.0
    %1090 = vmatprep.subr.mxu0 0.0
    %1091 = vmatpush1.msra.mxu0 0.0
    %1092 = vmatprep.mubr.f32.mxu0 0.0
    %1093 = vmatmul.mubr.f32.gmra.mrb[0].mxu0 %v1026
    %v1094 = vpop.f32.mrb[0].mxu0
    %v1095 = vadd.f32 0.0, %v1094
    %v1096 = vpop.f32.mrb[0].mxu0
    %v1097 = vadd.f32 0.0, %v1096
    %1098 = vdwg.mxu0
    %v1101 = vrot.slane %v1095, 3
    %v1102 = vrot.slane %v1097, 3
    %v1103 = vrot.slane %v1095, 4
    %v1104 = vrot.slane %v1097, 4
    %v1109 = vadd.f32 %v190, %v1101
    %v1110 = vadd.f32 %v192, %v1102
    %v1111 = vadd.f32 %v196, %v1103
    %v1112 = vadd.f32 %v198, %v1104
    %v1113 = vxor.u32 %v1109, 2147483648
    %v1114 = vxor.u32 %v1111, 2147483648
    %v1115 = vmul.f32 %v1113, 1.442695
    %v1116 = vpow.pop %v1115
    %v1117 = vmul.f32 %v1114, 1.442695
    %v1118 = vpow.pop %v1117
    %v1119 = vadd.f32 %v1116, 1.0
    %v1120 = vadd.f32 %v1118, 1.0
    %v1121 = vrcp.pop %v1119
    %v1122 = vmul.f32 1.0, %v1121
    %v1123 = vrcp.pop %v1120
    %v1124 = vmul.f32 1.0, %v1123
    %v1125 = vtanh.pop %v1110
    %v1126 = vtanh.pop %v1112
    %v1127 = vxor.u32 %v1110, 2147483648
    %v1128 = vxor.u32 %v1112, 2147483648
    %v1129 = vmul.f32 %v1127, 1.442695
    %v1130 = vpow.pop %v1129
    %v1131 = vmul.f32 %v1128, 1.442695
    %v1132 = vpow.pop %v1131
    %v1133 = vadd.f32 %v1130, 1.0
    %v1134 = vadd.f32 %v1132, 1.0
    %v1135 = vrcp.pop %v1133
    %v1136 = vmul.f32 1.0, %v1135
    %v1137 = vrcp.pop %v1134
    %v1138 = vmul.f32 1.0, %v1137
    %v1141 = vrot.slane %v1125, 5
    %v1142 = vrot.slane %v1126, 4
    %v1143 = vsel %vm334, %v1142, %v1141
    %v1147 = vrot.slane %v1136, 5
    %v1148 = vrot.slane %v1138, 4
    %v1149 = vsel %vm334, %v1148, %v1147
    %v1151 = vsel %vm93, %v1143, %v1149
    %v1154 = vrot.slane %v1012, 7
    %v1155 = vrot.slane %v1013, 7
    %v1158 = vmul.f32 %v1122, %v1154
    %v1159 = vmul.f32 %v1124, %v1155
    %v1161 = vrot.slane %v1151, 3
    %v1162 = vrot.slane %v1151, 4
    %v1165 = vmul.f32 %v1122, %v1161
    %v1166 = vmul.f32 %v1124, %v1162
    %1169 = vrot.lane.b32.xlu0 %v1165, 64
    %v1170 = vpop.permute.xlu0 %1169
    %1171 = vrot.lane.b32.xlu0 %v1166, 64
    %v1172 = vpop.permute.xlu0 %1171
    %v1175 = vadd.f32 %v1158, %v1170
    %v1176 = vadd.f32 %v1159, %v1172
    %v1177 = vtanh.pop %v1175
    %v1178 = vtanh.pop %v1176
    %v1181 = vrot.slane %v1177, 5
    %v1182 = vrot.slane %v1178, 4
    %v1183 = vsel %vm334, %v1182, %v1181
    %v1185 = vmul.f32 %v1151, %v1183
    %1187 = vrot.lane.b32.xlu0 %v1185, 64
    %v1188 = vpop.permute.xlu0 %1187
    %v1189 = vsel %vm218, %v1188, 0
    %1191 = vmatprep.subr.mxu0 %v203
    %1192 = vmatpush1.msra.mxu0 %v202
    %1193 = vmatprep.subr.mxu0 %v205
    %1194 = vmatpush1.msra.mxu0 %v204
    %1195 = vmatprep.subr.mxu0 %v207
    %1196 = vmatpush1.msra.mxu0 %v206
    %1197 = vmatprep.subr.mxu0 %v209
    %1198 = vmatpush1.msra.mxu0 %v208
    %1199 = vmatprep.subr.mxu0 %v211
    %1200 = vmatpush1.msra.mxu0 %v210
    %1201 = vmatprep.subr.mxu0 %v213
    %1202 = vmatpush1.msra.mxu0 %v212
    %1203 = vmatprep.subr.mxu0 %v215
    %1204 = vmatpush1.msra.mxu0 %v214
    %1205 = vmatprep.subr.mxu0 %v217
    %1206 = vmatpush1.msra.mxu0 %v216
    %1207 = vmatprep.subr.mxu0 0.0
    %1208 = vmatpush1.msra.mxu0 0.0
    %1209 = vmatprep.subr.mxu0 0.0
    %1210 = vmatpush1.msra.mxu0 0.0
    %1211 = vmatprep.subr.mxu0 0.0
    %1212 = vmatpush1.msra.mxu0 0.0
    %1213 = vmatprep.subr.mxu0 0.0
    %1214 = vmatpush1.msra.mxu0 0.0
    %1215 = vmatprep.subr.mxu0 0.0
    %1216 = vmatpush1.msra.mxu0 0.0
    %1217 = vmatprep.subr.mxu0 0.0
    %1218 = vmatpush1.msra.mxu0 0.0
    %1219 = vmatprep.subr.mxu0 0.0
    %1220 = vmatpush1.msra.mxu0 0.0
    %1221 = vmatprep.subr.mxu0 0.0
    %1222 = vmatpush1.msra.mxu0 0.0
    %1223 = vmatprep.subr.mxu0 0.0
    %1224 = vmatpush1.msra.mxu0 0.0
    %1225 = vmatprep.subr.mxu0 0.0
    %1226 = vmatpush1.msra.mxu0 0.0
    %1227 = vmatprep.subr.mxu0 0.0
    %1228 = vmatpush1.msra.mxu0 0.0
    %1229 = vmatprep.subr.mxu0 0.0
    %1230 = vmatpush1.msra.mxu0 0.0
    %1231 = vmatprep.subr.mxu0 0.0
    %1232 = vmatpush1.msra.mxu0 0.0
    %1233 = vmatprep.subr.mxu0 0.0
    %1234 = vmatpush1.msra.mxu0 0.0
    %1235 = vmatprep.subr.mxu0 0.0
    %1236 = vmatpush1.msra.mxu0 0.0
    %1237 = vmatprep.subr.mxu0 0.0
    %1238 = vmatpush1.msra.mxu0 0.0
    %1239 = vmatprep.subr.mxu0 0.0
    %1240 = vmatpush1.msra.mxu0 0.0
    %1241 = vmatprep.subr.mxu0 0.0
    %1242 = vmatpush1.msra.mxu0 0.0
    %1243 = vmatprep.subr.mxu0 0.0
    %1244 = vmatpush1.msra.mxu0 0.0
    %1245 = vmatprep.subr.mxu0 0.0
    %1246 = vmatpush1.msra.mxu0 0.0
    %1247 = vmatprep.subr.mxu0 0.0
    %1248 = vmatpush1.msra.mxu0 0.0
    %1249 = vmatprep.subr.mxu0 0.0
    %1250 = vmatpush1.msra.mxu0 0.0
    %1251 = vmatprep.subr.mxu0 0.0
    %1252 = vmatpush1.msra.mxu0 0.0
    %1253 = vmatprep.subr.mxu0 0.0
    %1254 = vmatpush1.msra.mxu0 0.0
    %1255 = vmatprep.mubr.f32.mxu0 0.0
    %1256 = vmatmul.mubr.f32.gmra.mrb[0].mxu0 %v1189
    %v1257 = vpop.f32.mrb[0].mxu0
    %v1258 = vadd.f32 0.0, %v1257
    %v1259 = vpop.f32.mrb[0].mxu0
    %v1260 = vadd.f32 0.0, %v1259
    %1261 = vdwg.mxu0
    %v1264 = vrot.slane %v1258, 2
    %v1265 = vrot.slane %v1260, 2
    %v1266 = vrot.slane %v1258, 3
    %v1267 = vrot.slane %v1260, 3
    %v1272 = vadd.f32 %v190, %v1264
    %v1273 = vadd.f32 %v192, %v1265
    %v1274 = vadd.f32 %v196, %v1266
    %v1275 = vadd.f32 %v198, %v1267
    %v1276 = vxor.u32 %v1272, 2147483648
    %v1277 = vxor.u32 %v1274, 2147483648
    %v1278 = vmul.f32 %v1276, 1.442695
    %v1279 = vpow.pop %v1278
    %v1280 = vmul.f32 %v1277, 1.442695
    %v1281 = vpow.pop %v1280
    %v1282 = vadd.f32 %v1279, 1.0
    %v1283 = vadd.f32 %v1281, 1.0
    %v1284 = vrcp.pop %v1282
    %v1285 = vmul.f32 1.0, %v1284
    %v1286 = vrcp.pop %v1283
    %v1287 = vmul.f32 1.0, %v1286
    %v1288 = vtanh.pop %v1273
    %v1289 = vtanh.pop %v1275
    %v1290 = vxor.u32 %v1273, 2147483648
    %v1291 = vxor.u32 %v1275, 2147483648
    %v1292 = vmul.f32 %v1290, 1.442695
    %v1293 = vpow.pop %v1292
    %v1294 = vmul.f32 %v1291, 1.442695
    %v1295 = vpow.pop %v1294
    %v1296 = vadd.f32 %v1293, 1.0
    %v1297 = vadd.f32 %v1295, 1.0
    %v1298 = vrcp.pop %v1296
    %v1299 = vmul.f32 1.0, %v1298
    %v1300 = vrcp.pop %v1297
    %v1301 = vmul.f32 1.0, %v1300
    %v1304 = vrot.slane %v1288, 6
    %v1305 = vrot.slane %v1289, 5
    %v1306 = vsel %vm334, %v1305, %v1304
    %v1310 = vrot.slane %v1299, 6
    %v1311 = vrot.slane %v1301, 5
    %v1312 = vsel %vm334, %v1311, %v1310
    %v1314 = vsel %vm93, %v1306, %v1312
    %v1317 = vrot.slane %v1175, 7
    %v1318 = vrot.slane %v1176, 7
    %v1321 = vmul.f32 %v1285, %v1317
    %v1322 = vmul.f32 %v1287, %v1318
    %v1324 = vrot.slane %v1314, 2
    %v1325 = vrot.slane %v1314, 3
    %v1328 = vmul.f32 %v1285, %v1324
    %v1329 = vmul.f32 %v1287, %v1325
    %1332 = vrot.lane.b32.xlu0 %v1328, 64
    %v1333 = vpop.permute.xlu0 %1332
    %1334 = vrot.lane.b32.xlu0 %v1329, 64
    %v1335 = vpop.permute.xlu0 %1334
    %v1338 = vadd.f32 %v1321, %v1333
    %v1339 = vadd.f32 %v1322, %v1335
    %v1340 = vtanh.pop %v1338
    %v1341 = vtanh.pop %v1339
    %v1344 = vrot.slane %v1340, 6
    %v1345 = vrot.slane %v1341, 5
    %v1346 = vsel %vm334, %v1345, %v1344
    %v1348 = vmul.f32 %v1314, %v1346
    %1350 = vrot.lane.b32.xlu0 %v1348, 64
    %v1351 = vpop.permute.xlu0 %1350
    %v1352 = vsel %vm218, %v1351, 0
    %1354 = vmatprep.subr.mxu0 %v203
    %1355 = vmatpush1.msra.mxu0 %v202
    %1356 = vmatprep.subr.mxu0 %v205
    %1357 = vmatpush1.msra.mxu0 %v204
    %1358 = vmatprep.subr.mxu0 %v207
    %1359 = vmatpush1.msra.mxu0 %v206
    %1360 = vmatprep.subr.mxu0 %v209
    %1361 = vmatpush1.msra.mxu0 %v208
    %1362 = vmatprep.subr.mxu0 %v211
    %1363 = vmatpush1.msra.mxu0 %v210
    %1364 = vmatprep.subr.mxu0 %v213
    %1365 = vmatpush1.msra.mxu0 %v212
    %1366 = vmatprep.subr.mxu0 %v215
    %1367 = vmatpush1.msra.mxu0 %v214
    %1368 = vmatprep.subr.mxu0 %v217
    %1369 = vmatpush1.msra.mxu0 %v216
    %1370 = vmatprep.subr.mxu0 0.0
    %1371 = vmatpush1.msra.mxu0 0.0
    %1372 = vmatprep.subr.mxu0 0.0
    %1373 = vmatpush1.msra.mxu0 0.0
    %1374 = vmatprep.subr.mxu0 0.0
    %1375 = vmatpush1.msra.mxu0 0.0
    %1376 = vmatprep.subr.mxu0 0.0
    %1377 = vmatpush1.msra.mxu0 0.0
    %1378 = vmatprep.subr.mxu0 0.0
    %1379 = vmatpush1.msra.mxu0 0.0
    %1380 = vmatprep.subr.mxu0 0.0
    %1381 = vmatpush1.msra.mxu0 0.0
    %1382 = vmatprep.subr.mxu0 0.0
    %1383 = vmatpush1.msra.mxu0 0.0
    %1384 = vmatprep.subr.mxu0 0.0
    %1385 = vmatpush1.msra.mxu0 0.0
    %1386 = vmatprep.subr.mxu0 0.0
    %1387 = vmatpush1.msra.mxu0 0.0
    %1388 = vmatprep.subr.mxu0 0.0
    %1389 = vmatpush1.msra.mxu0 0.0
    %1390 = vmatprep.subr.mxu0 0.0
    %1391 = vmatpush1.msra.mxu0 0.0
    %1392 = vmatprep.subr.mxu0 0.0
    %1393 = vmatpush1.msra.mxu0 0.0
    %1394 = vmatprep.subr.mxu0 0.0
    %1395 = vmatpush1.msra.mxu0 0.0
    %1396 = vmatprep.subr.mxu0 0.0
    %1397 = vmatpush1.msra.mxu0 0.0
    %1398 = vmatprep.subr.mxu0 0.0
    %1399 = vmatpush1.msra.mxu0 0.0
    %1400 = vmatprep.subr.mxu0 0.0
    %1401 = vmatpush1.msra.mxu0 0.0
    %1402 = vmatprep.subr.mxu0 0.0
    %1403 = vmatpush1.msra.mxu0 0.0
    %1404 = vmatprep.subr.mxu0 0.0
    %1405 = vmatpush1.msra.mxu0 0.0
    %1406 = vmatprep.subr.mxu0 0.0
    %1407 = vmatpush1.msra.mxu0 0.0
    %1408 = vmatprep.subr.mxu0 0.0
    %1409 = vmatpush1.msra.mxu0 0.0
    %1410 = vmatprep.subr.mxu0 0.0
    %1411 = vmatpush1.msra.mxu0 0.0
    %1412 = vmatprep.subr.mxu0 0.0
    %1413 = vmatpush1.msra.mxu0 0.0
    %1414 = vmatprep.subr.mxu0 0.0
    %1415 = vmatpush1.msra.mxu0 0.0
    %1416 = vmatprep.subr.mxu0 0.0
    %1417 = vmatpush1.msra.mxu0 0.0
    %1418 = vmatprep.mubr.f32.mxu0 0.0
    %1419 = vmatmul.mubr.f32.gmra.mrb[0].mxu0 %v1352
    %v1420 = vpop.f32.mrb[0].mxu0
    %v1421 = vadd.f32 0.0, %v1420
    %v1422 = vpop.f32.mrb[0].mxu0
    %v1423 = vadd.f32 0.0, %v1422
    %1424 = vdwg.mxu0
    %v1427 = vrot.slane %v1421, 1
    %v1428 = vrot.slane %v1423, 1
    %v1429 = vrot.slane %v1421, 2
    %v1430 = vrot.slane %v1423, 2
    %v1435 = vadd.f32 %v190, %v1427
    %v1436 = vadd.f32 %v192, %v1428
    %v1437 = vadd.f32 %v196, %v1429
    %v1438 = vadd.f32 %v198, %v1430
    %v1439 = vxor.u32 %v1435, 2147483648
    %v1440 = vxor.u32 %v1437, 2147483648
    %v1441 = vmul.f32 %v1439, 1.442695
    %v1442 = vpow.pop %v1441
    %v1443 = vmul.f32 %v1440, 1.442695
    %v1444 = vpow.pop %v1443
    %v1445 = vadd.f32 %v1442, 1.0
    %v1446 = vadd.f32 %v1444, 1.0
    %v1447 = vrcp.pop %v1445
    %v1448 = vmul.f32 1.0, %v1447
    %v1449 = vrcp.pop %v1446
    %v1450 = vmul.f32 1.0, %v1449
    %v1451 = vtanh.pop %v1436
    %v1452 = vtanh.pop %v1438
    %v1453 = vxor.u32 %v1436, 2147483648
    %v1454 = vxor.u32 %v1438, 2147483648
    %v1455 = vmul.f32 %v1453, 1.442695
    %v1456 = vpow.pop %v1455
    %v1457 = vmul.f32 %v1454, 1.442695
    %v1458 = vpow.pop %v1457
    %v1459 = vadd.f32 %v1456, 1.0
    %v1460 = vadd.f32 %v1458, 1.0
    %v1461 = vrcp.pop %v1459
    %v1462 = vmul.f32 1.0, %v1461
    %v1463 = vrcp.pop %v1460
    %v1464 = vmul.f32 1.0, %v1463
    %v1467 = vrot.slane %v1451, 7
    %v1468 = vrot.slane %v1452, 6
    %v1469 = vsel %vm334, %v1468, %v1467
    %v1473 = vrot.slane %v1462, 7
    %v1474 = vrot.slane %v1464, 6
    %v1475 = vsel %vm334, %v1474, %v1473
    %v1477 = vsel %vm93, %v1469, %v1475
    %v1480 = vrot.slane %v1338, 7
    %v1481 = vrot.slane %v1339, 7
    %v1484 = vmul.f32 %v1448, %v1480
    %v1485 = vmul.f32 %v1450, %v1481
    %v1487 = vrot.slane %v1477, 1
    %v1488 = vrot.slane %v1477, 2
    %v1491 = vmul.f32 %v1448, %v1487
    %v1492 = vmul.f32 %v1450, %v1488
    %1495 = vrot.lane.b32.xlu0 %v1491, 64
    %v1496 = vpop.permute.xlu0 %1495
    %1497 = vrot.lane.b32.xlu0 %v1492, 64
    %v1498 = vpop.permute.xlu0 %1497
    %v1501 = vadd.f32 %v1484, %v1496
    %v1502 = vadd.f32 %v1485, %v1498
    %v1503 = vtanh.pop %v1501
    %v1504 = vtanh.pop %v1502
    %v1507 = vrot.slane %v1503, 7
    %v1508 = vrot.slane %v1504, 6
    %v1509 = vsel %vm334, %v1508, %v1507
    %v1511 = vmul.f32 %v1477, %v1509
    %1513 = vrot.lane.b32.xlu0 %v1511, 64
    %v1514 = vpop.permute.xlu0 %1513
    %vm1516 = vcmask 517120
    %1517 = vst.msk [vmem:[#allocation9] sm:$0x3] %vm1516, %v1514
    %v1520 = vrot.slane %v1502, 7
    %1521 = vrot.lane.b32.xlu0 %v1501, 64
    %v1522 = vpop.permute.xlu0 %1521
    %1523 = vrot.lane.b32.xlu0 %v1520, 64
    %v1524 = vpop.permute.xlu0 %1523
    %vm1527 = vcmask 523271
    %1528 = vst.msk [vmem:[#allocation11 - $0x7] sm:$0x80] %vm1527, %v1522
    %vm1529 = vcmask 516096
    %1530 = vst.msk [vmem:[#allocation11 + $0x1] sm:$0x1] %vm1529, %v1524
    %v1532 = vunpack.c.l.s4 1966171168
    %v1533 = vunpack.c.0.s8 %v1532
    %v1534 = vlaneseq
    %v1535 = vshrl.u32 %v1534, 7
    %v1536 = vsub.s32 %v1533, %v1535
    %v1537 = vrot.slane %v376, %v1536
    %v1538 = vcombine.high %v1537, %v1537
    %v1540 = vunpack.c.l.s4 1966171168
    %v1541 = vunpack.c.0.s8 %v1540
    %v1542 = vlaneseq
    %v1543 = vshrl.u32 %v1542, 7
    %v1544 = vsub.s32 %v1541, %v1543
    %v1545 = vrot.slane %v1537, %v1544
    %v1547 = vunpack.c.l.s4 1966171168
    %v1548 = vunpack.c.0.s8 %v1547
    %v1549 = vlaneseq
    %v1550 = vshrl.u32 %v1549, 7
    %v1551 = vsub.s32 %v1548, %v1550
    %v1552 = vrot.slane %v1538, %v1551
    %v1556 = vunpack.c.l.s4 1966171168
    %v1557 = vunpack.c.0.s8 %v1556
    %v1558 = vlaneseq
    %v1559 = vshrl.u32 %v1558, 7
    %v1560 = vsub.s32 %v1557, %v1559
    %v1561 = vrot.slane %v533, %v1560
    %v1562 = vcombine.high %v1561, %v1561
    %v1564 = vunpack.c.l.s4 1966171168
    %v1565 = vunpack.c.0.s8 %v1564
    %v1566 = vlaneseq
    %v1567 = vshrl.u32 %v1566, 7
    %v1568 = vsub.s32 %v1565, %v1567
    %v1569 = vrot.slane %v1561, %v1568
    %v1571 = vunpack.c.l.s4 1966171168
    %v1572 = vunpack.c.0.s8 %v1571
    %v1573 = vlaneseq
    %v1574 = vshrl.u32 %v1573, 7
    %v1575 = vsub.s32 %v1572, %v1574
    %v1576 = vrot.slane %v1562, %v1575
    %v1578 = vunpack.c.l.s4 1966171168
    %v1579 = vunpack.c.0.s8 %v1578
    %v1580 = vlaneseq
    %v1581 = vshrl.u32 %v1580, 7
    %v1582 = vsub.s32 %v1579, %v1581
    %v1583 = vrot.slane %v696, %v1582
    %v1584 = vcombine.high %v1583, %v1583
    %v1586 = vunpack.c.l.s4 1966171168
    %v1587 = vunpack.c.0.s8 %v1586
    %v1588 = vlaneseq
    %v1589 = vshrl.u32 %v1588, 7
    %v1590 = vsub.s32 %v1587, %v1589
    %v1591 = vrot.slane %v1583, %v1590
    %v1593 = vunpack.c.l.s4 1966171168
    %v1594 = vunpack.c.0.s8 %v1593
    %v1595 = vlaneseq
    %v1596 = vshrl.u32 %v1595, 7
    %v1597 = vsub.s32 %v1594, %v1596
    %v1598 = vrot.slane %v1584, %v1597
    %v1600 = vunpack.c.l.s4 1966171168
    %v1601 = vunpack.c.0.s8 %v1600
    %v1602 = vlaneseq
    %v1603 = vshrl.u32 %v1602, 7
    %v1604 = vsub.s32 %v1601, %v1603
    %v1605 = vrot.slane %v859, %v1604
    %v1606 = vcombine.high %v1605, %v1605
    %v1608 = vunpack.c.l.s4 1966171168
    %v1609 = vunpack.c.0.s8 %v1608
    %v1610 = vlaneseq
    %v1611 = vshrl.u32 %v1610, 7
    %v1612 = vsub.s32 %v1609, %v1611
    %v1613 = vrot.slane %v1605, %v1612
    %v1615 = vunpack.c.l.s4 1966171168
    %v1616 = vunpack.c.0.s8 %v1615
    %v1617 = vlaneseq
    %v1618 = vshrl.u32 %v1617, 7
    %v1619 = vsub.s32 %v1616, %v1618
    %v1620 = vrot.slane %v1606, %v1619
    %v1622 = vunpack.c.l.s4 1966171168
    %v1623 = vunpack.c.0.s8 %v1622
    %v1624 = vlaneseq
    %v1625 = vshrl.u32 %v1624, 7
    %v1626 = vsub.s32 %v1623, %v1625
    %v1627 = vrot.slane %v1022, %v1626
    %v1628 = vcombine.high %v1627, %v1627
    %v1630 = vunpack.c.l.s4 1966171168
    %v1631 = vunpack.c.0.s8 %v1630
    %v1632 = vlaneseq
    %v1633 = vshrl.u32 %v1632, 7
    %v1634 = vsub.s32 %v1631, %v1633
    %v1635 = vrot.slane %v1627, %v1634
    %v1637 = vunpack.c.l.s4 1966171168
    %v1638 = vunpack.c.0.s8 %v1637
    %v1639 = vlaneseq
    %v1640 = vshrl.u32 %v1639, 7
    %v1641 = vsub.s32 %v1638, %v1640
    %v1642 = vrot.slane %v1628, %v1641
    %v1644 = vunpack.c.l.s4 1966171168
    %v1645 = vunpack.c.0.s8 %v1644
    %v1646 = vlaneseq
    %v1647 = vshrl.u32 %v1646, 7
    %v1648 = vsub.s32 %v1645, %v1647
    %v1649 = vrot.slane %v1185, %v1648
    %v1650 = vcombine.high %v1649, %v1649
    %v1652 = vunpack.c.l.s4 1966171168
    %v1653 = vunpack.c.0.s8 %v1652
    %v1654 = vlaneseq
    %v1655 = vshrl.u32 %v1654, 7
    %v1656 = vsub.s32 %v1653, %v1655
    %v1657 = vrot.slane %v1649, %v1656
    %v1659 = vunpack.c.l.s4 1966171168
    %v1660 = vunpack.c.0.s8 %v1659
    %v1661 = vlaneseq
    %v1662 = vshrl.u32 %v1661, 7
    %v1663 = vsub.s32 %v1660, %v1662
    %v1664 = vrot.slane %v1650, %v1663
    %v1666 = vunpack.c.l.s4 1966171168
    %v1667 = vunpack.c.0.s8 %v1666
    %v1668 = vlaneseq
    %v1669 = vshrl.u32 %v1668, 7
    %v1670 = vsub.s32 %v1667, %v1669
    %v1671 = vrot.slane %v1348, %v1670
    %v1672 = vcombine.high %v1671, %v1671
    %v1674 = vunpack.c.l.s4 1966171168
    %v1675 = vunpack.c.0.s8 %v1674
    %v1676 = vlaneseq
    %v1677 = vshrl.u32 %v1676, 7
    %v1678 = vsub.s32 %v1675, %v1677
    %v1679 = vrot.slane %v1671, %v1678
    %v1681 = vunpack.c.l.s4 1966171168
    %v1682 = vunpack.c.0.s8 %v1681
    %v1683 = vlaneseq
    %v1684 = vshrl.u32 %v1683, 7
    %v1685 = vsub.s32 %v1682, %v1684
    %v1686 = vrot.slane %v1672, %v1685
    %v1688 = vunpack.c.l.s4 1966171168
    %v1689 = vunpack.c.0.s8 %v1688
    %v1690 = vlaneseq
    %v1691 = vshrl.u32 %v1690, 7
    %v1692 = vsub.s32 %v1689, %v1691
    %v1693 = vrot.slane %v1511, %v1692
    %v1694 = vcombine.high %v1693, %v1693
    %v1696 = vunpack.c.l.s4 1966171168
    %v1697 = vunpack.c.0.s8 %v1696
    %v1698 = vlaneseq
    %v1699 = vshrl.u32 %v1698, 7
    %v1700 = vsub.s32 %v1697, %v1699
    %v1701 = vrot.slane %v1693, %v1700
    %v1703 = vunpack.c.l.s4 1966171168
    %v1704 = vunpack.c.0.s8 %v1703
    %v1705 = vlaneseq
    %v1706 = vshrl.u32 %v1705, 7
    %v1707 = vsub.s32 %v1704, %v1706
    %v1708 = vrot.slane %v1694, %v1707
    %v1709 = vlaneseq
    %v1710 = vshrl.u32 %v1709, 7
    %v1711 = vsub.s32 0, %v1710
    %v1712 = vrot.slane %v1569, %v1711
    %v1713 = vlaneseq
    %v1714 = vshrl.u32 %v1713, 7
    %v1715 = vsub.s32 0, %v1714
    %v1716 = vrot.slane %v1576, %v1715
    %v1719 = vlaneseq
    %v1720 = vshrl.u32 %v1719, 7
    %v1721 = vsub.s32 0, %v1720
    %v1722 = vrot.slane %v1591, %v1721
    %v1723 = vlaneseq
    %v1724 = vshrl.u32 %v1723, 7
    %v1725 = vsub.s32 0, %v1724
    %v1726 = vrot.slane %v1598, %v1725
    %v1729 = vlaneseq
    %v1730 = vshrl.u32 %v1729, 7
    %v1731 = vsub.s32 0, %v1730
    %v1732 = vrot.slane %v1613, %v1731
    %v1733 = vlaneseq
    %v1734 = vshrl.u32 %v1733, 7
    %v1735 = vsub.s32 0, %v1734
    %v1736 = vrot.slane %v1620, %v1735
    %v1739 = vlaneseq
    %v1740 = vshrl.u32 %v1739, 7
    %v1741 = vsub.s32 0, %v1740
    %v1742 = vrot.slane %v1635, %v1741
    %v1743 = vlaneseq
    %v1744 = vshrl.u32 %v1743, 7
    %v1745 = vsub.s32 0, %v1744
    %v1746 = vrot.slane %v1642, %v1745
    %v1749 = vlaneseq
    %v1750 = vshrl.u32 %v1749, 7
    %v1751 = vsub.s32 0, %v1750
    %v1752 = vrot.slane %v1657, %v1751
    %v1753 = vlaneseq
    %v1754 = vshrl.u32 %v1753, 7
    %v1755 = vsub.s32 0, %v1754
    %v1756 = vrot.slane %v1664, %v1755
    %v1759 = vlaneseq
    %v1760 = vshrl.u32 %v1759, 7
    %v1761 = vsub.s32 0, %v1760
    %v1762 = vrot.slane %v1679, %v1761
    %v1763 = vlaneseq
    %v1764 = vshrl.u32 %v1763, 7
    %v1765 = vsub.s32 0, %v1764
    %v1766 = vrot.slane %v1686, %v1765
    %v1769 = vlaneseq
    %v1770 = vshrl.u32 %v1769, 7
    %v1771 = vsub.s32 0, %v1770
    %v1772 = vrot.slane %v1701, %v1771
    %v1773 = vlaneseq
    %v1774 = vshrl.u32 %v1773, 7
    %v1775 = vsub.s32 0, %v1774
    %v1776 = vrot.slane %v1708, %v1775
    %vm1779 = vcmask 1040384
    %v1780 = vsel %vm1779, %v1545, %v1712
    %v1781 = vsel %vm1779, %v1552, %v1716
    %vm1782 = vcmask 1041408
    %v1783 = vsel %vm1782, %v1780, %v1722
    %v1784 = vsel %vm1782, %v1781, %v1726
    %vm1785 = vcmask 1042432
    %v1786 = vsel %vm1785, %v1783, %v1732
    %v1787 = vsel %vm1785, %v1784, %v1736
    %vm1788 = vcmask 1043456
    %v1789 = vsel %vm1788, %v1786, %v1742
    %v1790 = vsel %vm1788, %v1787, %v1746
    %vm1791 = vcmask 1044480
    %v1792 = vsel %vm1791, %v1789, %v1752
    %v1793 = vsel %vm1791, %v1790, %v1756
    %vm1794 = vcmask 1045504
    %v1795 = vsel %vm1794, %v1792, %v1762
    %v1796 = vsel %vm1794, %v1793, %v1766
    %vm1797 = vcmask 1046528
    %v1798 = vsel %vm1797, %v1795, %v1772
    %v1799 = vsel %vm1797, %v1796, %v1776
    %v1800 = vld [vmem:[#allocation5] sm:$0xff]
    %v1801 = vld [vmem:[#allocation5 + $0x8] sm:$0xff]
    %v1802 = vld [vmem:[#allocation5 + $0x10] sm:$0xff]
    %v1803 = vld [vmem:[#allocation5 + $0x18] sm:$0xff]
    %v1804 = vld [vmem:[#allocation5 + $0x20] sm:$0xff]
    %v1805 = vld [vmem:[#allocation5 + $0x28] sm:$0xff]
    %v1806 = vld [vmem:[#allocation5 + $0x30] sm:$0xff]
    %v1807 = vld [vmem:[#allocation5 + $0x38] sm:$0xff]
    %v1808 = vld [vmem:[#allocation5 + $0x40] sm:$0xff]
    %v1809 = vld [vmem:[#allocation5 + $0x48] sm:$0xff]
    %v1810 = vld [vmem:[#allocation5 + $0x50] sm:$0xff]
    %v1811 = vld [vmem:[#allocation5 + $0x58] sm:$0xff]
    %v1812 = vld [vmem:[#allocation5 + $0x60] sm:$0xff]
    %v1813 = vld [vmem:[#allocation5 + $0x68] sm:$0xff]
    %v1814 = vld [vmem:[#allocation5 + $0x70] sm:$0xff]
    %v1815 = vld [vmem:[#allocation5 + $0x78] sm:$0xff]
    %v1816 = vld [vmem:[%s8] sm:$0x3]
    %v1818 = vlaneseq
    %v1819 = vshrl.u32 %v1818, 7
    %v1820 = vsub.s32 0, %v1819
    %v1821 = vrot.slane %v1816, %v1820
    %v1822 = vlaneseq
    %v1823 = vshrl.u32 %v1822, 7
    %v1824 = vsub.s32 1, %v1823
    %v1825 = vrot.slane %v1816, %v1824
    %1830 = vrot.lane.b32.xlu0 %v1798, 64
    %v1831 = vpop.permute.xlu0 %1830
    %1832 = vrot.lane.b32.xlu0 %v1799, 64
    %v1833 = vpop.permute.xlu0 %1832
    %v1834 = vsel %vm218, %v1831, 0
    %v1836 = vsel %vm218, %v1833, 0
    %1838 = vmatprep.subr.mxu0 %v1801
    %1839 = vmatpush1.msra.mxu0 %v1800
    %1840 = vmatprep.subr.mxu0 %v1803
    %1841 = vmatpush1.msra.mxu0 %v1802
    %1842 = vmatprep.subr.mxu0 %v1805
    %1843 = vmatpush1.msra.mxu0 %v1804
    %1844 = vmatprep.subr.mxu0 %v1807
    %1845 = vmatpush1.msra.mxu0 %v1806
    %1846 = vmatprep.subr.mxu0 %v1809
    %1847 = vmatpush1.msra.mxu0 %v1808
    %1848 = vmatprep.subr.mxu0 %v1811
    %1849 = vmatpush1.msra.mxu0 %v1810
    %1850 = vmatprep.subr.mxu0 %v1813
    %1851 = vmatpush1.msra.mxu0 %v1812
    %1852 = vmatprep.subr.mxu0 %v1815
    %1853 = vmatpush1.msra.mxu0 %v1814
    %1854 = vmatprep.subr.mxu0 0.0
    %1855 = vmatpush1.msra.mxu0 0.0
    %1856 = vmatprep.subr.mxu0 0.0
    %1857 = vmatpush1.msra.mxu0 0.0
    %1858 = vmatprep.subr.mxu0 0.0
    %1859 = vmatpush1.msra.mxu0 0.0
    %1860 = vmatprep.subr.mxu0 0.0
    %1861 = vmatpush1.msra.mxu0 0.0
    %1862 = vmatprep.subr.mxu0 0.0
    %1863 = vmatpush1.msra.mxu0 0.0
    %1864 = vmatprep.subr.mxu0 0.0
    %1865 = vmatpush1.msra.mxu0 0.0
    %1866 = vmatprep.subr.mxu0 0.0
    %1867 = vmatpush1.msra.mxu0 0.0
    %1868 = vmatprep.subr.mxu0 0.0
    %1869 = vmatpush1.msra.mxu0 0.0
    %1870 = vmatprep.subr.mxu0 0.0
    %1871 = vmatpush1.msra.mxu0 0.0
    %1872 = vmatprep.subr.mxu0 0.0
    %1873 = vmatpush1.msra.mxu0 0.0
    %1874 = vmatprep.subr.mxu0 0.0
    %1875 = vmatpush1.msra.mxu0 0.0
    %1876 = vmatprep.subr.mxu0 0.0
    %1877 = vmatpush1.msra.mxu0 0.0
    %1878 = vmatprep.subr.mxu0 0.0
    %1879 = vmatpush1.msra.mxu0 0.0
    %1880 = vmatprep.subr.mxu0 0.0
    %1881 = vmatpush1.msra.mxu0 0.0
    %1882 = vmatprep.subr.mxu0 0.0
    %1883 = vmatpush1.msra.mxu0 0.0
    %1884 = vmatprep.subr.mxu0 0.0
    %1885 = vmatpush1.msra.mxu0 0.0
    %1886 = vmatprep.subr.mxu0 0.0
    %1887 = vmatpush1.msra.mxu0 0.0
    %1888 = vmatprep.subr.mxu0 0.0
    %1889 = vmatpush1.msra.mxu0 0.0
    %1890 = vmatprep.subr.mxu0 0.0
    %1891 = vmatpush1.msra.mxu0 0.0
    %1892 = vmatprep.subr.mxu0 0.0
    %1893 = vmatpush1.msra.mxu0 0.0
    %1894 = vmatprep.subr.mxu0 0.0
    %1895 = vmatpush1.msra.mxu0 0.0
    %1896 = vmatprep.subr.mxu0 0.0
    %1897 = vmatpush1.msra.mxu0 0.0
    %1898 = vmatprep.subr.mxu0 0.0
    %1899 = vmatpush1.msra.mxu0 0.0
    %1900 = vmatprep.subr.mxu0 0.0
    %1901 = vmatpush1.msra.mxu0 0.0
    %1902 = vmatprep.mubr.f32.mxu0 0.0
    %1903 = vmatmul.mubr.f32.gmra.mrb[0].mxu0 %v1834
    %v1904 = vpop.f32.mrb[0].mxu0
    %v1905 = vadd.f32 %v1821, %v1904
    %v1906 = vpop.f32.mrb[0].mxu0
    %v1907 = vadd.f32 %v1825, %v1906
    %1908 = vmatprep.mubr.f32.mxu0 0.0
    %1909 = vmatmul.mubr.f32.gmra.mrb[0].mxu0 %v1836
    %v1910 = vpop.f32.mrb[0].mxu0
    %v1911 = vadd.f32 %v1821, %v1910
    %v1912 = vpop.f32.mrb[0].mxu0
    %v1913 = vadd.f32 %v1825, %v1912
    %1914 = vdwg.mxu0
    %s1915 = scalar_lea.vmem %s1, 2
    %v1916 = vld [vmem:[%s1915] sm:$0x3]
    %s1917 = scalar_lea.vmem %s2, 2
    %v1918 = vld [vmem:[%s1917] sm:$0x3]
    %v1919 = vld [vmem:[#allocation7] sm:$0xff]
    %v1920 = vld [vmem:[#allocation7 + $0x8] sm:$0xff]
    %v1921 = vld [vmem:[#allocation7 + $0x10] sm:$0xff]
    %v1922 = vld [vmem:[#allocation7 + $0x18] sm:$0xff]
    %v1923 = vld [vmem:[#allocation7 + $0x20] sm:$0xff]
    %v1924 = vld [vmem:[#allocation7 + $0x28] sm:$0xff]
    %v1925 = vld [vmem:[#allocation7 + $0x30] sm:$0xff]
    %v1926 = vld [vmem:[#allocation7 + $0x38] sm:$0xff]
    %v1927 = vld [vmem:[#allocation7 + $0x40] sm:$0xff]
    %v1928 = vld [vmem:[#allocation7 + $0x48] sm:$0xff]
    %v1929 = vld [vmem:[#allocation7 + $0x50] sm:$0xff]
    %v1930 = vld [vmem:[#allocation7 + $0x58] sm:$0xff]
    %v1931 = vld [vmem:[#allocation7 + $0x60] sm:$0xff]
    %v1932 = vld [vmem:[#allocation7 + $0x68] sm:$0xff]
    %v1933 = vld [vmem:[#allocation7 + $0x70] sm:$0xff]
    %v1934 = vld [vmem:[#allocation7 + $0x78] sm:$0xff]
    %v1936 = vsel %vm218, %v1916, 0
    %1938 = vmatprep.subr.mxu0 %v1920
    %1939 = vmatpush1.msra.mxu0 %v1919
    %1940 = vmatprep.subr.mxu0 %v1922
    %1941 = vmatpush1.msra.mxu0 %v1921
    %1942 = vmatprep.subr.mxu0 %v1924
    %1943 = vmatpush1.msra.mxu0 %v1923
    %1944 = vmatprep.subr.mxu0 %v1926
    %1945 = vmatpush1.msra.mxu0 %v1925
    %1946 = vmatprep.subr.mxu0 %v1928
    %1947 = vmatpush1.msra.mxu0 %v1927
    %1948 = vmatprep.subr.mxu0 %v1930
    %1949 = vmatpush1.msra.mxu0 %v1929
    %1950 = vmatprep.subr.mxu0 %v1932
    %1951 = vmatpush1.msra.mxu0 %v1931
    %1952 = vmatprep.subr.mxu0 %v1934
    %1953 = vmatpush1.msra.mxu0 %v1933
    %1954 = vmatprep.subr.mxu0 0.0
    %1955 = vmatpush1.msra.mxu0 0.0
    %1956 = vmatprep.subr.mxu0 0.0
    %1957 = vmatpush1.msra.mxu0 0.0
    %1958 = vmatprep.subr.mxu0 0.0
    %1959 = vmatpush1.msra.mxu0 0.0
    %1960 = vmatprep.subr.mxu0 0.0
    %1961 = vmatpush1.msra.mxu0 0.0
    %1962 = vmatprep.subr.mxu0 0.0
    %1963 = vmatpush1.msra.mxu0 0.0
    %1964 = vmatprep.subr.mxu0 0.0
    %1965 = vmatpush1.msra.mxu0 0.0
    %1966 = vmatprep.subr.mxu0 0.0
    %1967 = vmatpush1.msra.mxu0 0.0
    %1968 = vmatprep.subr.mxu0 0.0
    %1969 = vmatpush1.msra.mxu0 0.0
    %1970 = vmatprep.subr.mxu0 0.0
    %1971 = vmatpush1.msra.mxu0 0.0
    %1972 = vmatprep.subr.mxu0 0.0
    %1973 = vmatpush1.msra.mxu0 0.0
    %1974 = vmatprep.subr.mxu0 0.0
    %1975 = vmatpush1.msra.mxu0 0.0
    %1976 = vmatprep.subr.mxu0 0.0
    %1977 = vmatpush1.msra.mxu0 0.0
    %1978 = vmatprep.subr.mxu0 0.0
    %1979 = vmatpush1.msra.mxu0 0.0
    %1980 = vmatprep.subr.mxu0 0.0
    %1981 = vmatpush1.msra.mxu0 0.0
    %1982 = vmatprep.subr.mxu0 0.0
    %1983 = vmatpush1.msra.mxu0 0.0
    %1984 = vmatprep.subr.mxu0 0.0
    %1985 = vmatpush1.msra.mxu0 0.0
    %1986 = vmatprep.subr.mxu0 0.0
    %1987 = vmatpush1.msra.mxu0 0.0
    %1988 = vmatprep.subr.mxu0 0.0
    %1989 = vmatpush1.msra.mxu0 0.0
    %1990 = vmatprep.subr.mxu0 0.0
    %1991 = vmatpush1.msra.mxu0 0.0
    %1992 = vmatprep.subr.mxu0 0.0
    %1993 = vmatpush1.msra.mxu0 0.0
    %1994 = vmatprep.subr.mxu0 0.0
    %1995 = vmatpush1.msra.mxu0 0.0
    %1996 = vmatprep.subr.mxu0 0.0
    %1997 = vmatpush1.msra.mxu0 0.0
    %1998 = vmatprep.subr.mxu0 0.0
    %1999 = vmatpush1.msra.mxu0 0.0
    %2000 = vmatprep.subr.mxu0 0.0
    %2001 = vmatpush1.msra.mxu0 0.0
    %2002 = vmatprep.mubr.f32.mxu0 0.0
    %2003 = vmatmul.mubr.f32.gmra.mrb[0].mxu0 %v1936
    %v2004 = vpop.f32.mrb[0].mxu0
    %v2005 = vadd.f32 0.0, %v2004
    %v2006 = vpop.f32.mrb[0].mxu0
    %v2007 = vadd.f32 0.0, %v2006
    %2008 = vdwg.mxu0
    %v2011 = vrot.slane %v2005, 1
    %v2012 = vrot.slane %v2007, 1
    %v2017 = vadd.f32 %v1905, %v2005
    %v2018 = vadd.f32 %v1907, %v2007
    %v2019 = vadd.f32 %v1911, %v2011
    %v2020 = vadd.f32 %v1913, %v2012
    %v2021 = vxor.u32 %v2017, 2147483648
    %v2022 = vxor.u32 %v2019, 2147483648
    %v2023 = vmul.f32 %v2021, 1.442695
    %v2024 = vpow.pop %v2023
    %v2025 = vmul.f32 %v2022, 1.442695
    %v2026 = vpow.pop %v2025
    %v2027 = vadd.f32 %v2024, 1.0
    %v2028 = vadd.f32 %v2026, 1.0
    %v2029 = vrcp.pop %v2027
    %v2030 = vmul.f32 1.0, %v2029
    %v2031 = vrcp.pop %v2028
    %v2032 = vmul.f32 1.0, %v2031
    %v2033 = vtanh.pop %v2018
    %v2034 = vtanh.pop %v2020
    %v2035 = vxor.u32 %v2018, 2147483648
    %v2036 = vxor.u32 %v2020, 2147483648
    %v2037 = vmul.f32 %v2035, 1.442695
    %v2038 = vpow.pop %v2037
    %v2039 = vmul.f32 %v2036, 1.442695
    %v2040 = vpow.pop %v2039
    %v2041 = vadd.f32 %v2038, 1.0
    %v2042 = vadd.f32 %v2040, 1.0
    %v2043 = vrcp.pop %v2041
    %v2044 = vmul.f32 1.0, %v2043
    %v2045 = vrcp.pop %v2042
    %v2046 = vmul.f32 1.0, %v2045
    %v2049 = vrot.slane %v2034, 7
    %v2050 = vsel %vm334, %v2049, %v2033
    %v2054 = vrot.slane %v2046, 7
    %v2055 = vsel %vm334, %v2054, %v2044
    %v2057 = vsel %vm93, %v2050, %v2055
    %v2059 = vrot.slane %v1918, 1
    %2060 = vrot.lane.b32.xlu0 %v1918, 64
    %v2061 = vpop.permute.xlu0 %2060
    %2062 = vrot.lane.b32.xlu0 %v2059, 64
    %v2063 = vpop.permute.xlu0 %2062
    %v2066 = vmul.f32 %v2030, %v2061
    %v2067 = vmul.f32 %v2032, %v2063
    %v2069 = vrot.slane %v2057, 1
    %v2072 = vmul.f32 %v2030, %v2057
    %v2073 = vmul.f32 %v2032, %v2069
    %2076 = vrot.lane.b32.xlu0 %v2072, 64
    %v2077 = vpop.permute.xlu0 %2076
    %2078 = vrot.lane.b32.xlu0 %v2073, 64
    %v2079 = vpop.permute.xlu0 %2078
    %v2082 = vadd.f32 %v2066, %v2077
    %v2083 = vadd.f32 %v2067, %v2079
    %v2084 = vtanh.pop %v2082
    %v2085 = vtanh.pop %v2083
    %v2088 = vrot.slane %v2085, 7
    %v2089 = vsel %vm334, %v2088, %v2084
    %v2091 = vmul.f32 %v2057, %v2089
    %2093 = vrot.lane.b32.xlu0 %v2091, 64
    %v2094 = vpop.permute.xlu0 %2093
    %v2095 = vsel %vm218, %v2094, 0
    %2097 = vmatprep.subr.mxu0 %v1920
    %2098 = vmatpush1.msra.mxu0 %v1919
    %2099 = vmatprep.subr.mxu0 %v1922
    %2100 = vmatpush1.msra.mxu0 %v1921
    %2101 = vmatprep.subr.mxu0 %v1924
    %2102 = vmatpush1.msra.mxu0 %v1923
    %2103 = vmatprep.subr.mxu0 %v1926
    %2104 = vmatpush1.msra.mxu0 %v1925
    %2105 = vmatprep.subr.mxu0 %v1928
    %2106 = vmatpush1.msra.mxu0 %v1927
    %2107 = vmatprep.subr.mxu0 %v1930
    %2108 = vmatpush1.msra.mxu0 %v1929
    %2109 = vmatprep.subr.mxu0 %v1932
    %2110 = vmatpush1.msra.mxu0 %v1931
    %2111 = vmatprep.subr.mxu0 %v1934
    %2112 = vmatpush1.msra.mxu0 %v1933
    %2113 = vmatprep.subr.mxu0 0.0
    %2114 = vmatpush1.msra.mxu0 0.0
    %2115 = vmatprep.subr.mxu0 0.0
    %2116 = vmatpush1.msra.mxu0 0.0
    %2117 = vmatprep.subr.mxu0 0.0
    %2118 = vmatpush1.msra.mxu0 0.0
    %2119 = vmatprep.subr.mxu0 0.0
    %2120 = vmatpush1.msra.mxu0 0.0
    %2121 = vmatprep.subr.mxu0 0.0
    %2122 = vmatpush1.msra.mxu0 0.0
    %2123 = vmatprep.subr.mxu0 0.0
    %2124 = vmatpush1.msra.mxu0 0.0
    %2125 = vmatprep.subr.mxu0 0.0
    %2126 = vmatpush1.msra.mxu0 0.0
    %2127 = vmatprep.subr.mxu0 0.0
    %2128 = vmatpush1.msra.mxu0 0.0
    %2129 = vmatprep.subr.mxu0 0.0
    %2130 = vmatpush1.msra.mxu0 0.0
    %2131 = vmatprep.subr.mxu0 0.0
    %2132 = vmatpush1.msra.mxu0 0.0
    %2133 = vmatprep.subr.mxu0 0.0
    %2134 = vmatpush1.msra.mxu0 0.0
    %2135 = vmatprep.subr.mxu0 0.0
    %2136 = vmatpush1.msra.mxu0 0.0
    %2137 = vmatprep.subr.mxu0 0.0
    %2138 = vmatpush1.msra.mxu0 0.0
    %2139 = vmatprep.subr.mxu0 0.0
    %2140 = vmatpush1.msra.mxu0 0.0
    %2141 = vmatprep.subr.mxu0 0.0
    %2142 = vmatpush1.msra.mxu0 0.0
    %2143 = vmatprep.subr.mxu0 0.0
    %2144 = vmatpush1.msra.mxu0 0.0
    %2145 = vmatprep.subr.mxu0 0.0
    %2146 = vmatpush1.msra.mxu0 0.0
    %2147 = vmatprep.subr.mxu0 0.0
    %2148 = vmatpush1.msra.mxu0 0.0
    %2149 = vmatprep.subr.mxu0 0.0
    %2150 = vmatpush1.msra.mxu0 0.0
    %2151 = vmatprep.subr.mxu0 0.0
    %2152 = vmatpush1.msra.mxu0 0.0
    %2153 = vmatprep.subr.mxu0 0.0
    %2154 = vmatpush1.msra.mxu0 0.0
    %2155 = vmatprep.subr.mxu0 0.0
    %2156 = vmatpush1.msra.mxu0 0.0
    %2157 = vmatprep.subr.mxu0 0.0
    %2158 = vmatpush1.msra.mxu0 0.0
    %2159 = vmatprep.subr.mxu0 0.0
    %2160 = vmatpush1.msra.mxu0 0.0
    %2161 = vmatprep.mubr.f32.mxu0 0.0
    %2162 = vmatmul.mubr.f32.gmra.mrb[0].mxu0 %v2095
    %v2163 = vpop.f32.mrb[0].mxu0
    %v2164 = vadd.f32 0.0, %v2163
    %v2165 = vpop.f32.mrb[0].mxu0
    %v2166 = vadd.f32 0.0, %v2165
    %2167 = vdwg.mxu0
    %v2170 = vrot.slane %v2164, 7
    %v2171 = vrot.slane %v2166, 7
    %v2176 = vadd.f32 %v1905, %v2170
    %v2177 = vadd.f32 %v1907, %v2171
    %v2178 = vadd.f32 %v1911, %v2164
    %v2179 = vadd.f32 %v1913, %v2166
    %v2180 = vxor.u32 %v2176, 2147483648
    %v2181 = vxor.u32 %v2178, 2147483648
    %v2182 = vmul.f32 %v2180, 1.442695
    %v2183 = vpow.pop %v2182
    %v2184 = vmul.f32 %v2181, 1.442695
    %v2185 = vpow.pop %v2184
    %v2186 = vadd.f32 %v2183, 1.0
    %v2187 = vadd.f32 %v2185, 1.0
    %v2188 = vrcp.pop %v2186
    %v2189 = vmul.f32 1.0, %v2188
    %v2190 = vrcp.pop %v2187
    %v2191 = vmul.f32 1.0, %v2190
    %v2192 = vtanh.pop %v2177
    %v2193 = vtanh.pop %v2179
    %v2194 = vxor.u32 %v2177, 2147483648
    %v2195 = vxor.u32 %v2179, 2147483648
    %v2196 = vmul.f32 %v2194, 1.442695
    %v2197 = vpow.pop %v2196
    %v2198 = vmul.f32 %v2195, 1.442695
    %v2199 = vpow.pop %v2198
    %v2200 = vadd.f32 %v2197, 1.0
    %v2201 = vadd.f32 %v2199, 1.0
    %v2202 = vrcp.pop %v2200
    %v2203 = vmul.f32 1.0, %v2202
    %v2204 = vrcp.pop %v2201
    %v2205 = vmul.f32 1.0, %v2204
    %v2208 = vrot.slane %v2192, 1
    %v2209 = vsel %vm334, %v2193, %v2208
    %v2213 = vrot.slane %v2203, 1
    %v2214 = vsel %vm334, %v2205, %v2213
    %v2216 = vsel %vm93, %v2209, %v2214
    %v2219 = vrot.slane %v2082, 7
    %v2220 = vrot.slane %v2083, 7
    %v2223 = vmul.f32 %v2189, %v2219
    %v2224 = vmul.f32 %v2191, %v2220
    %v2226 = vrot.slane %v2216, 7
    %v2229 = vmul.f32 %v2189, %v2226
    %v2230 = vmul.f32 %v2191, %v2216
    %2233 = vrot.lane.b32.xlu0 %v2229, 64
    %v2234 = vpop.permute.xlu0 %2233
    %2235 = vrot.lane.b32.xlu0 %v2230, 64
    %v2236 = vpop.permute.xlu0 %2235
    %v2239 = vadd.f32 %v2223, %v2234
    %v2240 = vadd.f32 %v2224, %v2236
    %v2241 = vtanh.pop %v2239
    %v2242 = vtanh.pop %v2240
    %v2245 = vrot.slane %v2241, 1
    %v2246 = vsel %vm334, %v2242, %v2245
    %v2248 = vmul.f32 %v2216, %v2246
    %2250 = vrot.lane.b32.xlu0 %v2248, 64
    %v2251 = vpop.permute.xlu0 %2250
    %v2252 = vsel %vm218, %v2251, 0
    %2254 = vmatprep.subr.mxu0 %v1920
    %2255 = vmatpush1.msra.mxu0 %v1919
    %2256 = vmatprep.subr.mxu0 %v1922
    %2257 = vmatpush1.msra.mxu0 %v1921
    %2258 = vmatprep.subr.mxu0 %v1924
    %2259 = vmatpush1.msra.mxu0 %v1923
    %2260 = vmatprep.subr.mxu0 %v1926
    %2261 = vmatpush1.msra.mxu0 %v1925
    %2262 = vmatprep.subr.mxu0 %v1928
    %2263 = vmatpush1.msra.mxu0 %v1927
    %2264 = vmatprep.subr.mxu0 %v1930
    %2265 = vmatpush1.msra.mxu0 %v1929
    %2266 = vmatprep.subr.mxu0 %v1932
    %2267 = vmatpush1.msra.mxu0 %v1931
    %2268 = vmatprep.subr.mxu0 %v1934
    %2269 = vmatpush1.msra.mxu0 %v1933
    %2270 = vmatprep.subr.mxu0 0.0
    %2271 = vmatpush1.msra.mxu0 0.0
    %2272 = vmatprep.subr.mxu0 0.0
    %2273 = vmatpush1.msra.mxu0 0.0
    %2274 = vmatprep.subr.mxu0 0.0
    %2275 = vmatpush1.msra.mxu0 0.0
    %2276 = vmatprep.subr.mxu0 0.0
    %2277 = vmatpush1.msra.mxu0 0.0
    %2278 = vmatprep.subr.mxu0 0.0
    %2279 = vmatpush1.msra.mxu0 0.0
    %2280 = vmatprep.subr.mxu0 0.0
    %2281 = vmatpush1.msra.mxu0 0.0
    %2282 = vmatprep.subr.mxu0 0.0
    %2283 = vmatpush1.msra.mxu0 0.0
    %2284 = vmatprep.subr.mxu0 0.0
    %2285 = vmatpush1.msra.mxu0 0.0
    %2286 = vmatprep.subr.mxu0 0.0
    %2287 = vmatpush1.msra.mxu0 0.0
    %2288 = vmatprep.subr.mxu0 0.0
    %2289 = vmatpush1.msra.mxu0 0.0
    %2290 = vmatprep.subr.mxu0 0.0
    %2291 = vmatpush1.msra.mxu0 0.0
    %2292 = vmatprep.subr.mxu0 0.0
    %2293 = vmatpush1.msra.mxu0 0.0
    %2294 = vmatprep.subr.mxu0 0.0
    %2295 = vmatpush1.msra.mxu0 0.0
    %2296 = vmatprep.subr.mxu0 0.0
    %2297 = vmatpush1.msra.mxu0 0.0
    %2298 = vmatprep.subr.mxu0 0.0
    %2299 = vmatpush1.msra.mxu0 0.0
    %2300 = vmatprep.subr.mxu0 0.0
    %2301 = vmatpush1.msra.mxu0 0.0
    %2302 = vmatprep.subr.mxu0 0.0
    %2303 = vmatpush1.msra.mxu0 0.0
    %2304 = vmatprep.subr.mxu0 0.0
    %2305 = vmatpush1.msra.mxu0 0.0
    %2306 = vmatprep.subr.mxu0 0.0
    %2307 = vmatpush1.msra.mxu0 0.0
    %2308 = vmatprep.subr.mxu0 0.0
    %2309 = vmatpush1.msra.mxu0 0.0
    %2310 = vmatprep.subr.mxu0 0.0
    %2311 = vmatpush1.msra.mxu0 0.0
    %2312 = vmatprep.subr.mxu0 0.0
    %2313 = vmatpush1.msra.mxu0 0.0
    %2314 = vmatprep.subr.mxu0 0.0
    %2315 = vmatpush1.msra.mxu0 0.0
    %2316 = vmatprep.subr.mxu0 0.0
    %2317 = vmatpush1.msra.mxu0 0.0
    %2318 = vmatprep.mubr.f32.mxu0 0.0
    %2319 = vmatmul.mubr.f32.gmra.mrb[0].mxu0 %v2252
    %v2320 = vpop.f32.mrb[0].mxu0
    %v2321 = vadd.f32 0.0, %v2320
    %v2322 = vpop.f32.mrb[0].mxu0
    %v2323 = vadd.f32 0.0, %v2322
    %2324 = vdwg.mxu0
    %v2327 = vrot.slane %v2321, 6
    %v2328 = vrot.slane %v2323, 6
    %v2329 = vrot.slane %v2321, 7
    %v2330 = vrot.slane %v2323, 7
    %v2335 = vadd.f32 %v1905, %v2327
    %v2336 = vadd.f32 %v1907, %v2328
    %v2337 = vadd.f32 %v1911, %v2329
    %v2338 = vadd.f32 %v1913, %v2330
    %v2339 = vxor.u32 %v2335, 2147483648
    %v2340 = vxor.u32 %v2337, 2147483648
    %v2341 = vmul.f32 %v2339, 1.442695
    %v2342 = vpow.pop %v2341
    %v2343 = vmul.f32 %v2340, 1.442695
    %v2344 = vpow.pop %v2343
    %v2345 = vadd.f32 %v2342, 1.0
    %v2346 = vadd.f32 %v2344, 1.0
    %v2347 = vrcp.pop %v2345
    %v2348 = vmul.f32 1.0, %v2347
    %v2349 = vrcp.pop %v2346
    %v2350 = vmul.f32 1.0, %v2349
    %v2351 = vtanh.pop %v2336
    %v2352 = vtanh.pop %v2338
    %v2353 = vxor.u32 %v2336, 2147483648
    %v2354 = vxor.u32 %v2338, 2147483648
    %v2355 = vmul.f32 %v2353, 1.442695
    %v2356 = vpow.pop %v2355
    %v2357 = vmul.f32 %v2354, 1.442695
    %v2358 = vpow.pop %v2357
    %v2359 = vadd.f32 %v2356, 1.0
    %v2360 = vadd.f32 %v2358, 1.0
    %v2361 = vrcp.pop %v2359
    %v2362 = vmul.f32 1.0, %v2361
    %v2363 = vrcp.pop %v2360
    %v2364 = vmul.f32 1.0, %v2363
    %v2367 = vrot.slane %v2351, 2
    %v2368 = vrot.slane %v2352, 1
    %v2369 = vsel %vm334, %v2368, %v2367
    %v2373 = vrot.slane %v2362, 2
    %v2374 = vrot.slane %v2364, 1
    %v2375 = vsel %vm334, %v2374, %v2373
    %v2377 = vsel %vm93, %v2369, %v2375
    %v2380 = vrot.slane %v2239, 7
    %v2381 = vrot.slane %v2240, 7
    %v2384 = vmul.f32 %v2348, %v2380
    %v2385 = vmul.f32 %v2350, %v2381
    %v2387 = vrot.slane %v2377, 6
    %v2388 = vrot.slane %v2377, 7
    %v2391 = vmul.f32 %v2348, %v2387
    %v2392 = vmul.f32 %v2350, %v2388
    %2395 = vrot.lane.b32.xlu0 %v2391, 64
    %v2396 = vpop.permute.xlu0 %2395
    %2397 = vrot.lane.b32.xlu0 %v2392, 64
    %v2398 = vpop.permute.xlu0 %2397
    %v2401 = vadd.f32 %v2384, %v2396
    %v2402 = vadd.f32 %v2385, %v2398
    %v2403 = vtanh.pop %v2401
    %v2404 = vtanh.pop %v2402
    %v2407 = vrot.slane %v2403, 2
    %v2408 = vrot.slane %v2404, 1
    %v2409 = vsel %vm334, %v2408, %v2407
    %v2411 = vmul.f32 %v2377, %v2409
    %2413 = vrot.lane.b32.xlu0 %v2411, 64
    %v2414 = vpop.permute.xlu0 %2413
    %v2415 = vsel %vm218, %v2414, 0
    %2417 = vmatprep.subr.mxu0 %v1920
    %2418 = vmatpush1.msra.mxu0 %v1919
    %2419 = vmatprep.subr.mxu0 %v1922
    %2420 = vmatpush1.msra.mxu0 %v1921
    %2421 = vmatprep.subr.mxu0 %v1924
    %2422 = vmatpush1.msra.mxu0 %v1923
    %2423 = vmatprep.subr.mxu0 %v1926
    %2424 = vmatpush1.msra.mxu0 %v1925
    %2425 = vmatprep.subr.mxu0 %v1928
    %2426 = vmatpush1.msra.mxu0 %v1927
    %2427 = vmatprep.subr.mxu0 %v1930
    %2428 = vmatpush1.msra.mxu0 %v1929
    %2429 = vmatprep.subr.mxu0 %v1932
    %2430 = vmatpush1.msra.mxu0 %v1931
    %2431 = vmatprep.subr.mxu0 %v1934
    %2432 = vmatpush1.msra.mxu0 %v1933
    %2433 = vmatprep.subr.mxu0 0.0
    %2434 = vmatpush1.msra.mxu0 0.0
    %2435 = vmatprep.subr.mxu0 0.0
    %2436 = vmatpush1.msra.mxu0 0.0
    %2437 = vmatprep.subr.mxu0 0.0
    %2438 = vmatpush1.msra.mxu0 0.0
    %2439 = vmatprep.subr.mxu0 0.0
    %2440 = vmatpush1.msra.mxu0 0.0
    %2441 = vmatprep.subr.mxu0 0.0
    %2442 = vmatpush1.msra.mxu0 0.0
    %2443 = vmatprep.subr.mxu0 0.0
    %2444 = vmatpush1.msra.mxu0 0.0
    %2445 = vmatprep.subr.mxu0 0.0
    %2446 = vmatpush1.msra.mxu0 0.0
    %2447 = vmatprep.subr.mxu0 0.0
    %2448 = vmatpush1.msra.mxu0 0.0
    %2449 = vmatprep.subr.mxu0 0.0
    %2450 = vmatpush1.msra.mxu0 0.0
    %2451 = vmatprep.subr.mxu0 0.0
    %2452 = vmatpush1.msra.mxu0 0.0
    %2453 = vmatprep.subr.mxu0 0.0
    %2454 = vmatpush1.msra.mxu0 0.0
    %2455 = vmatprep.subr.mxu0 0.0
    %2456 = vmatpush1.msra.mxu0 0.0
    %2457 = vmatprep.subr.mxu0 0.0
    %2458 = vmatpush1.msra.mxu0 0.0
    %2459 = vmatprep.subr.mxu0 0.0
    %2460 = vmatpush1.msra.mxu0 0.0
    %2461 = vmatprep.subr.mxu0 0.0
    %2462 = vmatpush1.msra.mxu0 0.0
    %2463 = vmatprep.subr.mxu0 0.0
    %2464 = vmatpush1.msra.mxu0 0.0
    %2465 = vmatprep.subr.mxu0 0.0
    %2466 = vmatpush1.msra.mxu0 0.0
    %2467 = vmatprep.subr.mxu0 0.0
    %2468 = vmatpush1.msra.mxu0 0.0
    %2469 = vmatprep.subr.mxu0 0.0
    %2470 = vmatpush1.msra.mxu0 0.0
    %2471 = vmatprep.subr.mxu0 0.0
    %2472 = vmatpush1.msra.mxu0 0.0
    %2473 = vmatprep.subr.mxu0 0.0
    %2474 = vmatpush1.msra.mxu0 0.0
    %2475 = vmatprep.subr.mxu0 0.0
    %2476 = vmatpush1.msra.mxu0 0.0
    %2477 = vmatprep.subr.mxu0 0.0
    %2478 = vmatpush1.msra.mxu0 0.0
    %2479 = vmatprep.subr.mxu0 0.0
    %2480 = vmatpush1.msra.mxu0 0.0
    %2481 = vmatprep.mubr.f32.mxu0 0.0
    %2482 = vmatmul.mubr.f32.gmra.mrb[0].mxu0 %v2415
    %v2483 = vpop.f32.mrb[0].mxu0
    %v2484 = vadd.f32 0.0, %v2483
    %v2485 = vpop.f32.mrb[0].mxu0
    %v2486 = vadd.f32 0.0, %v2485
    %2487 = vdwg.mxu0
    %v2490 = vrot.slane %v2484, 5
    %v2491 = vrot.slane %v2486, 5
    %v2492 = vrot.slane %v2484, 6
    %v2493 = vrot.slane %v2486, 6
    %v2498 = vadd.f32 %v1905, %v2490
    %v2499 = vadd.f32 %v1907, %v2491
    %v2500 = vadd.f32 %v1911, %v2492
    %v2501 = vadd.f32 %v1913, %v2493
    %v2502 = vxor.u32 %v2498, 2147483648
    %v2503 = vxor.u32 %v2500, 2147483648
    %v2504 = vmul.f32 %v2502, 1.442695
    %v2505 = vpow.pop %v2504
    %v2506 = vmul.f32 %v2503, 1.442695
    %v2507 = vpow.pop %v2506
    %v2508 = vadd.f32 %v2505, 1.0
    %v2509 = vadd.f32 %v2507, 1.0
    %v2510 = vrcp.pop %v2508
    %v2511 = vmul.f32 1.0, %v2510
    %v2512 = vrcp.pop %v2509
    %v2513 = vmul.f32 1.0, %v2512
    %v2514 = vtanh.pop %v2499
    %v2515 = vtanh.pop %v2501
    %v2516 = vxor.u32 %v2499, 2147483648
    %v2517 = vxor.u32 %v2501, 2147483648
    %v2518 = vmul.f32 %v2516, 1.442695
    %v2519 = vpow.pop %v2518
    %v2520 = vmul.f32 %v2517, 1.442695
    %v2521 = vpow.pop %v2520
    %v2522 = vadd.f32 %v2519, 1.0
    %v2523 = vadd.f32 %v2521, 1.0
    %v2524 = vrcp.pop %v2522
    %v2525 = vmul.f32 1.0, %v2524
    %v2526 = vrcp.pop %v2523
    %v2527 = vmul.f32 1.0, %v2526
    %v2530 = vrot.slane %v2514, 3
    %v2531 = vrot.slane %v2515, 2
    %v2532 = vsel %vm334, %v2531, %v2530
    %v2536 = vrot.slane %v2525, 3
    %v2537 = vrot.slane %v2527, 2
    %v2538 = vsel %vm334, %v2537, %v2536
    %v2540 = vsel %vm93, %v2532, %v2538
    %v2543 = vrot.slane %v2401, 7
    %v2544 = vrot.slane %v2402, 7
    %v2547 = vmul.f32 %v2511, %v2543
    %v2548 = vmul.f32 %v2513, %v2544
    %v2550 = vrot.slane %v2540, 5
    %v2551 = vrot.slane %v2540, 6
    %v2554 = vmul.f32 %v2511, %v2550
    %v2555 = vmul.f32 %v2513, %v2551
    %2558 = vrot.lane.b32.xlu0 %v2554, 64
    %v2559 = vpop.permute.xlu0 %2558
    %2560 = vrot.lane.b32.xlu0 %v2555, 64
    %v2561 = vpop.permute.xlu0 %2560
    %v2564 = vadd.f32 %v2547, %v2559
    %v2565 = vadd.f32 %v2548, %v2561
    %v2566 = vtanh.pop %v2564
    %v2567 = vtanh.pop %v2565
    %v2570 = vrot.slane %v2566, 3
    %v2571 = vrot.slane %v2567, 2
    %v2572 = vsel %vm334, %v2571, %v2570
    %v2574 = vmul.f32 %v2540, %v2572
    %2576 = vrot.lane.b32.xlu0 %v2574, 64
    %v2577 = vpop.permute.xlu0 %2576
    %v2578 = vsel %vm218, %v2577, 0
    %2580 = vmatprep.subr.mxu0 %v1920
    %2581 = vmatpush1.msra.mxu0 %v1919
    %2582 = vmatprep.subr.mxu0 %v1922
    %2583 = vmatpush1.msra.mxu0 %v1921
    %2584 = vmatprep.subr.mxu0 %v1924
    %2585 = vmatpush1.msra.mxu0 %v1923
    %2586 = vmatprep.subr.mxu0 %v1926
    %2587 = vmatpush1.msra.mxu0 %v1925
    %2588 = vmatprep.subr.mxu0 %v1928
    %2589 = vmatpush1.msra.mxu0 %v1927
    %2590 = vmatprep.subr.mxu0 %v1930
    %2591 = vmatpush1.msra.mxu0 %v1929
    %2592 = vmatprep.subr.mxu0 %v1932
    %2593 = vmatpush1.msra.mxu0 %v1931
    %2594 = vmatprep.subr.mxu0 %v1934
    %2595 = vmatpush1.msra.mxu0 %v1933
    %2596 = vmatprep.subr.mxu0 0.0
    %2597 = vmatpush1.msra.mxu0 0.0
    %2598 = vmatprep.subr.mxu0 0.0
    %2599 = vmatpush1.msra.mxu0 0.0
    %2600 = vmatprep.subr.mxu0 0.0
    %2601 = vmatpush1.msra.mxu0 0.0
    %2602 = vmatprep.subr.mxu0 0.0
    %2603 = vmatpush1.msra.mxu0 0.0
    %2604 = vmatprep.subr.mxu0 0.0
    %2605 = vmatpush1.msra.mxu0 0.0
    %2606 = vmatprep.subr.mxu0 0.0
    %2607 = vmatpush1.msra.mxu0 0.0
    %2608 = vmatprep.subr.mxu0 0.0
    %2609 = vmatpush1.msra.mxu0 0.0
    %2610 = vmatprep.subr.mxu0 0.0
    %2611 = vmatpush1.msra.mxu0 0.0
    %2612 = vmatprep.subr.mxu0 0.0
    %2613 = vmatpush1.msra.mxu0 0.0
    %2614 = vmatprep.subr.mxu0 0.0
    %2615 = vmatpush1.msra.mxu0 0.0
    %2616 = vmatprep.subr.mxu0 0.0
    %2617 = vmatpush1.msra.mxu0 0.0
    %2618 = vmatprep.subr.mxu0 0.0
    %2619 = vmatpush1.msra.mxu0 0.0
    %2620 = vmatprep.subr.mxu0 0.0
    %2621 = vmatpush1.msra.mxu0 0.0
    %2622 = vmatprep.subr.mxu0 0.0
    %2623 = vmatpush1.msra.mxu0 0.0
    %2624 = vmatprep.subr.mxu0 0.0
    %2625 = vmatpush1.msra.mxu0 0.0
    %2626 = vmatprep.subr.mxu0 0.0
    %2627 = vmatpush1.msra.mxu0 0.0
    %2628 = vmatprep.subr.mxu0 0.0
    %2629 = vmatpush1.msra.mxu0 0.0
    %2630 = vmatprep.subr.mxu0 0.0
    %2631 = vmatpush1.msra.mxu0 0.0
    %2632 = vmatprep.subr.mxu0 0.0
    %2633 = vmatpush1.msra.mxu0 0.0
    %2634 = vmatprep.subr.mxu0 0.0
    %2635 = vmatpush1.msra.mxu0 0.0
    %2636 = vmatprep.subr.mxu0 0.0
    %2637 = vmatpush1.msra.mxu0 0.0
    %2638 = vmatprep.subr.mxu0 0.0
    %2639 = vmatpush1.msra.mxu0 0.0
    %2640 = vmatprep.subr.mxu0 0.0
    %2641 = vmatpush1.msra.mxu0 0.0
    %2642 = vmatprep.subr.mxu0 0.0
    %2643 = vmatpush1.msra.mxu0 0.0
    %2644 = vmatprep.mubr.f32.mxu0 0.0
    %2645 = vmatmul.mubr.f32.gmra.mrb[0].mxu0 %v2578
    %v2646 = vpop.f32.mrb[0].mxu0
    %v2647 = vadd.f32 0.0, %v2646
    %v2648 = vpop.f32.mrb[0].mxu0
    %v2649 = vadd.f32 0.0, %v2648
    %2650 = vdwg.mxu0
    %v2653 = vrot.slane %v2647, 4
    %v2654 = vrot.slane %v2649, 4
    %v2655 = vrot.slane %v2647, 5
    %v2656 = vrot.slane %v2649, 5
    %v2661 = vadd.f32 %v1905, %v2653
    %v2662 = vadd.f32 %v1907, %v2654
    %v2663 = vadd.f32 %v1911, %v2655
    %v2664 = vadd.f32 %v1913, %v2656
    %v2665 = vxor.u32 %v2661, 2147483648
    %v2666 = vxor.u32 %v2663, 2147483648
    %v2667 = vmul.f32 %v2665, 1.442695
    %v2668 = vpow.pop %v2667
    %v2669 = vmul.f32 %v2666, 1.442695
    %v2670 = vpow.pop %v2669
    %v2671 = vadd.f32 %v2668, 1.0
    %v2672 = vadd.f32 %v2670, 1.0
    %v2673 = vrcp.pop %v2671
    %v2674 = vmul.f32 1.0, %v2673
    %v2675 = vrcp.pop %v2672
    %v2676 = vmul.f32 1.0, %v2675
    %v2677 = vtanh.pop %v2662
    %v2678 = vtanh.pop %v2664
    %v2679 = vxor.u32 %v2662, 2147483648
    %v2680 = vxor.u32 %v2664, 2147483648
    %v2681 = vmul.f32 %v2679, 1.442695
    %v2682 = vpow.pop %v2681
    %v2683 = vmul.f32 %v2680, 1.442695
    %v2684 = vpow.pop %v2683
    %v2685 = vadd.f32 %v2682, 1.0
    %v2686 = vadd.f32 %v2684, 1.0
    %v2687 = vrcp.pop %v2685
    %v2688 = vmul.f32 1.0, %v2687
    %v2689 = vrcp.pop %v2686
    %v2690 = vmul.f32 1.0, %v2689
    %v2693 = vrot.slane %v2677, 4
    %v2694 = vrot.slane %v2678, 3
    %v2695 = vsel %vm334, %v2694, %v2693
    %v2699 = vrot.slane %v2688, 4
    %v2700 = vrot.slane %v2690, 3
    %v2701 = vsel %vm334, %v2700, %v2699
    %v2703 = vsel %vm93, %v2695, %v2701
    %v2706 = vrot.slane %v2564, 7
    %v2707 = vrot.slane %v2565, 7
    %v2710 = vmul.f32 %v2674, %v2706
    %v2711 = vmul.f32 %v2676, %v2707
    %v2713 = vrot.slane %v2703, 4
    %v2714 = vrot.slane %v2703, 5
    %v2717 = vmul.f32 %v2674, %v2713
    %v2718 = vmul.f32 %v2676, %v2714
    %2721 = vrot.lane.b32.xlu0 %v2717, 64
    %v2722 = vpop.permute.xlu0 %2721
    %2723 = vrot.lane.b32.xlu0 %v2718, 64
    %v2724 = vpop.permute.xlu0 %2723
    %v2727 = vadd.f32 %v2710, %v2722
    %v2728 = vadd.f32 %v2711, %v2724
    %v2729 = vtanh.pop %v2727
    %v2730 = vtanh.pop %v2728
    %v2733 = vrot.slane %v2729, 4
    %v2734 = vrot.slane %v2730, 3
    %v2735 = vsel %vm334, %v2734, %v2733
    %v2737 = vmul.f32 %v2703, %v2735
    %2739 = vrot.lane.b32.xlu0 %v2737, 64
    %v2740 = vpop.permute.xlu0 %2739
    %v2741 = vsel %vm218, %v2740, 0
    %2743 = vmatprep.subr.mxu0 %v1920
    %2744 = vmatpush1.msra.mxu0 %v1919
    %2745 = vmatprep.subr.mxu0 %v1922
    %2746 = vmatpush1.msra.mxu0 %v1921
    %2747 = vmatprep.subr.mxu0 %v1924
    %2748 = vmatpush1.msra.mxu0 %v1923
    %2749 = vmatprep.subr.mxu0 %v1926
    %2750 = vmatpush1.msra.mxu0 %v1925
    %2751 = vmatprep.subr.mxu0 %v1928
    %2752 = vmatpush1.msra.mxu0 %v1927
    %2753 = vmatprep.subr.mxu0 %v1930
    %2754 = vmatpush1.msra.mxu0 %v1929
    %2755 = vmatprep.subr.mxu0 %v1932
    %2756 = vmatpush1.msra.mxu0 %v1931
    %2757 = vmatprep.subr.mxu0 %v1934
    %2758 = vmatpush1.msra.mxu0 %v1933
    %2759 = vmatprep.subr.mxu0 0.0
    %2760 = vmatpush1.msra.mxu0 0.0
    %2761 = vmatprep.subr.mxu0 0.0
    %2762 = vmatpush1.msra.mxu0 0.0
    %2763 = vmatprep.subr.mxu0 0.0
    %2764 = vmatpush1.msra.mxu0 0.0
    %2765 = vmatprep.subr.mxu0 0.0
    %2766 = vmatpush1.msra.mxu0 0.0
    %2767 = vmatprep.subr.mxu0 0.0
    %2768 = vmatpush1.msra.mxu0 0.0
    %2769 = vmatprep.subr.mxu0 0.0
    %2770 = vmatpush1.msra.mxu0 0.0
    %2771 = vmatprep.subr.mxu0 0.0
    %2772 = vmatpush1.msra.mxu0 0.0
    %2773 = vmatprep.subr.mxu0 0.0
    %2774 = vmatpush1.msra.mxu0 0.0
    %2775 = vmatprep.subr.mxu0 0.0
    %2776 = vmatpush1.msra.mxu0 0.0
    %2777 = vmatprep.subr.mxu0 0.0
    %2778 = vmatpush1.msra.mxu0 0.0
    %2779 = vmatprep.subr.mxu0 0.0
    %2780 = vmatpush1.msra.mxu0 0.0
    %2781 = vmatprep.subr.mxu0 0.0
    %2782 = vmatpush1.msra.mxu0 0.0
    %2783 = vmatprep.subr.mxu0 0.0
    %2784 = vmatpush1.msra.mxu0 0.0
    %2785 = vmatprep.subr.mxu0 0.0
    %2786 = vmatpush1.msra.mxu0 0.0
    %2787 = vmatprep.subr.mxu0 0.0
    %2788 = vmatpush1.msra.mxu0 0.0
    %2789 = vmatprep.subr.mxu0 0.0
    %2790 = vmatpush1.msra.mxu0 0.0
    %2791 = vmatprep.subr.mxu0 0.0
    %2792 = vmatpush1.msra.mxu0 0.0
    %2793 = vmatprep.subr.mxu0 0.0
    %2794 = vmatpush1.msra.mxu0 0.0
    %2795 = vmatprep.subr.mxu0 0.0
    %2796 = vmatpush1.msra.mxu0 0.0
    %2797 = vmatprep.subr.mxu0 0.0
    %2798 = vmatpush1.msra.mxu0 0.0
    %2799 = vmatprep.subr.mxu0 0.0
    %2800 = vmatpush1.msra.mxu0 0.0
    %2801 = vmatprep.subr.mxu0 0.0
    %2802 = vmatpush1.msra.mxu0 0.0
    %2803 = vmatprep.subr.mxu0 0.0
    %2804 = vmatpush1.msra.mxu0 0.0
    %2805 = vmatprep.subr.mxu0 0.0
    %2806 = vmatpush1.msra.mxu0 0.0
    %2807 = vmatprep.mubr.f32.mxu0 0.0
    %2808 = vmatmul.mubr.f32.gmra.mrb[0].mxu0 %v2741
    %v2809 = vpop.f32.mrb[0].mxu0
    %v2810 = vadd.f32 0.0, %v2809
    %v2811 = vpop.f32.mrb[0].mxu0
    %v2812 = vadd.f32 0.0, %v2811
    %2813 = vdwg.mxu0
    %v2816 = vrot.slane %v2810, 3
    %v2817 = vrot.slane %v2812, 3
    %v2818 = vrot.slane %v2810, 4
    %v2819 = vrot.slane %v2812, 4
    %v2824 = vadd.f32 %v1905, %v2816
    %v2825 = vadd.f32 %v1907, %v2817
    %v2826 = vadd.f32 %v1911, %v2818
    %v2827 = vadd.f32 %v1913, %v2819
    %v2828 = vxor.u32 %v2824, 2147483648
    %v2829 = vxor.u32 %v2826, 2147483648
    %v2830 = vmul.f32 %v2828, 1.442695
    %v2831 = vpow.pop %v2830
    %v2832 = vmul.f32 %v2829, 1.442695
    %v2833 = vpow.pop %v2832
    %v2834 = vadd.f32 %v2831, 1.0
    %v2835 = vadd.f32 %v2833, 1.0
    %v2836 = vrcp.pop %v2834
    %v2837 = vmul.f32 1.0, %v2836
    %v2838 = vrcp.pop %v2835
    %v2839 = vmul.f32 1.0, %v2838
    %v2840 = vtanh.pop %v2825
    %v2841 = vtanh.pop %v2827
    %v2842 = vxor.u32 %v2825, 2147483648
    %v2843 = vxor.u32 %v2827, 2147483648
    %v2844 = vmul.f32 %v2842, 1.442695
    %v2845 = vpow.pop %v2844
    %v2846 = vmul.f32 %v2843, 1.442695
    %v2847 = vpow.pop %v2846
    %v2848 = vadd.f32 %v2845, 1.0
    %v2849 = vadd.f32 %v2847, 1.0
    %v2850 = vrcp.pop %v2848
    %v2851 = vmul.f32 1.0, %v2850
    %v2852 = vrcp.pop %v2849
    %v2853 = vmul.f32 1.0, %v2852
    %v2856 = vrot.slane %v2840, 5
    %v2857 = vrot.slane %v2841, 4
    %v2858 = vsel %vm334, %v2857, %v2856
    %v2862 = vrot.slane %v2851, 5
    %v2863 = vrot.slane %v2853, 4
    %v2864 = vsel %vm334, %v2863, %v2862
    %v2866 = vsel %vm93, %v2858, %v2864
    %v2869 = vrot.slane %v2727, 7
    %v2870 = vrot.slane %v2728, 7
    %v2873 = vmul.f32 %v2837, %v2869
    %v2874 = vmul.f32 %v2839, %v2870
    %v2876 = vrot.slane %v2866, 3
    %v2877 = vrot.slane %v2866, 4
    %v2880 = vmul.f32 %v2837, %v2876
    %v2881 = vmul.f32 %v2839, %v2877
    %2884 = vrot.lane.b32.xlu0 %v2880, 64
    %v2885 = vpop.permute.xlu0 %2884
    %2886 = vrot.lane.b32.xlu0 %v2881, 64
    %v2887 = vpop.permute.xlu0 %2886
    %v2890 = vadd.f32 %v2873, %v2885
    %v2891 = vadd.f32 %v2874, %v2887
    %v2892 = vtanh.pop %v2890
    %v2893 = vtanh.pop %v2891
    %v2896 = vrot.slane %v2892, 5
    %v2897 = vrot.slane %v2893, 4
    %v2898 = vsel %vm334, %v2897, %v2896
    %v2900 = vmul.f32 %v2866, %v2898
    %2902 = vrot.lane.b32.xlu0 %v2900, 64
    %v2903 = vpop.permute.xlu0 %2902
    %v2904 = vsel %vm218, %v2903, 0
    %2906 = vmatprep.subr.mxu0 %v1920
    %2907 = vmatpush1.msra.mxu0 %v1919
    %2908 = vmatprep.subr.mxu0 %v1922
    %2909 = vmatpush1.msra.mxu0 %v1921
    %2910 = vmatprep.subr.mxu0 %v1924
    %2911 = vmatpush1.msra.mxu0 %v1923
    %2912 = vmatprep.subr.mxu0 %v1926
    %2913 = vmatpush1.msra.mxu0 %v1925
    %2914 = vmatprep.subr.mxu0 %v1928
    %2915 = vmatpush1.msra.mxu0 %v1927
    %2916 = vmatprep.subr.mxu0 %v1930
    %2917 = vmatpush1.msra.mxu0 %v1929
    %2918 = vmatprep.subr.mxu0 %v1932
    %2919 = vmatpush1.msra.mxu0 %v1931
    %2920 = vmatprep.subr.mxu0 %v1934
    %2921 = vmatpush1.msra.mxu0 %v1933
    %2922 = vmatprep.subr.mxu0 0.0
    %2923 = vmatpush1.msra.mxu0 0.0
    %2924 = vmatprep.subr.mxu0 0.0
    %2925 = vmatpush1.msra.mxu0 0.0
    %2926 = vmatprep.subr.mxu0 0.0
    %2927 = vmatpush1.msra.mxu0 0.0
    %2928 = vmatprep.subr.mxu0 0.0
    %2929 = vmatpush1.msra.mxu0 0.0
    %2930 = vmatprep.subr.mxu0 0.0
    %2931 = vmatpush1.msra.mxu0 0.0
    %2932 = vmatprep.subr.mxu0 0.0
    %2933 = vmatpush1.msra.mxu0 0.0
    %2934 = vmatprep.subr.mxu0 0.0
    %2935 = vmatpush1.msra.mxu0 0.0
    %2936 = vmatprep.subr.mxu0 0.0
    %2937 = vmatpush1.msra.mxu0 0.0
    %2938 = vmatprep.subr.mxu0 0.0
    %2939 = vmatpush1.msra.mxu0 0.0
    %2940 = vmatprep.subr.mxu0 0.0
    %2941 = vmatpush1.msra.mxu0 0.0
    %2942 = vmatprep.subr.mxu0 0.0
    %2943 = vmatpush1.msra.mxu0 0.0
    %2944 = vmatprep.subr.mxu0 0.0
    %2945 = vmatpush1.msra.mxu0 0.0
    %2946 = vmatprep.subr.mxu0 0.0
    %2947 = vmatpush1.msra.mxu0 0.0
    %2948 = vmatprep.subr.mxu0 0.0
    %2949 = vmatpush1.msra.mxu0 0.0
    %2950 = vmatprep.subr.mxu0 0.0
    %2951 = vmatpush1.msra.mxu0 0.0
    %2952 = vmatprep.subr.mxu0 0.0
    %2953 = vmatpush1.msra.mxu0 0.0
    %2954 = vmatprep.subr.mxu0 0.0
    %2955 = vmatpush1.msra.mxu0 0.0
    %2956 = vmatprep.subr.mxu0 0.0
    %2957 = vmatpush1.msra.mxu0 0.0
    %2958 = vmatprep.subr.mxu0 0.0
    %2959 = vmatpush1.msra.mxu0 0.0
    %2960 = vmatprep.subr.mxu0 0.0
    %2961 = vmatpush1.msra.mxu0 0.0
    %2962 = vmatprep.subr.mxu0 0.0
    %2963 = vmatpush1.msra.mxu0 0.0
    %2964 = vmatprep.subr.mxu0 0.0
    %2965 = vmatpush1.msra.mxu0 0.0
    %2966 = vmatprep.subr.mxu0 0.0
    %2967 = vmatpush1.msra.mxu0 0.0
    %2968 = vmatprep.subr.mxu0 0.0
    %2969 = vmatpush1.msra.mxu0 0.0
    %2970 = vmatprep.mubr.f32.mxu0 0.0
    %2971 = vmatmul.mubr.f32.gmra.mrb[0].mxu0 %v2904
    %v2972 = vpop.f32.mrb[0].mxu0
    %v2973 = vadd.f32 0.0, %v2972
    %v2974 = vpop.f32.mrb[0].mxu0
    %v2975 = vadd.f32 0.0, %v2974
    %2976 = vdwg.mxu0
    %v2979 = vrot.slane %v2973, 2
    %v2980 = vrot.slane %v2975, 2
    %v2981 = vrot.slane %v2973, 3
    %v2982 = vrot.slane %v2975, 3
    %v2987 = vadd.f32 %v1905, %v2979
    %v2988 = vadd.f32 %v1907, %v2980
    %v2989 = vadd.f32 %v1911, %v2981
    %v2990 = vadd.f32 %v1913, %v2982
    %v2991 = vxor.u32 %v2987, 2147483648
    %v2992 = vxor.u32 %v2989, 2147483648
    %v2993 = vmul.f32 %v2991, 1.442695
    %v2994 = vpow.pop %v2993
    %v2995 = vmul.f32 %v2992, 1.442695
    %v2996 = vpow.pop %v2995
    %v2997 = vadd.f32 %v2994, 1.0
    %v2998 = vadd.f32 %v2996, 1.0
    %v2999 = vrcp.pop %v2997
    %v3000 = vmul.f32 1.0, %v2999
    %v3001 = vrcp.pop %v2998
    %v3002 = vmul.f32 1.0, %v3001
    %v3003 = vtanh.pop %v2988
    %v3004 = vtanh.pop %v2990
    %v3005 = vxor.u32 %v2988, 2147483648
    %v3006 = vxor.u32 %v2990, 2147483648
    %v3007 = vmul.f32 %v3005, 1.442695
    %v3008 = vpow.pop %v3007
    %v3009 = vmul.f32 %v3006, 1.442695
    %v3010 = vpow.pop %v3009
    %v3011 = vadd.f32 %v3008, 1.0
    %v3012 = vadd.f32 %v3010, 1.0
    %v3013 = vrcp.pop %v3011
    %v3014 = vmul.f32 1.0, %v3013
    %v3015 = vrcp.pop %v3012
    %v3016 = vmul.f32 1.0, %v3015
    %v3019 = vrot.slane %v3003, 6
    %v3020 = vrot.slane %v3004, 5
    %v3021 = vsel %vm334, %v3020, %v3019
    %v3025 = vrot.slane %v3014, 6
    %v3026 = vrot.slane %v3016, 5
    %v3027 = vsel %vm334, %v3026, %v3025
    %v3029 = vsel %vm93, %v3021, %v3027
    %v3032 = vrot.slane %v2890, 7
    %v3033 = vrot.slane %v2891, 7
    %v3036 = vmul.f32 %v3000, %v3032
    %v3037 = vmul.f32 %v3002, %v3033
    %v3039 = vrot.slane %v3029, 2
    %v3040 = vrot.slane %v3029, 3
    %v3043 = vmul.f32 %v3000, %v3039
    %v3044 = vmul.f32 %v3002, %v3040
    %3047 = vrot.lane.b32.xlu0 %v3043, 64
    %v3048 = vpop.permute.xlu0 %3047
    %3049 = vrot.lane.b32.xlu0 %v3044, 64
    %v3050 = vpop.permute.xlu0 %3049
    %v3053 = vadd.f32 %v3036, %v3048
    %v3054 = vadd.f32 %v3037, %v3050
    %v3055 = vtanh.pop %v3053
    %v3056 = vtanh.pop %v3054
    %v3059 = vrot.slane %v3055, 6
    %v3060 = vrot.slane %v3056, 5
    %v3061 = vsel %vm334, %v3060, %v3059
    %v3063 = vmul.f32 %v3029, %v3061
    %3065 = vrot.lane.b32.xlu0 %v3063, 64
    %v3066 = vpop.permute.xlu0 %3065
    %v3067 = vsel %vm218, %v3066, 0
    %3069 = vmatprep.subr.mxu0 %v1920
    %3070 = vmatpush1.msra.mxu0 %v1919
    %3071 = vmatprep.subr.mxu0 %v1922
    %3072 = vmatpush1.msra.mxu0 %v1921
    %3073 = vmatprep.subr.mxu0 %v1924
    %3074 = vmatpush1.msra.mxu0 %v1923
    %3075 = vmatprep.subr.mxu0 %v1926
    %3076 = vmatpush1.msra.mxu0 %v1925
    %3077 = vmatprep.subr.mxu0 %v1928
    %3078 = vmatpush1.msra.mxu0 %v1927
    %3079 = vmatprep.subr.mxu0 %v1930
    %3080 = vmatpush1.msra.mxu0 %v1929
    %3081 = vmatprep.subr.mxu0 %v1932
    %3082 = vmatpush1.msra.mxu0 %v1931
    %3083 = vmatprep.subr.mxu0 %v1934
    %3084 = vmatpush1.msra.mxu0 %v1933
    %3085 = vmatprep.subr.mxu0 0.0
    %3086 = vmatpush1.msra.mxu0 0.0
    %3087 = vmatprep.subr.mxu0 0.0
    %3088 = vmatpush1.msra.mxu0 0.0
    %3089 = vmatprep.subr.mxu0 0.0
    %3090 = vmatpush1.msra.mxu0 0.0
    %3091 = vmatprep.subr.mxu0 0.0
    %3092 = vmatpush1.msra.mxu0 0.0
    %3093 = vmatprep.subr.mxu0 0.0
    %3094 = vmatpush1.msra.mxu0 0.0
    %3095 = vmatprep.subr.mxu0 0.0
    %3096 = vmatpush1.msra.mxu0 0.0
    %3097 = vmatprep.subr.mxu0 0.0
    %3098 = vmatpush1.msra.mxu0 0.0
    %3099 = vmatprep.subr.mxu0 0.0
    %3100 = vmatpush1.msra.mxu0 0.0
    %3101 = vmatprep.subr.mxu0 0.0
    %3102 = vmatpush1.msra.mxu0 0.0
    %3103 = vmatprep.subr.mxu0 0.0
    %3104 = vmatpush1.msra.mxu0 0.0
    %3105 = vmatprep.subr.mxu0 0.0
    %3106 = vmatpush1.msra.mxu0 0.0
    %3107 = vmatprep.subr.mxu0 0.0
    %3108 = vmatpush1.msra.mxu0 0.0
    %3109 = vmatprep.subr.mxu0 0.0
    %3110 = vmatpush1.msra.mxu0 0.0
    %3111 = vmatprep.subr.mxu0 0.0
    %3112 = vmatpush1.msra.mxu0 0.0
    %3113 = vmatprep.subr.mxu0 0.0
    %3114 = vmatpush1.msra.mxu0 0.0
    %3115 = vmatprep.subr.mxu0 0.0
    %3116 = vmatpush1.msra.mxu0 0.0
    %3117 = vmatprep.subr.mxu0 0.0
    %3118 = vmatpush1.msra.mxu0 0.0
    %3119 = vmatprep.subr.mxu0 0.0
    %3120 = vmatpush1.msra.mxu0 0.0
    %3121 = vmatprep.subr.mxu0 0.0
    %3122 = vmatpush1.msra.mxu0 0.0
    %3123 = vmatprep.subr.mxu0 0.0
    %3124 = vmatpush1.msra.mxu0 0.0
    %3125 = vmatprep.subr.mxu0 0.0
    %3126 = vmatpush1.msra.mxu0 0.0
    %3127 = vmatprep.subr.mxu0 0.0
    %3128 = vmatpush1.msra.mxu0 0.0
    %3129 = vmatprep.subr.mxu0 0.0
    %3130 = vmatpush1.msra.mxu0 0.0
    %3131 = vmatprep.subr.mxu0 0.0
    %3132 = vmatpush1.msra.mxu0 0.0
    %3133 = vmatprep.mubr.f32.mxu0 0.0
    %3134 = vmatmul.mubr.f32.gmra.mrb[0].mxu0 %v3067
    %v3135 = vpop.f32.mrb[0].mxu0
    %v3136 = vadd.f32 0.0, %v3135
    %v3137 = vpop.f32.mrb[0].mxu0
    %v3138 = vadd.f32 0.0, %v3137
    %3139 = vdwg.mxu0
    %v3142 = vrot.slane %v3136, 1
    %v3143 = vrot.slane %v3138, 1
    %v3144 = vrot.slane %v3136, 2
    %v3145 = vrot.slane %v3138, 2
    %v3150 = vadd.f32 %v1905, %v3142
    %v3151 = vadd.f32 %v1907, %v3143
    %v3152 = vadd.f32 %v1911, %v3144
    %v3153 = vadd.f32 %v1913, %v3145
    %v3154 = vxor.u32 %v3150, 2147483648
    %v3155 = vxor.u32 %v3152, 2147483648
    %v3156 = vmul.f32 %v3154, 1.442695
    %v3157 = vpow.pop %v3156
    %v3158 = vmul.f32 %v3155, 1.442695
    %v3159 = vpow.pop %v3158
    %v3160 = vadd.f32 %v3157, 1.0
    %v3161 = vadd.f32 %v3159, 1.0
    %v3162 = vrcp.pop %v3160
    %v3163 = vmul.f32 1.0, %v3162
    %v3164 = vrcp.pop %v3161
    %v3165 = vmul.f32 1.0, %v3164
    %v3166 = vtanh.pop %v3151
    %v3167 = vtanh.pop %v3153
    %v3168 = vxor.u32 %v3151, 2147483648
    %v3169 = vxor.u32 %v3153, 2147483648
    %v3170 = vmul.f32 %v3168, 1.442695
    %v3171 = vpow.pop %v3170
    %v3172 = vmul.f32 %v3169, 1.442695
    %v3173 = vpow.pop %v3172
    %v3174 = vadd.f32 %v3171, 1.0
    %v3175 = vadd.f32 %v3173, 1.0
    %v3176 = vrcp.pop %v3174
    %v3177 = vmul.f32 1.0, %v3176
    %v3178 = vrcp.pop %v3175
    %v3179 = vmul.f32 1.0, %v3178
    %v3182 = vrot.slane %v3166, 7
    %v3183 = vrot.slane %v3167, 6
    %v3184 = vsel %vm334, %v3183, %v3182
    %v3188 = vrot.slane %v3177, 7
    %v3189 = vrot.slane %v3179, 6
    %v3190 = vsel %vm334, %v3189, %v3188
    %v3192 = vsel %vm93, %v3184, %v3190
    %v3195 = vrot.slane %v3053, 7
    %v3196 = vrot.slane %v3054, 7
    %v3199 = vmul.f32 %v3163, %v3195
    %v3200 = vmul.f32 %v3165, %v3196
    %v3202 = vrot.slane %v3192, 1
    %v3203 = vrot.slane %v3192, 2
    %v3206 = vmul.f32 %v3163, %v3202
    %v3207 = vmul.f32 %v3165, %v3203
    %3210 = vrot.lane.b32.xlu0 %v3206, 64
    %v3211 = vpop.permute.xlu0 %3210
    %3212 = vrot.lane.b32.xlu0 %v3207, 64
    %v3213 = vpop.permute.xlu0 %3212
    %v3216 = vadd.f32 %v3199, %v3211
    %v3217 = vadd.f32 %v3200, %v3213
    %v3218 = vtanh.pop %v3216
    %v3219 = vtanh.pop %v3217
    %v3222 = vrot.slane %v3218, 7
    %v3223 = vrot.slane %v3219, 6
    %v3224 = vsel %vm334, %v3223, %v3222
    %v3226 = vmul.f32 %v3192, %v3224
    %3228 = vrot.lane.b32.xlu0 %v3226, 64
    %v3229 = vpop.permute.xlu0 %3228
    %s3231 = scalar_lea.vmem [#allocation9], 2
    %3232 = vst.msk [vmem:[%s3231] sm:$0x3] %vm1516, %v3229
    %v3235 = vrot.slane %v3217, 7
    %3236 = vrot.lane.b32.xlu0 %v3216, 64
    %v3237 = vpop.permute.xlu0 %3236
    %3238 = vrot.lane.b32.xlu0 %v3235, 64
    %v3239 = vpop.permute.xlu0 %3238
    %s3242 = scalar_lea.vmem [#allocation11], 2
    %3243 = vst.msk [vmem:[%s3242 - $0x7] sm:$0x80] %vm1527, %v3237
    %3244 = vst.msk [vmem:[%s3242 + $0x1] sm:$0x1] %vm1529, %v3239
    %v3246 = vunpack.c.l.s4 1966171168
    %v3247 = vunpack.c.0.s8 %v3246
    %v3248 = vlaneseq
    %v3249 = vshrl.u32 %v3248, 7
    %v3250 = vsub.s32 %v3247, %v3249
    %v3251 = vrot.slane %v2091, %v3250
    %v3252 = vcombine.high %v3251, %v3251
    %v3254 = vunpack.c.l.s4 1966171168
    %v3255 = vunpack.c.0.s8 %v3254
    %v3256 = vlaneseq
    %v3257 = vshrl.u32 %v3256, 7
    %v3258 = vsub.s32 %v3255, %v3257
    %v3259 = vrot.slane %v3251, %v3258
    %v3261 = vunpack.c.l.s4 1966171168
    %v3262 = vunpack.c.0.s8 %v3261
    %v3263 = vlaneseq
    %v3264 = vshrl.u32 %v3263, 7
    %v3265 = vsub.s32 %v3262, %v3264
    %v3266 = vrot.slane %v3252, %v3265
    %v3270 = vunpack.c.l.s4 1966171168
    %v3271 = vunpack.c.0.s8 %v3270
    %v3272 = vlaneseq
    %v3273 = vshrl.u32 %v3272, 7
    %v3274 = vsub.s32 %v3271, %v3273
    %v3275 = vrot.slane %v2248, %v3274
    %v3276 = vcombine.high %v3275, %v3275
    %v3278 = vunpack.c.l.s4 1966171168
    %v3279 = vunpack.c.0.s8 %v3278
    %v3280 = vlaneseq
    %v3281 = vshrl.u32 %v3280, 7
    %v3282 = vsub.s32 %v3279, %v3281
    %v3283 = vrot.slane %v3275, %v3282
    %v3285 = vunpack.c.l.s4 1966171168
    %v3286 = vunpack.c.0.s8 %v3285
    %v3287 = vlaneseq
    %v3288 = vshrl.u32 %v3287, 7
    %v3289 = vsub.s32 %v3286, %v3288
    %v3290 = vrot.slane %v3276, %v3289
    %v3292 = vunpack.c.l.s4 1966171168
    %v3293 = vunpack.c.0.s8 %v3292
    %v3294 = vlaneseq
    %v3295 = vshrl.u32 %v3294, 7
    %v3296 = vsub.s32 %v3293, %v3295
    %v3297 = vrot.slane %v2411, %v3296
    %v3298 = vcombine.high %v3297, %v3297
    %v3300 = vunpack.c.l.s4 1966171168
    %v3301 = vunpack.c.0.s8 %v3300
    %v3302 = vlaneseq
    %v3303 = vshrl.u32 %v3302, 7
    %v3304 = vsub.s32 %v3301, %v3303
    %v3305 = vrot.slane %v3297, %v3304
    %v3307 = vunpack.c.l.s4 1966171168
    %v3308 = vunpack.c.0.s8 %v3307
    %v3309 = vlaneseq
    %v3310 = vshrl.u32 %v3309, 7
    %v3311 = vsub.s32 %v3308, %v3310
    %v3312 = vrot.slane %v3298, %v3311
    %v3314 = vunpack.c.l.s4 1966171168
    %v3315 = vunpack.c.0.s8 %v3314
    %v3316 = vlaneseq
    %v3317 = vshrl.u32 %v3316, 7
    %v3318 = vsub.s32 %v3315, %v3317
    %v3319 = vrot.slane %v2574, %v3318
    %v3320 = vcombine.high %v3319, %v3319
    %v3322 = vunpack.c.l.s4 1966171168
    %v3323 = vunpack.c.0.s8 %v3322
    %v3324 = vlaneseq
    %v3325 = vshrl.u32 %v3324, 7
    %v3326 = vsub.s32 %v3323, %v3325
    %v3327 = vrot.slane %v3319, %v3326
    %v3329 = vunpack.c.l.s4 1966171168
    %v3330 = vunpack.c.0.s8 %v3329
    %v3331 = vlaneseq
    %v3332 = vshrl.u32 %v3331, 7
    %v3333 = vsub.s32 %v3330, %v3332
    %v3334 = vrot.slane %v3320, %v3333
    %v3336 = vunpack.c.l.s4 1966171168
    %v3337 = vunpack.c.0.s8 %v3336
    %v3338 = vlaneseq
    %v3339 = vshrl.u32 %v3338, 7
    %v3340 = vsub.s32 %v3337, %v3339
    %v3341 = vrot.slane %v2737, %v3340
    %v3342 = vcombine.high %v3341, %v3341
    %v3344 = vunpack.c.l.s4 1966171168
    %v3345 = vunpack.c.0.s8 %v3344
    %v3346 = vlaneseq
    %v3347 = vshrl.u32 %v3346, 7
    %v3348 = vsub.s32 %v3345, %v3347
    %v3349 = vrot.slane %v3341, %v3348
    %v3351 = vunpack.c.l.s4 1966171168
    %v3352 = vunpack.c.0.s8 %v3351
    %v3353 = vlaneseq
    %v3354 = vshrl.u32 %v3353, 7
    %v3355 = vsub.s32 %v3352, %v3354
    %v3356 = vrot.slane %v3342, %v3355
    %v3358 = vunpack.c.l.s4 1966171168
    %v3359 = vunpack.c.0.s8 %v3358
    %v3360 = vlaneseq
    %v3361 = vshrl.u32 %v3360, 7
    %v3362 = vsub.s32 %v3359, %v3361
    %v3363 = vrot.slane %v2900, %v3362
    %v3364 = vcombine.high %v3363, %v3363
    %v3366 = vunpack.c.l.s4 1966171168
    %v3367 = vunpack.c.0.s8 %v3366
    %v3368 = vlaneseq
    %v3369 = vshrl.u32 %v3368, 7
    %v3370 = vsub.s32 %v3367, %v3369
    %v3371 = vrot.slane %v3363, %v3370
    %v3373 = vunpack.c.l.s4 1966171168
    %v3374 = vunpack.c.0.s8 %v3373
    %v3375 = vlaneseq
    %v3376 = vshrl.u32 %v3375, 7
    %v3377 = vsub.s32 %v3374, %v3376
    %v3378 = vrot.slane %v3364, %v3377
    %v3380 = vunpack.c.l.s4 1966171168
    %v3381 = vunpack.c.0.s8 %v3380
    %v3382 = vlaneseq
    %v3383 = vshrl.u32 %v3382, 7
    %v3384 = vsub.s32 %v3381, %v3383
    %v3385 = vrot.slane %v3063, %v3384
    %v3386 = vcombine.high %v3385, %v3385
    %v3388 = vunpack.c.l.s4 1966171168
    %v3389 = vunpack.c.0.s8 %v3388
    %v3390 = vlaneseq
    %v3391 = vshrl.u32 %v3390, 7
    %v3392 = vsub.s32 %v3389, %v3391
    %v3393 = vrot.slane %v3385, %v3392
    %v3395 = vunpack.c.l.s4 1966171168
    %v3396 = vunpack.c.0.s8 %v3395
    %v3397 = vlaneseq
    %v3398 = vshrl.u32 %v3397, 7
    %v3399 = vsub.s32 %v3396, %v3398
    %v3400 = vrot.slane %v3386, %v3399
    %v3402 = vunpack.c.l.s4 1966171168
    %v3403 = vunpack.c.0.s8 %v3402
    %v3404 = vlaneseq
    %v3405 = vshrl.u32 %v3404, 7
    %v3406 = vsub.s32 %v3403, %v3405
    %v3407 = vrot.slane %v3226, %v3406
    %v3408 = vcombine.high %v3407, %v3407
    %v3410 = vunpack.c.l.s4 1966171168
    %v3411 = vunpack.c.0.s8 %v3410
    %v3412 = vlaneseq
    %v3413 = vshrl.u32 %v3412, 7
    %v3414 = vsub.s32 %v3411, %v3413
    %v3415 = vrot.slane %v3407, %v3414
    %v3417 = vunpack.c.l.s4 1966171168
    %v3418 = vunpack.c.0.s8 %v3417
    %v3419 = vlaneseq
    %v3420 = vshrl.u32 %v3419, 7
    %v3421 = vsub.s32 %v3418, %v3420
    %v3422 = vrot.slane %v3408, %v3421
    %v3423 = vlaneseq
    %v3424 = vshrl.u32 %v3423, 7
    %v3425 = vsub.s32 0, %v3424
    %v3426 = vrot.slane %v3283, %v3425
    %v3427 = vlaneseq
    %v3428 = vshrl.u32 %v3427, 7
    %v3429 = vsub.s32 0, %v3428
    %v3430 = vrot.slane %v3290, %v3429
    %v3433 = vlaneseq
    %v3434 = vshrl.u32 %v3433, 7
    %v3435 = vsub.s32 0, %v3434
    %v3436 = vrot.slane %v3305, %v3435
    %v3437 = vlaneseq
    %v3438 = vshrl.u32 %v3437, 7
    %v3439 = vsub.s32 0, %v3438
    %v3440 = vrot.slane %v3312, %v3439
    %v3443 = vlaneseq
    %v3444 = vshrl.u32 %v3443, 7
    %v3445 = vsub.s32 0, %v3444
    %v3446 = vrot.slane %v3327, %v3445
    %v3447 = vlaneseq
    %v3448 = vshrl.u32 %v3447, 7
    %v3449 = vsub.s32 0, %v3448
    %v3450 = vrot.slane %v3334, %v3449
    %v3453 = vlaneseq
    %v3454 = vshrl.u32 %v3453, 7
    %v3455 = vsub.s32 0, %v3454
    %v3456 = vrot.slane %v3349, %v3455
    %v3457 = vlaneseq
    %v3458 = vshrl.u32 %v3457, 7
    %v3459 = vsub.s32 0, %v3458
    %v3460 = vrot.slane %v3356, %v3459
    %v3463 = vlaneseq
    %v3464 = vshrl.u32 %v3463, 7
    %v3465 = vsub.s32 0, %v3464
    %v3466 = vrot.slane %v3371, %v3465
    %v3467 = vlaneseq
    %v3468 = vshrl.u32 %v3467, 7
    %v3469 = vsub.s32 0, %v3468
    %v3470 = vrot.slane %v3378, %v3469
    %v3473 = vlaneseq
    %v3474 = vshrl.u32 %v3473, 7
    %v3475 = vsub.s32 0, %v3474
    %v3476 = vrot.slane %v3393, %v3475
    %v3477 = vlaneseq
    %v3478 = vshrl.u32 %v3477, 7
    %v3479 = vsub.s32 0, %v3478
    %v3480 = vrot.slane %v3400, %v3479
    %v3483 = vlaneseq
    %v3484 = vshrl.u32 %v3483, 7
    %v3485 = vsub.s32 0, %v3484
    %v3486 = vrot.slane %v3415, %v3485
    %v3487 = vlaneseq
    %v3488 = vshrl.u32 %v3487, 7
    %v3489 = vsub.s32 0, %v3488
    %v3490 = vrot.slane %v3422, %v3489
    %v3493 = vsel %vm1779, %v3259, %v3426
    %v3494 = vsel %vm1779, %v3266, %v3430
    %v3495 = vsel %vm1782, %v3493, %v3436
    %v3496 = vsel %vm1782, %v3494, %v3440
    %v3497 = vsel %vm1785, %v3495, %v3446
    %v3498 = vsel %vm1785, %v3496, %v3450
    %v3499 = vsel %vm1788, %v3497, %v3456
    %v3500 = vsel %vm1788, %v3498, %v3460
    %v3501 = vsel %vm1791, %v3499, %v3466
    %v3502 = vsel %vm1791, %v3500, %v3470
    %v3503 = vsel %vm1794, %v3501, %v3476
    %v3504 = vsel %vm1794, %v3502, %v3480
    %v3505 = vsel %vm1797, %v3503, %v3486
    %v3506 = vsel %vm1797, %v3504, %v3490
    %3509 = vrot.lane.b32.xlu0 %v3505, 64
    %v3510 = vpop.permute.xlu0 %3509
    %3511 = vrot.lane.b32.xlu0 %v3506, 64
    %v3512 = vpop.permute.xlu0 %3511
    %3515 = vst.msk [vmem:[#allocation8] sm:$0xff] %vm218, %v3510
    %3516 = vst.msk [vmem:[#allocation8 + $0x8] sm:$0xff] %vm218, %v3512
    %v3517 = vld [vmem:[%s9] sm:$0xff]
    %v3518 = vld [vmem:[%s9 + $0x8] sm:$0xff]
    %v3519 = vld [vmem:[%s9 + $0x10] sm:$0xff]
    %v3520 = vld [vmem:[%s9 + $0x18] sm:$0xff]
    %v3521 = vld [vmem:[%s9 + $0x20] sm:$0xff]
    %v3522 = vld [vmem:[%s9 + $0x28] sm:$0xff]
    %v3523 = vld [vmem:[%s9 + $0x30] sm:$0xff]
    %v3524 = vld [vmem:[%s9 + $0x38] sm:$0xff]
    %v3525 = vld [vmem:[%s10] sm:$0x1]
    %v3527 = vlaneseq
    %v3528 = vshrl.u32 %v3527, 7
    %v3529 = vsub.s32 0, %v3528
    %v3530 = vrot.slane %v3525, %v3529
    %v3532 = vsel %vm218, %v3510, 0
    %v3534 = vsel %vm218, %v3512, 0
    %3536 = vmatprep.subr.mxu0 0.0
    %3537 = vmatpush1.msra.mxu0 %v3517
    %3538 = vmatprep.subr.mxu0 0.0
    %3539 = vmatpush1.msra.mxu0 %v3518
    %3540 = vmatprep.subr.mxu0 0.0
    %3541 = vmatpush1.msra.mxu0 %v3519
    %3542 = vmatprep.subr.mxu0 0.0
    %3543 = vmatpush1.msra.mxu0 %v3520
    %3544 = vmatprep.subr.mxu0 0.0
    %3545 = vmatpush1.msra.mxu0 %v3521
    %3546 = vmatprep.subr.mxu0 0.0
    %3547 = vmatpush1.msra.mxu0 %v3522
    %3548 = vmatprep.subr.mxu0 0.0
    %3549 = vmatpush1.msra.mxu0 %v3523
    %3550 = vmatprep.subr.mxu0 0.0
    %3551 = vmatpush1.msra.mxu0 %v3524
    %3552 = vmatprep.subr.mxu0 0.0
    %3553 = vmatpush1.msra.mxu0 0.0
    %3554 = vmatprep.subr.mxu0 0.0
    %3555 = vmatpush1.msra.mxu0 0.0
    %3556 = vmatprep.subr.mxu0 0.0
    %3557 = vmatpush1.msra.mxu0 0.0
    %3558 = vmatprep.subr.mxu0 0.0
    %3559 = vmatpush1.msra.mxu0 0.0
    %3560 = vmatprep.subr.mxu0 0.0
    %3561 = vmatpush1.msra.mxu0 0.0
    %3562 = vmatprep.subr.mxu0 0.0
    %3563 = vmatpush1.msra.mxu0 0.0
    %3564 = vmatprep.subr.mxu0 0.0
    %3565 = vmatpush1.msra.mxu0 0.0
    %3566 = vmatprep.subr.mxu0 0.0
    %3567 = vmatpush1.msra.mxu0 0.0
    %3568 = vmatprep.subr.mxu0 0.0
    %3569 = vmatpush1.msra.mxu0 0.0
    %3570 = vmatprep.subr.mxu0 0.0
    %3571 = vmatpush1.msra.mxu0 0.0
    %3572 = vmatprep.subr.mxu0 0.0
    %3573 = vmatpush1.msra.mxu0 0.0
    %3574 = vmatprep.subr.mxu0 0.0
    %3575 = vmatpush1.msra.mxu0 0.0
    %3576 = vmatprep.subr.mxu0 0.0
    %3577 = vmatpush1.msra.mxu0 0.0
    %3578 = vmatprep.subr.mxu0 0.0
    %3579 = vmatpush1.msra.mxu0 0.0
    %3580 = vmatprep.subr.mxu0 0.0
    %3581 = vmatpush1.msra.mxu0 0.0
    %3582 = vmatprep.subr.mxu0 0.0
    %3583 = vmatpush1.msra.mxu0 0.0
    %3584 = vmatprep.subr.mxu0 0.0
    %3585 = vmatpush1.msra.mxu0 0.0
    %3586 = vmatprep.subr.mxu0 0.0
    %3587 = vmatpush1.msra.mxu0 0.0
    %3588 = vmatprep.subr.mxu0 0.0
    %3589 = vmatpush1.msra.mxu0 0.0
    %3590 = vmatprep.subr.mxu0 0.0
    %3591 = vmatpush1.msra.mxu0 0.0
    %3592 = vmatprep.subr.mxu0 0.0
    %3593 = vmatpush1.msra.mxu0 0.0
    %3594 = vmatprep.subr.mxu0 0.0
    %3595 = vmatpush1.msra.mxu0 0.0
    %3596 = vmatprep.subr.mxu0 0.0
    %3597 = vmatpush1.msra.mxu0 0.0
    %3598 = vmatprep.subr.mxu0 0.0
    %3599 = vmatpush1.msra.mxu0 0.0
    %3600 = vmatprep.mubr.f32.mxu0 0.0
    %3601 = vmatmul.mubr.f32.gmra.mrb[0].mxu0 %v3532
    %v3602 = vpop.f32.mrb[0].mxu0
    %v3603 = vadd.f32 %v3530, %v3602
    %v3604 = vpop.f32.mrb[0].mxu0
    %3605 = vmatprep.mubr.f32.mxu0 0.0
    %3606 = vmatmul.mubr.f32.gmra.mrb[0].mxu0 %v3534
    %v3607 = vpop.f32.mrb[0].mxu0
    %v3608 = vadd.f32 %v3530, %v3607
    %v3609 = vpop.f32.mrb[0].mxu0
    %3610 = vdwg.mxu0
    %v3611 = vmax.f32 %v3603, 0.0
    %v3612 = vmax.f32 %v3608, 0.0
    %v3613 = vld [vmem:[%s11] sm:$0xff]
    %v3614 = vld [vmem:[%s11 + $0x8] sm:$0xff]
    %v3615 = vld [vmem:[%s12] sm:$0x1]
    %v3617 = vlaneseq
    %v3618 = vshrl.u32 %v3617, 7
    %v3619 = vsub.s32 0, %v3618
    %v3620 = vrot.slane %v3615, %v3619
    %vm3622 = vcmask 130048
    %v3624 = vsel %vm3622, %v3611, 0
    %v3627 = vsel %vm3622, %v3612, 0
    %3629 = vmatprep.subr.mxu0 0.0
    %3630 = vmatpush1.msra.mxu0 %v3613
    %3631 = vmatprep.subr.mxu0 0.0
    %3632 = vmatpush1.msra.mxu0 %v3614
    %3633 = vmatprep.subr.mxu0 0.0
    %3634 = vmatpush1.msra.mxu0 0.0
    %3635 = vmatprep.subr.mxu0 0.0
    %3636 = vmatpush1.msra.mxu0 0.0
    %3637 = vmatprep.subr.mxu0 0.0
    %3638 = vmatpush1.msra.mxu0 0.0
    %3639 = vmatprep.subr.mxu0 0.0
    %3640 = vmatpush1.msra.mxu0 0.0
    %3641 = vmatprep.subr.mxu0 0.0
    %3642 = vmatpush1.msra.mxu0 0.0
    %3643 = vmatprep.subr.mxu0 0.0
    %3644 = vmatpush1.msra.mxu0 0.0
    %3645 = vmatprep.subr.mxu0 0.0
    %3646 = vmatpush1.msra.mxu0 0.0
    %3647 = vmatprep.subr.mxu0 0.0
    %3648 = vmatpush1.msra.mxu0 0.0
    %3649 = vmatprep.subr.mxu0 0.0
    %3650 = vmatpush1.msra.mxu0 0.0
    %3651 = vmatprep.subr.mxu0 0.0
    %3652 = vmatpush1.msra.mxu0 0.0
    %3653 = vmatprep.subr.mxu0 0.0
    %3654 = vmatpush1.msra.mxu0 0.0
    %3655 = vmatprep.subr.mxu0 0.0
    %3656 = vmatpush1.msra.mxu0 0.0
    %3657 = vmatprep.subr.mxu0 0.0
    %3658 = vmatpush1.msra.mxu0 0.0
    %3659 = vmatprep.subr.mxu0 0.0
    %3660 = vmatpush1.msra.mxu0 0.0
    %3661 = vmatprep.subr.mxu0 0.0
    %3662 = vmatpush1.msra.mxu0 0.0
    %3663 = vmatprep.subr.mxu0 0.0
    %3664 = vmatpush1.msra.mxu0 0.0
    %3665 = vmatprep.subr.mxu0 0.0
    %3666 = vmatpush1.msra.mxu0 0.0
    %3667 = vmatprep.subr.mxu0 0.0
    %3668 = vmatpush1.msra.mxu0 0.0
    %3669 = vmatprep.subr.mxu0 0.0
    %3670 = vmatpush1.msra.mxu0 0.0
    %3671 = vmatprep.subr.mxu0 0.0
    %3672 = vmatpush1.msra.mxu0 0.0
    %3673 = vmatprep.subr.mxu0 0.0
    %3674 = vmatpush1.msra.mxu0 0.0
    %3675 = vmatprep.subr.mxu0 0.0
    %3676 = vmatpush1.msra.mxu0 0.0
    %3677 = vmatprep.subr.mxu0 0.0
    %3678 = vmatpush1.msra.mxu0 0.0
    %3679 = vmatprep.subr.mxu0 0.0
    %3680 = vmatpush1.msra.mxu0 0.0
    %3681 = vmatprep.subr.mxu0 0.0
    %3682 = vmatpush1.msra.mxu0 0.0
    %3683 = vmatprep.subr.mxu0 0.0
    %3684 = vmatpush1.msra.mxu0 0.0
    %3685 = vmatprep.subr.mxu0 0.0
    %3686 = vmatpush1.msra.mxu0 0.0
    %3687 = vmatprep.subr.mxu0 0.0
    %3688 = vmatpush1.msra.mxu0 0.0
    %3689 = vmatprep.subr.mxu0 0.0
    %3690 = vmatpush1.msra.mxu0 0.0
    %3691 = vmatprep.subr.mxu0 0.0
    %3692 = vmatpush1.msra.mxu0 0.0
    %3693 = vmatprep.mubr.f32.mxu0 0.0
    %3694 = vmatmul.mubr.f32.gmra.mrb[0].mxu0 %v3624
    %v3695 = vpop.f32.mrb[0].mxu0
    %v3696 = vadd.f32 %v3620, %v3695
    %v3697 = vpop.f32.mrb[0].mxu0
    %3698 = vmatprep.mubr.f32.mxu0 0.0
    %3699 = vmatmul.mubr.f32.gmra.mrb[0].mxu0 %v3627
    %v3700 = vpop.f32.mrb[0].mxu0
    %v3701 = vadd.f32 %v3620, %v3700
    %v3702 = vpop.f32.mrb[0].mxu0
    %3703 = vdwg.mxu0
    %vm3704 = vcmask 15360
    %3705 = vst.msk [vmem:[%s14] sm:$0xff] %vm3704, %v3696
    %3706 = vst.msk [vmem:[%s14 + $0x8] sm:$0xff] %vm3704, %v3701
    // Predicated region
    $region66: #{global_rnn_forward.1} parent=1 // pred_check
      _
    $region67: #{global_rnn_forward.1} parent=1 // pred_check_branch
      %3708 = sbr.rel (0) target = $region69
    $region68: #{global_rnn_forward.1} parent=1 // pred_region
      %s3710 = ssub.s32 256, 256
      %3711 = vsyncadd [#allocation4], %s3710
      %s3712 = sshll.u32 [#allocation8], 4
      %s3713 = int_to_ptr.vmem [resolvable:$true] %s3712
      %3718 = dma.vmem_to_hbm [thread:$0]  %s3713, 256, %s13, [#allocation4], 128, 128, 8
    $region69: #{global_rnn_forward.1} parent=1 // pred_fallthru
      _
    // Predicated region
    $region70: #{global_rnn_forward.1} parent=1 // pred_check
      _
    $region71: #{global_rnn_forward.1} parent=1 // pred_check_branch
      %3720 = sbr.rel (0) target = $region73
    $region72: #{global_rnn_forward.1} parent=1 // pred_region
      _
    $region73: #{global_rnn_forward.1} parent=1 // pred_fallthru
      _
    // Predicated region
    $region74: #{global_rnn_forward.1} parent=1 // pred_check
      _
    $region75: #{global_rnn_forward.1} parent=1 // pred_check_branch
      %3722 = sbr.rel (0) target = $region77
    $region76: #{global_rnn_forward.1} parent=1 // pred_region
      %s3724 = ssub.s32 64, 64
      %3725 = vsyncadd [#allocation10], %s3724
      %s3726 = sshll.u32 [#allocation9], 4
      %s3727 = int_to_ptr.vmem [resolvable:$true] %s3726
      %3732 = dma.vmem_to_hbm [thread:$0]  %s3727, 64, %s15, [#allocation10], 32, 32, 2
    $region77: #{global_rnn_forward.1} parent=1 // pred_fallthru
      _
    // Predicated region
    $region78: #{global_rnn_forward.1} parent=1 // pred_check
      _
    $region79: #{global_rnn_forward.1} parent=1 // pred_check_branch
      %3734 = sbr.rel (0) target = $region81
    $region80: #{global_rnn_forward.1} parent=1 // pred_region
      %s3736 = ssub.s32 64, 64
      %3737 = vsyncadd [#allocation10], %s3736
      %s3738 = sshll.u32 [#allocation11], 4
      %s3739 = int_to_ptr.vmem [resolvable:$true] %s3738
      %3744 = dma.vmem_to_hbm [thread:$0]  %s3739, 64, %s16, [#allocation10], 32, 32, 2
    $region81: #{global_rnn_forward.1} parent=1 // pred_fallthru
      _
    // Predicated region
    $region82: #{global_rnn_forward.1} parent=1 // pred_check
      _
    $region83: #{global_rnn_forward.1} parent=1 // pred_check_branch
      %3746 = sbr.rel (0) target = $region85
    $region84: #{global_rnn_forward.1} parent=1 // pred_region
      %3747 = dma.done [#allocation4], 256
    $region85: #{global_rnn_forward.1} parent=1 // pred_fallthru
      _
    // Predicated region
    $region86: #{global_rnn_forward.1} parent=1 // pred_check
      _
    $region87: #{global_rnn_forward.1} parent=1 // pred_check_branch
      %3749 = sbr.rel (0) target = $region89
    $region88: #{global_rnn_forward.1} parent=1 // pred_region
      _
    $region89: #{global_rnn_forward.1} parent=1 // pred_fallthru
      _
    // Predicated region
    $region90: #{global_rnn_forward.1} parent=1 // pred_check
      _
    $region91: #{global_rnn_forward.1} parent=1 // pred_check_branch
      %3751 = sbr.rel (0) target = $region93
    $region92: #{global_rnn_forward.1} parent=1 // pred_region
      %3752 = dma.done [#allocation10], 64
    $region93: #{global_rnn_forward.1} parent=1 // pred_fallthru
      _
    // Predicated region
    $region94: #{global_rnn_forward.1} parent=1 // pred_check
      _
    $region95: #{global_rnn_forward.1} parent=1 // pred_check_branch
      %3754 = sbr.rel (0) target = $region97
    $region96: #{global_rnn_forward.1} parent=1 // pred_region
      %3755 = dma.done [#allocation10], 64
    $region97: #{global_rnn_forward.1} parent=1 // pred_fallthru
      _
    %3756 = vsyncpa [#allocation3], 1
    %3757 = vsyncpa [#allocation6], 1
    %3758 = vsyncpa [#allocation4], 1
    %3759 = vsyncpa [#allocation10], 1

</llo_original>
